<compile_context>
chip_gen: v5e
topology: v5e:2x2
jax: 0.10.0
libtpu: 0.0.40
codegen_flags: <defaults>
</compile_context>

<pallas_src>
import math
from functools import partial

import jax
import jax.numpy as jnp
from jax.experimental import pallas as pl
from jax.experimental.pallas import tpu as pltpu

EPS = 1e-5  # torch.nn.LayerNorm default


def _layernorm(x, gamma, beta):
    mean = jnp.mean(x, axis=-1, keepdims=True)
    var = jnp.mean((x - mean) ** 2, axis=-1, keepdims=True)
    return (x - mean) * jax.lax.rsqrt(var + EPS) * gamma + beta


def encoder_layer_kernel(x_ref, pad_ref,
                         ln1_g_ref, ln1_b_ref,
                         wq_ref, wk_ref, wv_ref, wo_ref,
                         ln2_g_ref, ln2_b_ref,
                         w1_ref, b1_ref, w2_ref, b2_ref,
                         out_ref, query_ref,
                         *, n_heads):
    Bt, L, D = x_ref.shape
    H = n_heads
    dh = D // H
    G = Bt * H
    bf16, f32 = jnp.bfloat16, jnp.float32

    # Fuse (Bt, L) into a single M dimension for all dense matmuls.
    x = x_ref[...].reshape(Bt * L, D)                        # (M, D) f32

    # ---- preprocess_attn: LayerNorm (f32) --------------------------------
    q_ln = _layernorm(x, ln1_g_ref[...], ln1_b_ref[...])
    query_ref[...] = q_ln.reshape(Bt, L, D)

    # ---- QKV projections: big (M, D) @ (D, D) matmuls, bf16 operands -----
    # 1/sqrt(dh) is already folded into wq (parameter prep time).
    q_b = q_ln.astype(bf16)
    qp = jnp.dot(q_b, wq_ref[...], preferred_element_type=f32)
    kp = jnp.dot(q_b, wk_ref[...], preferred_element_type=f32)
    vp = jnp.dot(q_b, wv_ref[...], preferred_element_type=f32)

    # ---- attention: all heads & sequences in one batched contraction -----
    def to_heads(t):  # (M, D) -> (Bt*H, L, dh)
        return jnp.swapaxes(t.reshape(Bt, L, H, dh), 1, 2).reshape(G, L, dh)

    q3 = to_heads(qp).astype(bf16)
    k3 = to_heads(kp).astype(bf16)
    v3 = to_heads(vp).astype(bf16)

    # Additive key-padding bias, built once per block (not per head).
    bias = jnp.where(pad_ref[...] > 0.0, jnp.float32(-1e9), jnp.float32(0.0))  # (Bt,1,L)

    s = jnp.einsum('gqd,gkd->gqk', q3, k3, preferred_element_type=f32)   # (G, L, L)
    s = s.reshape(Bt, H, L, L) + bias[:, None, :, :]
    m = jnp.max(s, axis=-1, keepdims=True)
    e = jnp.exp(s - m)                                                   # unnormalized probs
    denom = jnp.sum(e, axis=-1, keepdims=True)                           # (Bt, H, L, 1)

    ctx = jnp.einsum('gqk,gkd->gqd', e.reshape(G, L, L).astype(bf16), v3,
                     preferred_element_type=f32)                         # (G, L, dh)
    ctx = ctx.reshape(Bt, H, L, dh) * pl.reciprocal(denom, approx=False)  # normalize after matmul
    ctx = jnp.swapaxes(ctx, 1, 2).reshape(Bt * L, D)                     # (M, D)

    attn_out = jnp.dot(ctx.astype(bf16), wo_ref[...], preferred_element_type=f32)

    # ---- postprocess_attn: dropout(identity at eval) + residual ----------
    res1 = attn_out + x

    # ---- preprocess_ffn + FeedForward: LN -> linear -> relu -> linear ----
    y = _layernorm(res1, ln2_g_ref[...], ln2_b_ref[...])
    h1 = jnp.maximum(
        jnp.dot(y.astype(bf16), w1_ref[...], preferred_element_type=f32) + b1_ref[...],
        0.0)
    ffn = jnp.dot(h1.astype(bf16), w2_ref[...], preferred_element_type=f32) + b2_ref[...]

    # ---- postprocess_ffn: residual ---------------------------------------
    out_ref[...] = (ffn + res1).reshape(Bt, L, D)


# ------------------------- sizing heuristics --------------------------------

def _vmem_capacity_bytes():
    try:
        return int(pltpu.get_tpu_info().vmem_capacity_bytes)
    except Exception:
        return 128 << 20          # v5e/v6e default; conservative for unknown chips


def _cores_per_chip():
    """Best-effort TensorCores-per-device: v4 / v7x expose 2, v5e/v6e expose 1."""
    try:
        kind = jax.devices()[0].device_kind.lower()
    except Exception:
        return 1
    if "v4" in kind or "v7" in kind or "7x" in kind:
        return 2
    return 1


def _footprint_bytes(Bt, L, D, DFF, H, single_buffer_weights=True):
    """Per-step VMEM footprint estimate (bytes)."""
    f32, bf16 = 4, 2
    wbuf = 1 if single_buffer_weights else 2
    weights = wbuf * ((4 * D * D + 2 * D * DFF) * bf16 + (5 * D + DFF) * f32)
    io = 2 * (3 * Bt * L * D + Bt * L) * f32                # double-buffered x/out/query + pad
    inter = Bt * (10 * L * D + 3 * H * L * L + 2 * L * DFF) * f32  # live intermediates
    return weights + io + inter


def _vmem_limit_bytes(Bt, L, D, DFF, H, cap, single_buffer_weights):
    fp = _footprint_bytes(Bt, L, D, DFF, H, single_buffer_weights)
    hard = max(cap - (16 << 20), 32 << 20)                  # capacity minus headroom
    want = max(int(1.5 * fp) + (8 << 20), 32 << 20)
    return int(min(hard, want))


def _pick_block_b(B, L, D, DFF, H, budget, cores):
    """Largest divisor of B whose footprint fits the VMEM budget.

    On multi-TensorCore chips (v4/v7x) prefer a grid of >= cores steps that is a
    multiple of `cores` so the parallel axis shards evenly; on single-core chips
    (v5e/v6e) take the biggest block that fits (fewer steps = less overhead)."""
    divs = [d for d in range(1, B + 1) if B % d == 0]
    feasible = [d for d in divs
                if _footprint_bytes(d, L, D, DFF, H) <= budget] or [1]
    if cores >= 2:
        pref = [d for d in feasible if (B // d) >= cores and (B // d) % cores == 0]
        if pref:
            return max(pref)
    return max(feasible)


# ------------------------- wrapper -------------------------------------------

def prepare_params(params, n_heads):
    """One-time parameter prep: bf16 weights, 1/sqrt(dh) folded into Wq."""
    D = params["wq"].shape[0]
    dh = D // n_heads
    scale = 1.0 / math.sqrt(dh)
    bf16 = jnp.bfloat16
    p = dict(params)
    p["wq"] = (params["wq"] * scale).astype(bf16)
    p["wk"] = params["wk"].astype(bf16)
    p["wv"] = params["wv"].astype(bf16)
    p["wo"] = params["wo"].astype(bf16)
    p["w1"] = params["w1"].astype(bf16)
    p["w2"] = params["w2"].astype(bf16)
    return p


def parallel_encoder_layer(x, key_pad, prepared, n_heads, block_b=None):
    """x: (B, L, D) f32; key_pad: (B, L), >0 means key position is masked.
    `prepared` must come from prepare_params()."""
    B, L, D = x.shape
    DFF = prepared["w1"].shape[1]
    assert D % n_heads == 0

    cap = _vmem_capacity_bytes()
    budget = max(cap - (16 << 20), 32 << 20)
    cores = _cores_per_chip()
    Bt = _pick_block_b(B, L, D, DFF, n_heads, budget, cores) if block_b is None else block_b
    assert B % Bt == 0

    pad3 = key_pad.reshape(B, 1, L).astype(jnp.float32)
    args = (x, pad3,
            prepared["ln1_g"], prepared["ln1_b"],
            prepared["wq"], prepared["wk"], prepared["wv"], prepared["wo"],
            prepared["ln2_g"], prepared["ln2_b"],
            prepared["w1"], prepared["b1"], prepared["w2"], prepared["b2"])

    def build(single_buffer_weights):
        def wspec(shape):
            # Grid-invariant parameter block: same tile every step.  Single-buffer
            # it when supported (frees ~half the weight VMEM on v7x).
            if single_buffer_weights:
                return pl.BlockSpec(shape, lambda b: (0, 0),
                                    pipeline_mode=pl.Buffered(1))
            return pl.BlockSpec(shape, lambda b: (0, 0))

        in_specs = [
            pl.BlockSpec((Bt, L, D), lambda b: (b, 0, 0)),   # x
            pl.BlockSpec((Bt, 1, L), lambda b: (b, 0, 0)),   # key-padding mask
            wspec((1, D)), wspec((1, D)),                    # ln1 gamma/beta
            wspec((D, D)), wspec((D, D)), wspec((D, D)), wspec((D, D)),  # Wq Wk Wv Wo
            wspec((1, D)), wspec((1, D)),                    # ln2 gamma/beta
            wspec((D, DFF)), wspec((1, DFF)),                # W1, b1
            wspec((DFF, D)), wspec((1, D)),                  # W2, b2
        ]
        out_specs = [
            pl.BlockSpec((Bt, L, D), lambda b: (b, 0, 0)),   # out
            pl.BlockSpec((Bt, L, D), lambda b: (b, 0, 0)),   # query (layernormed input)
        ]
        out_shape = [
            jax.ShapeDtypeStruct((B, L, D), jnp.float32),
            jax.ShapeDtypeStruct((B, L, D), jnp.float32),
        ]
        return pl.pallas_call(
            partial(encoder_layer_kernel, n_heads=n_heads),
            grid=(B // Bt,),
            in_specs=in_specs,
            out_specs=out_specs,
            out_shape=out_shape,
            compiler_params=pltpu.CompilerParams(
                dimension_semantics=("parallel",),
                vmem_limit_bytes=_vmem_limit_bytes(Bt, L, D, DFF, n_heads,
                                                   cap, single_buffer_weights),
            ),
        )

    try:
        return build(True)(*args)
    except Exception:
        # pl.Buffered(1) not accepted by this jax build: fall back to defaults.
        return build(False)(*args)


# ------------------------- pure-JAX reference --------------------------------

def reference_forward(x, key_pad, prepared, n_heads):
    """Pure-JAX reference mirroring the PyTorch forward (eval mode) with the
    kernel's numerics contract (bf16 matmul operands, f32 accumulation,
    1/sqrt(dh) pre-folded into Wq)."""
    B, L, D = x.shape
    H = n_heads
    dh = D // H
    bf16, f32 = jnp.bfloat16, jnp.float32

    def mm(a, w):
        return jnp.einsum('bld,de->ble', a.astype(bf16), w.astype(bf16),
                          preferred_element_type=f32)

    q_ln = _layernorm(x, prepared["ln1_g"], prepared["ln1_b"])
    qp = mm(q_ln, prepared["wq"])           # scale already folded in
    kp = mm(q_ln, prepared["wk"])
    vp = mm(q_ln, prepared["wv"])
    q4 = qp.reshape(B, L, H, dh).transpose(0, 2, 1, 3)
    k4 = kp.reshape(B, L, H, dh).transpose(0, 2, 1, 3)
    v4 = vp.reshape(B, L, H, dh).transpose(0, 2, 1, 3)
    s = jnp.einsum('bhqd,bhkd->bhqk', q4.astype(bf16), k4.astype(bf16),
                   preferred_element_type=f32)
    bias = jnp.where(key_pad > 0, -1e9, 0.0)
    s = s + bias[:, None, None, :]
    m = jnp.max(s, axis=-1, keepdims=True)
    e = jnp.exp(s - m)
    den = jnp.sum(e, axis=-1, keepdims=True)
    ctx = jnp.einsum('bhqk,bhkd->bhqd', e.astype(bf16), v4.astype(bf16),
                     preferred_element_type=f32) / den
    ctx = ctx.transpose(0, 2, 1, 3).reshape(B, L, D)
    attn_out = mm(ctx, prepared["wo"])
    res1 = attn_out + x
    y = _layernorm(res1, prepared["ln2_g"], prepared["ln2_b"])
    h1 = jnp.maximum(mm(y, prepared["w1"]) + prepared["b1"], 0.0)
    ffn = mm(h1, prepared["w2"]) + prepared["b2"]
    return ffn + res1, q_ln


if __name__ == "__main__":
    # Small shapes consistent with the module: h=4 heads, d_model=32, d_ff=64,
    # batch=2, len_query=len_key=8.
    B, L, D, H, DFF = 2, 8, 32, 4, 64

    key = jax.random.PRNGKey(0)
    ks = jax.random.split(key, 10)
    s = 0.1
    params = {
        "ln1_g": jnp.ones((1, D), jnp.float32),
        "ln1_b": jnp.zeros((1, D), jnp.float32),
        "wq": jax.random.normal(ks[0], (D, D), jnp.float32) * s,
        "wk": jax.random.normal(ks[1], (D, D), jnp.float32) * s,
        "wv": jax.random.normal(ks[2], (D, D), jnp.float32) * s,
        "wo": jax.random.normal(ks[3], (D, D), jnp.float32) * s,
        "ln2_g": jnp.ones((1, D), jnp.float32),
        "ln2_b": jnp.zeros((1, D), jnp.float32),
        "w1": jax.random.normal(ks[4], (D, DFF), jnp.float32) * s,
        "b1": jax.random.normal(ks[5], (1, DFF), jnp.float32) * s,
        "w2": jax.random.normal(ks[6], (DFF, D), jnp.float32) * s,
        "b2": jax.random.normal(ks[7], (1, D), jnp.float32) * s,
    }
    prepared = prepare_params(params, n_heads=H)

    x = jax.random.normal(ks[8], (B, L, D), jnp.float32)

    # Padding-style mask: batch 1 has its last two key positions masked.
    key_pad = jnp.zeros((B, L), jnp.float32).at[1, 6:].set(1.0)

    out, query = parallel_encoder_layer(x, key_pad, prepared, n_heads=H)
    out = jax.block_until_ready(out)
    query = jax.block_until_ready(query)

    ref_out, ref_query = reference_forward(x, key_pad, prepared, n_heads=H)
    assert jnp.allclose(query, ref_query, atol=1e-5, rtol=1e-5), "query mismatch"
    assert jnp.allclose(out, ref_out, atol=1e-2, rtol=1e-2), "output mismatch"

    print("KERNEL_OK")
</pallas_src>

<mosaic_0001>
module attributes {stable_mosaic.version = 11 : i64} {
  func.func @encoder_layer_kernel(%arg0: i32, %arg1: memref<2x8x32xf32, #tpu.memory_space<vmem>>, %arg2: memref<2x1x8xf32, #tpu.memory_space<vmem>>, %arg3: memref<1x32xf32, #tpu.memory_space<vmem>>, %arg4: memref<1x32xf32, #tpu.memory_space<vmem>>, %arg5: memref<32x32xbf16, #tpu.memory_space<vmem>>, %arg6: memref<32x32xbf16, #tpu.memory_space<vmem>>, %arg7: memref<32x32xbf16, #tpu.memory_space<vmem>>, %arg8: memref<32x32xbf16, #tpu.memory_space<vmem>>, %arg9: memref<1x32xf32, #tpu.memory_space<vmem>>, %arg10: memref<1x32xf32, #tpu.memory_space<vmem>>, %arg11: memref<32x64xbf16, #tpu.memory_space<vmem>>, %arg12: memref<1x64xf32, #tpu.memory_space<vmem>>, %arg13: memref<64x32xbf16, #tpu.memory_space<vmem>>, %arg14: memref<1x32xf32, #tpu.memory_space<vmem>>, %arg15: memref<2x8x32xf32, #tpu.memory_space<vmem>>, %arg16: memref<2x8x32xf32, #tpu.memory_space<vmem>>) attributes {dimension_semantics = [#tpu.dimension_semantics<parallel>], iteration_bounds = array<i64: 1>, scalar_prefetch = 0 : i64, scratch_operands = 0 : i64, tpu.core_type = #tpu.core_type<tc>, window_params = [{transform_indices = @transform_0, window_bounds = array<i64: 2, 8, 32>}, {transform_indices = @transform_1, window_bounds = array<i64: 2, 1, 8>}, {pipeline_mode = #tpu.pipeline_mode<synchronous>, transform_indices = @transform_2, window_bounds = array<i64: 1, 32>}, {pipeline_mode = #tpu.pipeline_mode<synchronous>, transform_indices = @transform_3, window_bounds = array<i64: 1, 32>}, {pipeline_mode = #tpu.pipeline_mode<synchronous>, transform_indices = @transform_4, window_bounds = array<i64: 32, 32>}, {pipeline_mode = #tpu.pipeline_mode<synchronous>, transform_indices = @transform_5, window_bounds = array<i64: 32, 32>}, {pipeline_mode = #tpu.pipeline_mode<synchronous>, transform_indices = @transform_6, window_bounds = array<i64: 32, 32>}, {pipeline_mode = #tpu.pipeline_mode<synchronous>, transform_indices = @transform_7, window_bounds = array<i64: 32, 32>}, {pipeline_mode = #tpu.pipeline_mode<synchronous>, transform_indices = @transform_8, window_bounds = array<i64: 1, 32>}, {pipeline_mode = #tpu.pipeline_mode<synchronous>, transform_indices = @transform_9, window_bounds = array<i64: 1, 32>}, {pipeline_mode = #tpu.pipeline_mode<synchronous>, transform_indices = @transform_10, window_bounds = array<i64: 32, 64>}, {pipeline_mode = #tpu.pipeline_mode<synchronous>, transform_indices = @transform_11, window_bounds = array<i64: 1, 64>}, {pipeline_mode = #tpu.pipeline_mode<synchronous>, transform_indices = @transform_12, window_bounds = array<i64: 64, 32>}, {pipeline_mode = #tpu.pipeline_mode<synchronous>, transform_indices = @transform_13, window_bounds = array<i64: 1, 32>}, {transform_indices = @transform_14, window_bounds = array<i64: 2, 8, 32>}, {transform_indices = @transform_15, window_bounds = array<i64: 2, 8, 32>}]} {
    %c0 = arith.constant 0 : index
    %c0_0 = arith.constant 0 : index
    %c0_1 = arith.constant 0 : index
    %0 = vector.load %arg1[%c0, %c0_0, %c0_1] : memref<2x8x32xf32, #tpu.memory_space<vmem>>, vector<2x8x32xf32>
    %1 = vector.shape_cast %0 : vector<2x8x32xf32> to vector<16x32xf32>
    %c0_2 = arith.constant 0 : index
    %c0_3 = arith.constant 0 : index
    %2 = vector.load %arg3[%c0_2, %c0_3] : memref<1x32xf32, #tpu.memory_space<vmem>>, vector<1x32xf32>
    %c0_4 = arith.constant 0 : index
    %c0_5 = arith.constant 0 : index
    %3 = vector.load %arg4[%c0_4, %c0_5] : memref<1x32xf32, #tpu.memory_space<vmem>>, vector<1x32xf32>
    %cst = arith.constant dense<0.000000e+00> : vector<16xf32>
    %4 = vector.multi_reduction <add>, %1, %cst [1] : vector<16x32xf32> to vector<16xf32>
    %5 = vector.shape_cast %4 : vector<16xf32> to vector<16x1xf32>
    %cst_6 = arith.constant 3.200000e+01 : f32
    %6 = vector.broadcast %cst_6 : f32 to vector<16x1xf32>
    %7 = arith.divf %5, %6 : vector<16x1xf32>
    %8 = vector.broadcast %7 : vector<16x1xf32> to vector<16x32xf32>
    %9 = arith.subf %1, %8 : vector<16x32xf32>
    %10 = arith.mulf %9, %9 : vector<16x32xf32>
    %cst_7 = arith.constant dense<0.000000e+00> : vector<16xf32>
    %11 = vector.multi_reduction <add>, %10, %cst_7 [1] : vector<16x32xf32> to vector<16xf32>
    %12 = vector.shape_cast %11 : vector<16xf32> to vector<16x1xf32>
    %cst_8 = arith.constant 3.200000e+01 : f32
    %13 = vector.broadcast %cst_8 : f32 to vector<16x1xf32>
    %14 = arith.divf %12, %13 : vector<16x1xf32>
    %15 = vector.broadcast %7 : vector<16x1xf32> to vector<16x32xf32>
    %16 = arith.subf %1, %15 : vector<16x32xf32>
    %cst_9 = arith.constant 9.99999974E-6 : f32
    %17 = vector.broadcast %cst_9 : f32 to vector<16x1xf32>
    %18 = arith.addf %14, %17 : vector<16x1xf32>
    %19 = math.rsqrt %18 : vector<16x1xf32>
    %20 = vector.broadcast %19 : vector<16x1xf32> to vector<16x32xf32>
    %21 = arith.mulf %16, %20 : vector<16x32xf32>
    %22 = vector.broadcast %2 : vector<1x32xf32> to vector<16x32xf32>
    %23 = arith.mulf %21, %22 : vector<16x32xf32>
    %24 = vector.broadcast %3 : vector<1x32xf32> to vector<16x32xf32>
    %25 = arith.addf %23, %24 : vector<16x32xf32>
    %26 = vector.shape_cast %25 : vector<16x32xf32> to vector<2x8x32xf32>
    %c0_10 = arith.constant 0 : index
    %c0_11 = arith.constant 0 : index
    %c0_12 = arith.constant 0 : index
    %27 = vector.load %arg16[%c0_10, %c0_11, %c0_12] : memref<2x8x32xf32, #tpu.memory_space<vmem>>, vector<2x8x32xf32>
    tpu.vector_store %arg16[%c0_10, %c0_11, %c0_12], %26 {strides = array<i32>} : memref<2x8x32xf32, #tpu.memory_space<vmem>>, vector<2x8x32xf32>,
    %28 = arith.truncf %25 : vector<16x32xf32> to vector<16x32xbf16>
    %c0_13 = arith.constant 0 : index
    %c0_14 = arith.constant 0 : index
    %29 = vector.load %arg5[%c0_13, %c0_14] : memref<32x32xbf16, #tpu.memory_space<vmem>>, vector<32x32xbf16>
    %cst_15 = arith.constant dense<0.000000e+00> : vector<16x32xf32>
    %30 = tpu.matmul %28, %29, %cst_15 {dimension_numbers = #tpu.dot_dimension_numbers<[1], [0], [0], [1], [0, 0, 1, 1], [], []>} : vector<16x32xbf16>, vector<32x32xbf16>, vector<16x32xf32> -> vector<16x32xf32>
    %c0_16 = arith.constant 0 : index
    %c0_17 = arith.constant 0 : index
    %31 = vector.load %arg6[%c0_16, %c0_17] : memref<32x32xbf16, #tpu.memory_space<vmem>>, vector<32x32xbf16>
    %cst_18 = arith.constant dense<0.000000e+00> : vector<16x32xf32>
    %32 = tpu.matmul %28, %31, %cst_18 {dimension_numbers = #tpu.dot_dimension_numbers<[1], [0], [0], [1], [0, 0, 1, 1], [], []>} : vector<16x32xbf16>, vector<32x32xbf16>, vector<16x32xf32> -> vector<16x32xf32>
    %c0_19 = arith.constant 0 : index
    %c0_20 = arith.constant 0 : index
    %33 = vector.load %arg7[%c0_19, %c0_20] : memref<32x32xbf16, #tpu.memory_space<vmem>>, vector<32x32xbf16>
    %cst_21 = arith.constant dense<0.000000e+00> : vector<16x32xf32>
    %34 = tpu.matmul %28, %33, %cst_21 {dimension_numbers = #tpu.dot_dimension_numbers<[1], [0], [0], [1], [0, 0, 1, 1], [], []>} : vector<16x32xbf16>, vector<32x32xbf16>, vector<16x32xf32> -> vector<16x32xf32>
    %35 = vector.shape_cast %30 : vector<16x32xf32> to vector<2x8x4x8xf32>
    %36 = tpu.transpose %35, [0, 2, 1, 3] : vector<2x8x4x8xf32> -> vector<2x4x8x8xf32>
    %37 = vector.shape_cast %36 : vector<2x4x8x8xf32> to vector<8x8x8xf32>
    %38 = arith.truncf %37 : vector<8x8x8xf32> to vector<8x8x8xbf16>
    %39 = vector.shape_cast %32 : vector<16x32xf32> to vector<2x8x4x8xf32>
    %40 = tpu.transpose %39, [0, 2, 1, 3] : vector<2x8x4x8xf32> -> vector<2x4x8x8xf32>
    %41 = vector.shape_cast %40 : vector<2x4x8x8xf32> to vector<8x8x8xf32>
    %42 = arith.truncf %41 : vector<8x8x8xf32> to vector<8x8x8xbf16>
    %43 = vector.shape_cast %34 : vector<16x32xf32> to vector<2x8x4x8xf32>
    %44 = tpu.transpose %43, [0, 2, 1, 3] : vector<2x8x4x8xf32> -> vector<2x4x8x8xf32>
    %45 = vector.shape_cast %44 : vector<2x4x8x8xf32> to vector<8x8x8xf32>
    %46 = arith.truncf %45 : vector<8x8x8xf32> to vector<8x8x8xbf16>
    %c0_22 = arith.constant 0 : index
    %c0_23 = arith.constant 0 : index
    %c0_24 = arith.constant 0 : index
    %47 = vector.load %arg2[%c0_22, %c0_23, %c0_24] : memref<2x1x8xf32, #tpu.memory_space<vmem>>, vector<2x1x8xf32>
    %cst_25 = arith.constant 0.000000e+00 : f32
    %48 = vector.broadcast %cst_25 : f32 to vector<2x1x8xf32>
    %49 = arith.cmpf ogt, %47, %48 : vector<2x1x8xf32>
    %cst_26 = arith.constant -1.000000e+09 : f32
    %cst_27 = arith.constant 0.000000e+00 : f32
    %50 = vector.broadcast %cst_26 : f32 to vector<2x1x8xf32>
    %51 = vector.broadcast %cst_27 : f32 to vector<2x1x8xf32>
    %52 = arith.select %49, %50, %51 : vector<2x1x8xi1>, vector<2x1x8xf32>
    "tpu.trace_start"() <{level = 10 : i32, message = "gqd,gkd->gqk"}> : () -> ()
    %cst_28 = arith.constant dense<0.000000e+00> : vector<8x8x8xf32>
    %53 = tpu.matmul %38, %42, %cst_28 {dimension_numbers = #tpu.dot_dimension_numbers<[2], [2], [1], [1], [0, 0, 0, 1, 1, 1], [0], [0]>} : vector<8x8x8xbf16>, vector<8x8x8xbf16>, vector<8x8x8xf32> -> vector<8x8x8xf32>
    "tpu.trace_stop"() : () -> ()
    %54 = vector.shape_cast %53 : vector<8x8x8xf32> to vector<2x4x8x8xf32>
    %55 = vector.shape_cast %52 : vector<2x1x8xf32> to vector<2x1x1x8xf32>
    %56 = vector.broadcast %55 : vector<2x1x1x8xf32> to vector<2x4x8x8xf32>
    %57 = arith.addf %54, %56 : vector<2x4x8x8xf32>
    %cst_29 = arith.constant dense<0xFF800000> : vector<2x4x8xf32>
    %58 = vector.multi_reduction <maximumf>, %57, %cst_29 [3] : vector<2x4x8x8xf32> to vector<2x4x8xf32>
    %59 = vector.shape_cast %58 : vector<2x4x8xf32> to vector<2x4x8x1xf32>
    %60 = vector.broadcast %59 : vector<2x4x8x1xf32> to vector<2x4x8x8xf32>
    %61 = arith.subf %57, %60 : vector<2x4x8x8xf32>
    %62 = math.exp %61 : vector<2x4x8x8xf32>
    %cst_30 = arith.constant dense<0.000000e+00> : vector<2x4x8xf32>
    %63 = vector.multi_reduction <add>, %62, %cst_30 [3] : vector<2x4x8x8xf32> to vector<2x4x8xf32>
    %64 = vector.shape_cast %63 : vector<2x4x8xf32> to vector<2x4x8x1xf32>
    %65 = vector.shape_cast %62 : vector<2x4x8x8xf32> to vector<8x8x8xf32>
    %66 = arith.truncf %65 : vector<8x8x8xf32> to vector<8x8x8xbf16>
    "tpu.trace_start"() <{level = 10 : i32, message = "gqk,gkd->gqd"}> : () -> ()
    %cst_31 = arith.constant dense<0.000000e+00> : vector<8x8x8xf32>
    %67 = tpu.matmul %66, %46, %cst_31 {dimension_numbers = #tpu.dot_dimension_numbers<[2], [1], [1], [2], [0, 0, 0, 1, 1, 2], [0], [0]>} : vector<8x8x8xbf16>, vector<8x8x8xbf16>, vector<8x8x8xf32> -> vector<8x8x8xf32>
    "tpu.trace_stop"() : () -> ()
    %68 = vector.shape_cast %67 : vector<8x8x8xf32> to vector<2x4x8x8xf32>
    %69 = tpu.reciprocal %64 : vector<2x4x8x1xf32> -> vector<2x4x8x1xf32>
    %70 = vector.broadcast %69 : vector<2x4x8x1xf32> to vector<2x4x8x8xf32>
    %71 = arith.mulf %68, %70 : vector<2x4x8x8xf32>
    %72 = tpu.transpose %71, [0, 2, 1, 3] : vector<2x4x8x8xf32> -> vector<2x8x4x8xf32>
    %73 = vector.shape_cast %72 : vector<2x8x4x8xf32> to vector<16x32xf32>
    %74 = arith.truncf %73 : vector<16x32xf32> to vector<16x32xbf16>
    %c0_32 = arith.constant 0 : index
    %c0_33 = arith.constant 0 : index
    %75 = vector.load %arg8[%c0_32, %c0_33] : memref<32x32xbf16, #tpu.memory_space<vmem>>, vector<32x32xbf16>
    %cst_34 = arith.constant dense<0.000000e+00> : vector<16x32xf32>
    %76 = tpu.matmul %74, %75, %cst_34 {dimension_numbers = #tpu.dot_dimension_numbers<[1], [0], [0], [1], [0, 0, 1, 1], [], []>} : vector<16x32xbf16>, vector<32x32xbf16>, vector<16x32xf32> -> vector<16x32xf32>
    %77 = arith.addf %76, %1 : vector<16x32xf32>
    %c0_35 = arith.constant 0 : index
    %c0_36 = arith.constant 0 : index
    %78 = vector.load %arg9[%c0_35, %c0_36] : memref<1x32xf32, #tpu.memory_space<vmem>>, vector<1x32xf32>
    %c0_37 = arith.constant 0 : index
    %c0_38 = arith.constant 0 : index
    %79 = vector.load %arg10[%c0_37, %c0_38] : memref<1x32xf32, #tpu.memory_space<vmem>>, vector<1x32xf32>
    %cst_39 = arith.constant dense<0.000000e+00> : vector<16xf32>
    %80 = vector.multi_reduction <add>, %77, %cst_39 [1] : vector<16x32xf32> to vector<16xf32>
    %81 = vector.shape_cast %80 : vector<16xf32> to vector<16x1xf32>
    %cst_40 = arith.constant 3.200000e+01 : f32
    %82 = vector.broadcast %cst_40 : f32 to vector<16x1xf32>
    %83 = arith.divf %81, %82 : vector<16x1xf32>
    %84 = vector.broadcast %83 : vector<16x1xf32> to vector<16x32xf32>
    %85 = arith.subf %77, %84 : vector<16x32xf32>
    %86 = arith.mulf %85, %85 : vector<16x32xf32>
    %cst_41 = arith.constant dense<0.000000e+00> : vector<16xf32>
    %87 = vector.multi_reduction <add>, %86, %cst_41 [1] : vector<16x32xf32> to vector<16xf32>
    %88 = vector.shape_cast %87 : vector<16xf32> to vector<16x1xf32>
    %cst_42 = arith.constant 3.200000e+01 : f32
    %89 = vector.broadcast %cst_42 : f32 to vector<16x1xf32>
    %90 = arith.divf %88, %89 : vector<16x1xf32>
    %91 = vector.broadcast %83 : vector<16x1xf32> to vector<16x32xf32>
    %92 = arith.subf %77, %91 : vector<16x32xf32>
    %cst_43 = arith.constant 9.99999974E-6 : f32
    %93 = vector.broadcast %cst_43 : f32 to vector<16x1xf32>
    %94 = arith.addf %90, %93 : vector<16x1xf32>
    %95 = math.rsqrt %94 : vector<16x1xf32>
    %96 = vector.broadcast %95 : vector<16x1xf32> to vector<16x32xf32>
    %97 = arith.mulf %92, %96 : vector<16x32xf32>
    %98 = vector.broadcast %78 : vector<1x32xf32> to vector<16x32xf32>
    %99 = arith.mulf %97, %98 : vector<16x32xf32>
    %100 = vector.broadcast %79 : vector<1x32xf32> to vector<16x32xf32>
    %101 = arith.addf %99, %100 : vector<16x32xf32>
    %102 = arith.truncf %101 : vector<16x32xf32> to vector<16x32xbf16>
    %c0_44 = arith.constant 0 : index
    %c0_45 = arith.constant 0 : index
    %103 = vector.load %arg11[%c0_44, %c0_45] : memref<32x64xbf16, #tpu.memory_space<vmem>>, vector<32x64xbf16>
    %cst_46 = arith.constant dense<0.000000e+00> : vector<16x64xf32>
    %104 = tpu.matmul %102, %103, %cst_46 {dimension_numbers = #tpu.dot_dimension_numbers<[1], [0], [0], [1], [0, 0, 1, 1], [], []>} : vector<16x32xbf16>, vector<32x64xbf16>, vector<16x64xf32> -> vector<16x64xf32>
    %c0_47 = arith.constant 0 : index
    %c0_48 = arith.constant 0 : index
    %105 = vector.load %arg12[%c0_47, %c0_48] : memref<1x64xf32, #tpu.memory_space<vmem>>, vector<1x64xf32>
    %106 = vector.broadcast %105 : vector<1x64xf32> to vector<16x64xf32>
    %107 = arith.addf %104, %106 : vector<16x64xf32>
    %cst_49 = arith.constant 0.000000e+00 : f32
    %108 = vector.broadcast %cst_49 : f32 to vector<16x64xf32>
    %109 = arith.maximumf %107, %108 : vector<16x64xf32>
    %110 = arith.truncf %109 : vector<16x64xf32> to vector<16x64xbf16>
    %c0_50 = arith.constant 0 : index
    %c0_51 = arith.constant 0 : index
    %111 = vector.load %arg13[%c0_50, %c0_51] : memref<64x32xbf16, #tpu.memory_space<vmem>>, vector<64x32xbf16>
    %cst_52 = arith.constant dense<0.000000e+00> : vector<16x32xf32>
    %112 = tpu.matmul %110, %111, %cst_52 {dimension_numbers = #tpu.dot_dimension_numbers<[1], [0], [0], [1], [0, 0, 1, 1], [], []>} : vector<16x64xbf16>, vector<64x32xbf16>, vector<16x32xf32> -> vector<16x32xf32>
    %c0_53 = arith.constant 0 : index
    %c0_54 = arith.constant 0 : index
    %113 = vector.load %arg14[%c0_53, %c0_54] : memref<1x32xf32, #tpu.memory_space<vmem>>, vector<1x32xf32>
    %114 = vector.broadcast %113 : vector<1x32xf32> to vector<16x32xf32>
    %115 = arith.addf %112, %114 : vector<16x32xf32>
    %116 = arith.addf %115, %77 : vector<16x32xf32>
    %117 = vector.shape_cast %116 : vector<16x32xf32> to vector<2x8x32xf32>
    %c0_55 = arith.constant 0 : index
    %c0_56 = arith.constant 0 : index
    %c0_57 = arith.constant 0 : index
    %118 = vector.load %arg15[%c0_55, %c0_56, %c0_57] : memref<2x8x32xf32, #tpu.memory_space<vmem>>, vector<2x8x32xf32>
    tpu.vector_store %arg15[%c0_55, %c0_56, %c0_57], %117 {strides = array<i32>} : memref<2x8x32xf32, #tpu.memory_space<vmem>>, vector<2x8x32xf32>,
    return
  }
  func.func @transform_0(%arg0: i32) -> (i32, i32, i32) {
    %c0_i32 = arith.constant 0 : i32
    %c0_i32_0 = arith.constant 0 : i32
    %c0_i32_1 = arith.constant 0 : i32
    return %arg0, %c0_i32, %c0_i32_0 : i32, i32, i32
  }
  func.func @transform_1(%arg0: i32) -> (i32, i32, i32) {
    %c0_i32 = arith.constant 0 : i32
    %c0_i32_0 = arith.constant 0 : i32
    %c0_i32_1 = arith.constant 0 : i32
    return %arg0, %c0_i32, %c0_i32_0 : i32, i32, i32
  }
  func.func @transform_2(%arg0: i32) -> (i32, i32) {
    %c0_i32 = arith.constant 0 : i32
    %c0_i32_0 = arith.constant 0 : i32
    %c0_i32_1 = arith.constant 0 : i32
    return %c0_i32, %c0_i32_0 : i32, i32
  }
  func.func @transform_3(%arg0: i32) -> (i32, i32) {
    %c0_i32 = arith.constant 0 : i32
    %c0_i32_0 = arith.constant 0 : i32
    %c0_i32_1 = arith.constant 0 : i32
    return %c0_i32, %c0_i32_0 : i32, i32
  }
  func.func @transform_4(%arg0: i32) -> (i32, i32) {
    %c0_i32 = arith.constant 0 : i32
    %c0_i32_0 = arith.constant 0 : i32
    %c0_i32_1 = arith.constant 0 : i32
    return %c0_i32, %c0_i32_0 : i32, i32
  }
  func.func @transform_5(%arg0: i32) -> (i32, i32) {
    %c0_i32 = arith.constant 0 : i32
    %c0_i32_0 = arith.constant 0 : i32
    %c0_i32_1 = arith.constant 0 : i32
    return %c0_i32, %c0_i32_0 : i32, i32
  }
  func.func @transform_6(%arg0: i32) -> (i32, i32) {
    %c0_i32 = arith.constant 0 : i32
    %c0_i32_0 = arith.constant 0 : i32
    %c0_i32_1 = arith.constant 0 : i32
    return %c0_i32, %c0_i32_0 : i32, i32
  }
  func.func @transform_7(%arg0: i32) -> (i32, i32) {
    %c0_i32 = arith.constant 0 : i32
    %c0_i32_0 = arith.constant 0 : i32
    %c0_i32_1 = arith.constant 0 : i32
    return %c0_i32, %c0_i32_0 : i32, i32
  }
  func.func @transform_8(%arg0: i32) -> (i32, i32) {
    %c0_i32 = arith.constant 0 : i32
    %c0_i32_0 = arith.constant 0 : i32
    %c0_i32_1 = arith.constant 0 : i32
    return %c0_i32, %c0_i32_0 : i32, i32
  }
  func.func @transform_9(%arg0: i32) -> (i32, i32) {
    %c0_i32 = arith.constant 0 : i32
    %c0_i32_0 = arith.constant 0 : i32
    %c0_i32_1 = arith.constant 0 : i32
    return %c0_i32, %c0_i32_0 : i32, i32
  }
  func.func @transform_10(%arg0: i32) -> (i32, i32) {
    %c0_i32 = arith.constant 0 : i32
    %c0_i32_0 = arith.constant 0 : i32
    %c0_i32_1 = arith.constant 0 : i32
    return %c0_i32, %c0_i32_0 : i32, i32
  }
  func.func @transform_11(%arg0: i32) -> (i32, i32) {
    %c0_i32 = arith.constant 0 : i32
    %c0_i32_0 = arith.constant 0 : i32
    %c0_i32_1 = arith.constant 0 : i32
    return %c0_i32, %c0_i32_0 : i32, i32
  }
  func.func @transform_12(%arg0: i32) -> (i32, i32) {
    %c0_i32 = arith.constant 0 : i32
    %c0_i32_0 = arith.constant 0 : i32
    %c0_i32_1 = arith.constant 0 : i32
    return %c0_i32, %c0_i32_0 : i32, i32
  }
  func.func @transform_13(%arg0: i32) -> (i32, i32) {
    %c0_i32 = arith.constant 0 : i32
    %c0_i32_0 = arith.constant 0 : i32
    %c0_i32_1 = arith.constant 0 : i32
    return %c0_i32, %c0_i32_0 : i32, i32
  }
  func.func @transform_14(%arg0: i32) -> (i32, i32, i32) {
    %c0_i32 = arith.constant 0 : i32
    %c0_i32_0 = arith.constant 0 : i32
    %c0_i32_1 = arith.constant 0 : i32
    return %arg0, %c0_i32, %c0_i32_0 : i32, i32, i32
  }
  func.func @transform_15(%arg0: i32) -> (i32, i32, i32) {
    %c0_i32 = arith.constant 0 : i32
    %c0_i32_0 = arith.constant 0 : i32
    %c0_i32_1 = arith.constant 0 : i32
    return %arg0, %c0_i32, %c0_i32_0 : i32, i32, i32
  }
}

module attributes {stable_mosaic.version = 11 : i64} {
  func.func @encoder_layer_kernel(%arg0: i32, %arg1: memref<2x8x32xf32, #tpu.memory_space<vmem>>, %arg2: memref<2x1x8xf32, #tpu.memory_space<vmem>>, %arg3: memref<1x32xf32, #tpu.memory_space<vmem>>, %arg4: memref<1x32xf32, #tpu.memory_space<vmem>>, %arg5: memref<32x32xbf16, #tpu.memory_space<vmem>>, %arg6: memref<32x32xbf16, #tpu.memory_space<vmem>>, %arg7: memref<32x32xbf16, #tpu.memory_space<vmem>>, %arg8: memref<32x32xbf16, #tpu.memory_space<vmem>>, %arg9: memref<1x32xf32, #tpu.memory_space<vmem>>, %arg10: memref<1x32xf32, #tpu.memory_space<vmem>>, %arg11: memref<32x64xbf16, #tpu.memory_space<vmem>>, %arg12: memref<1x64xf32, #tpu.memory_space<vmem>>, %arg13: memref<64x32xbf16, #tpu.memory_space<vmem>>, %arg14: memref<1x32xf32, #tpu.memory_space<vmem>>, %arg15: memref<2x8x32xf32, #tpu.memory_space<vmem>>, %arg16: memref<2x8x32xf32, #tpu.memory_space<vmem>>) attributes {dimension_semantics = [#tpu.dimension_semantics<parallel>], iteration_bounds = array<i64: 1>, scalar_prefetch = 0 : i64, scratch_operands = 0 : i64, tpu.core_type = #tpu.core_type<tc>, window_params = [{transform_indices = @transform_0, window_bounds = array<i64: 2, 8, 32>}, {transform_indices = @transform_1, window_bounds = array<i64: 2, 1, 8>}, {pipeline_mode = #tpu.pipeline_mode<synchronous>, transform_indices = @transform_2, window_bounds = array<i64: 1, 32>}, {pipeline_mode = #tpu.pipeline_mode<synchronous>, transform_indices = @transform_3, window_bounds = array<i64: 1, 32>}, {pipeline_mode = #tpu.pipeline_mode<synchronous>, transform_indices = @transform_4, window_bounds = array<i64: 32, 32>}, {pipeline_mode = #tpu.pipeline_mode<synchronous>, transform_indices = @transform_5, window_bounds = array<i64: 32, 32>}, {pipeline_mode = #tpu.pipeline_mode<synchronous>, transform_indices = @transform_6, window_bounds = array<i64: 32, 32>}, {pipeline_mode = #tpu.pipeline_mode<synchronous>, transform_indices = @transform_7, window_bounds = array<i64: 32, 32>}, {pipeline_mode = #tpu.pipeline_mode<synchronous>, transform_indices = @transform_8, window_bounds = array<i64: 1, 32>}, {pipeline_mode = #tpu.pipeline_mode<synchronous>, transform_indices = @transform_9, window_bounds = array<i64: 1, 32>}, {pipeline_mode = #tpu.pipeline_mode<synchronous>, transform_indices = @transform_10, window_bounds = array<i64: 32, 64>}, {pipeline_mode = #tpu.pipeline_mode<synchronous>, transform_indices = @transform_11, window_bounds = array<i64: 1, 64>}, {pipeline_mode = #tpu.pipeline_mode<synchronous>, transform_indices = @transform_12, window_bounds = array<i64: 64, 32>}, {pipeline_mode = #tpu.pipeline_mode<synchronous>, transform_indices = @transform_13, window_bounds = array<i64: 1, 32>}, {transform_indices = @transform_14, window_bounds = array<i64: 2, 8, 32>}, {transform_indices = @transform_15, window_bounds = array<i64: 2, 8, 32>}]} {
    %c0 = arith.constant 0 : index
    %c0_0 = arith.constant 0 : index
    %c0_1 = arith.constant 0 : index
    %0 = vector.load %arg1[%c0, %c0_0, %c0_1] : memref<2x8x32xf32, #tpu.memory_space<vmem>>, vector<2x8x32xf32>
    %1 = vector.shape_cast %0 : vector<2x8x32xf32> to vector<16x32xf32>
    %c0_2 = arith.constant 0 : index
    %c0_3 = arith.constant 0 : index
    %2 = vector.load %arg3[%c0_2, %c0_3] : memref<1x32xf32, #tpu.memory_space<vmem>>, vector<1x32xf32>
    %c0_4 = arith.constant 0 : index
    %c0_5 = arith.constant 0 : index
    %3 = vector.load %arg4[%c0_4, %c0_5] : memref<1x32xf32, #tpu.memory_space<vmem>>, vector<1x32xf32>
    %cst = arith.constant dense<0.000000e+00> : vector<16xf32>
    %4 = vector.multi_reduction <add>, %1, %cst [1] : vector<16x32xf32> to vector<16xf32>
    %5 = vector.shape_cast %4 : vector<16xf32> to vector<16x1xf32>
    %cst_6 = arith.constant 3.200000e+01 : f32
    %6 = vector.broadcast %cst_6 : f32 to vector<16x1xf32>
    %7 = arith.divf %5, %6 : vector<16x1xf32>
    %8 = vector.broadcast %7 : vector<16x1xf32> to vector<16x32xf32>
    %9 = arith.subf %1, %8 : vector<16x32xf32>
    %10 = arith.mulf %9, %9 : vector<16x32xf32>
    %cst_7 = arith.constant dense<0.000000e+00> : vector<16xf32>
    %11 = vector.multi_reduction <add>, %10, %cst_7 [1] : vector<16x32xf32> to vector<16xf32>
    %12 = vector.shape_cast %11 : vector<16xf32> to vector<16x1xf32>
    %cst_8 = arith.constant 3.200000e+01 : f32
    %13 = vector.broadcast %cst_8 : f32 to vector<16x1xf32>
    %14 = arith.divf %12, %13 : vector<16x1xf32>
    %15 = vector.broadcast %7 : vector<16x1xf32> to vector<16x32xf32>
    %16 = arith.subf %1, %15 : vector<16x32xf32>
    %cst_9 = arith.constant 9.99999974E-6 : f32
    %17 = vector.broadcast %cst_9 : f32 to vector<16x1xf32>
    %18 = arith.addf %14, %17 : vector<16x1xf32>
    %19 = math.rsqrt %18 : vector<16x1xf32>
    %20 = vector.broadcast %19 : vector<16x1xf32> to vector<16x32xf32>
    %21 = arith.mulf %16, %20 : vector<16x32xf32>
    %22 = vector.broadcast %2 : vector<1x32xf32> to vector<16x32xf32>
    %23 = arith.mulf %21, %22 : vector<16x32xf32>
    %24 = vector.broadcast %3 : vector<1x32xf32> to vector<16x32xf32>
    %25 = arith.addf %23, %24 : vector<16x32xf32>
    %26 = vector.shape_cast %25 : vector<16x32xf32> to vector<2x8x32xf32>
    %c0_10 = arith.constant 0 : index
    %c0_11 = arith.constant 0 : index
    %c0_12 = arith.constant 0 : index
    %27 = vector.load %arg16[%c0_10, %c0_11, %c0_12] : memref<2x8x32xf32, #tpu.memory_space<vmem>>, vector<2x8x32xf32>
    tpu.vector_store %arg16[%c0_10, %c0_11, %c0_12], %26 {strides = array<i32>} : memref<2x8x32xf32, #tpu.memory_space<vmem>>, vector<2x8x32xf32>,
    %28 = arith.truncf %25 : vector<16x32xf32> to vector<16x32xbf16>
    %c0_13 = arith.constant 0 : index
    %c0_14 = arith.constant 0 : index
    %29 = vector.load %arg5[%c0_13, %c0_14] : memref<32x32xbf16, #tpu.memory_space<vmem>>, vector<32x32xbf16>
    %cst_15 = arith.constant dense<0.000000e+00> : vector<16x32xf32>
    %30 = tpu.matmul %28, %29, %cst_15 {dimension_numbers = #tpu.dot_dimension_numbers<[1], [0], [0], [1], [0, 0, 1, 1], [], []>} : vector<16x32xbf16>, vector<32x32xbf16>, vector<16x32xf32> -> vector<16x32xf32>
    %c0_16 = arith.constant 0 : index
    %c0_17 = arith.constant 0 : index
    %31 = vector.load %arg6[%c0_16, %c0_17] : memref<32x32xbf16, #tpu.memory_space<vmem>>, vector<32x32xbf16>
    %cst_18 = arith.constant dense<0.000000e+00> : vector<16x32xf32>
    %32 = tpu.matmul %28, %31, %cst_18 {dimension_numbers = #tpu.dot_dimension_numbers<[1], [0], [0], [1], [0, 0, 1, 1], [], []>} : vector<16x32xbf16>, vector<32x32xbf16>, vector<16x32xf32> -> vector<16x32xf32>
    %c0_19 = arith.constant 0 : index
    %c0_20 = arith.constant 0 : index
    %33 = vector.load %arg7[%c0_19, %c0_20] : memref<32x32xbf16, #tpu.memory_space<vmem>>, vector<32x32xbf16>
    %cst_21 = arith.constant dense<0.000000e+00> : vector<16x32xf32>
    %34 = tpu.matmul %28, %33, %cst_21 {dimension_numbers = #tpu.dot_dimension_numbers<[1], [0], [0], [1], [0, 0, 1, 1], [], []>} : vector<16x32xbf16>, vector<32x32xbf16>, vector<16x32xf32> -> vector<16x32xf32>
    %35 = vector.shape_cast %30 : vector<16x32xf32> to vector<2x8x4x8xf32>
    %36 = tpu.transpose %35, [0, 2, 1, 3] : vector<2x8x4x8xf32> -> vector<2x4x8x8xf32>
    %37 = vector.shape_cast %36 : vector<2x4x8x8xf32> to vector<8x8x8xf32>
    %38 = arith.truncf %37 : vector<8x8x8xf32> to vector<8x8x8xbf16>
    %39 = vector.shape_cast %32 : vector<16x32xf32> to vector<2x8x4x8xf32>
    %40 = tpu.transpose %39, [0, 2, 1, 3] : vector<2x8x4x8xf32> -> vector<2x4x8x8xf32>
    %41 = vector.shape_cast %40 : vector<2x4x8x8xf32> to vector<8x8x8xf32>
    %42 = arith.truncf %41 : vector<8x8x8xf32> to vector<8x8x8xbf16>
    %43 = vector.shape_cast %34 : vector<16x32xf32> to vector<2x8x4x8xf32>
    %44 = tpu.transpose %43, [0, 2, 1, 3] : vector<2x8x4x8xf32> -> vector<2x4x8x8xf32>
    %45 = vector.shape_cast %44 : vector<2x4x8x8xf32> to vector<8x8x8xf32>
    %46 = arith.truncf %45 : vector<8x8x8xf32> to vector<8x8x8xbf16>
    %c0_22 = arith.constant 0 : index
    %c0_23 = arith.constant 0 : index
    %c0_24 = arith.constant 0 : index
    %47 = vector.load %arg2[%c0_22, %c0_23, %c0_24] : memref<2x1x8xf32, #tpu.memory_space<vmem>>, vector<2x1x8xf32>
    %cst_25 = arith.constant 0.000000e+00 : f32
    %48 = vector.broadcast %cst_25 : f32 to vector<2x1x8xf32>
    %49 = arith.cmpf ogt, %47, %48 : vector<2x1x8xf32>
    %cst_26 = arith.constant -1.000000e+09 : f32
    %cst_27 = arith.constant 0.000000e+00 : f32
    %50 = vector.broadcast %cst_26 : f32 to vector<2x1x8xf32>
    %51 = vector.broadcast %cst_27 : f32 to vector<2x1x8xf32>
    %52 = arith.select %49, %50, %51 : vector<2x1x8xi1>, vector<2x1x8xf32>
    "tpu.trace_start"() <{level = 10 : i32, message = "gqd,gkd->gqk"}> : () -> ()
    %cst_28 = arith.constant dense<0.000000e+00> : vector<8x8x8xf32>
    %53 = tpu.matmul %38, %42, %cst_28 {dimension_numbers = #tpu.dot_dimension_numbers<[2], [2], [1], [1], [0, 0, 0, 1, 1, 1], [0], [0]>} : vector<8x8x8xbf16>, vector<8x8x8xbf16>, vector<8x8x8xf32> -> vector<8x8x8xf32>
    "tpu.trace_stop"() : () -> ()
    %54 = vector.shape_cast %53 : vector<8x8x8xf32> to vector<2x4x8x8xf32>
    %55 = vector.shape_cast %52 : vector<2x1x8xf32> to vector<2x1x1x8xf32>
    %56 = vector.broadcast %55 : vector<2x1x1x8xf32> to vector<2x4x8x8xf32>
    %57 = arith.addf %54, %56 : vector<2x4x8x8xf32>
    %cst_29 = arith.constant dense<0xFF800000> : vector<2x4x8xf32>
    %58 = vector.multi_reduction <maximumf>, %57, %cst_29 [3] : vector<2x4x8x8xf32> to vector<2x4x8xf32>
    %59 = vector.shape_cast %58 : vector<2x4x8xf32> to vector<2x4x8x1xf32>
    %60 = vector.broadcast %59 : vector<2x4x8x1xf32> to vector<2x4x8x8xf32>
    %61 = arith.subf %57, %60 : vector<2x4x8x8xf32>
    %62 = math.exp %61 : vector<2x4x8x8xf32>
    %cst_30 = arith.constant dense<0.000000e+00> : vector<2x4x8xf32>
    %63 = vector.multi_reduction <add>, %62, %cst_30 [3] : vector<2x4x8x8xf32> to vector<2x4x8xf32>
    %64 = vector.shape_cast %63 : vector<2x4x8xf32> to vector<2x4x8x1xf32>
    %65 = vector.shape_cast %62 : vector<2x4x8x8xf32> to vector<8x8x8xf32>
    %66 = arith.truncf %65 : vector<8x8x8xf32> to vector<8x8x8xbf16>
    "tpu.trace_start"() <{level = 10 : i32, message = "gqk,gkd->gqd"}> : () -> ()
    %cst_31 = arith.constant dense<0.000000e+00> : vector<8x8x8xf32>
    %67 = tpu.matmul %66, %46, %cst_31 {dimension_numbers = #tpu.dot_dimension_numbers<[2], [1], [1], [2], [0, 0, 0, 1, 1, 2], [0], [0]>} : vector<8x8x8xbf16>, vector<8x8x8xbf16>, vector<8x8x8xf32> -> vector<8x8x8xf32>
    "tpu.trace_stop"() : () -> ()
    %68 = vector.shape_cast %67 : vector<8x8x8xf32> to vector<2x4x8x8xf32>
    %69 = tpu.reciprocal %64 : vector<2x4x8x1xf32> -> vector<2x4x8x1xf32>
    %70 = vector.broadcast %69 : vector<2x4x8x1xf32> to vector<2x4x8x8xf32>
    %71 = arith.mulf %68, %70 : vector<2x4x8x8xf32>
    %72 = tpu.transpose %71, [0, 2, 1, 3] : vector<2x4x8x8xf32> -> vector<2x8x4x8xf32>
    %73 = vector.shape_cast %72 : vector<2x8x4x8xf32> to vector<16x32xf32>
    %74 = arith.truncf %73 : vector<16x32xf32> to vector<16x32xbf16>
    %c0_32 = arith.constant 0 : index
    %c0_33 = arith.constant 0 : index
    %75 = vector.load %arg8[%c0_32, %c0_33] : memref<32x32xbf16, #tpu.memory_space<vmem>>, vector<32x32xbf16>
    %cst_34 = arith.constant dense<0.000000e+00> : vector<16x32xf32>
    %76 = tpu.matmul %74, %75, %cst_34 {dimension_numbers = #tpu.dot_dimension_numbers<[1], [0], [0], [1], [0, 0, 1, 1], [], []>} : vector<16x32xbf16>, vector<32x32xbf16>, vector<16x32xf32> -> vector<16x32xf32>
    %77 = arith.addf %76, %1 : vector<16x32xf32>
    %c0_35 = arith.constant 0 : index
    %c0_36 = arith.constant 0 : index
    %78 = vector.load %arg9[%c0_35, %c0_36] : memref<1x32xf32, #tpu.memory_space<vmem>>, vector<1x32xf32>
    %c0_37 = arith.constant 0 : index
    %c0_38 = arith.constant 0 : index
    %79 = vector.load %arg10[%c0_37, %c0_38] : memref<1x32xf32, #tpu.memory_space<vmem>>, vector<1x32xf32>
    %cst_39 = arith.constant dense<0.000000e+00> : vector<16xf32>
    %80 = vector.multi_reduction <add>, %77, %cst_39 [1] : vector<16x32xf32> to vector<16xf32>
    %81 = vector.shape_cast %80 : vector<16xf32> to vector<16x1xf32>
    %cst_40 = arith.constant 3.200000e+01 : f32
    %82 = vector.broadcast %cst_40 : f32 to vector<16x1xf32>
    %83 = arith.divf %81, %82 : vector<16x1xf32>
    %84 = vector.broadcast %83 : vector<16x1xf32> to vector<16x32xf32>
    %85 = arith.subf %77, %84 : vector<16x32xf32>
    %86 = arith.mulf %85, %85 : vector<16x32xf32>
    %cst_41 = arith.constant dense<0.000000e+00> : vector<16xf32>
    %87 = vector.multi_reduction <add>, %86, %cst_41 [1] : vector<16x32xf32> to vector<16xf32>
    %88 = vector.shape_cast %87 : vector<16xf32> to vector<16x1xf32>
    %cst_42 = arith.constant 3.200000e+01 : f32
    %89 = vector.broadcast %cst_42 : f32 to vector<16x1xf32>
    %90 = arith.divf %88, %89 : vector<16x1xf32>
    %91 = vector.broadcast %83 : vector<16x1xf32> to vector<16x32xf32>
    %92 = arith.subf %77, %91 : vector<16x32xf32>
    %cst_43 = arith.constant 9.99999974E-6 : f32
    %93 = vector.broadcast %cst_43 : f32 to vector<16x1xf32>
    %94 = arith.addf %90, %93 : vector<16x1xf32>
    %95 = math.rsqrt %94 : vector<16x1xf32>
    %96 = vector.broadcast %95 : vector<16x1xf32> to vector<16x32xf32>
    %97 = arith.mulf %92, %96 : vector<16x32xf32>
    %98 = vector.broadcast %78 : vector<1x32xf32> to vector<16x32xf32>
    %99 = arith.mulf %97, %98 : vector<16x32xf32>
    %100 = vector.broadcast %79 : vector<1x32xf32> to vector<16x32xf32>
    %101 = arith.addf %99, %100 : vector<16x32xf32>
    %102 = arith.truncf %101 : vector<16x32xf32> to vector<16x32xbf16>
    %c0_44 = arith.constant 0 : index
    %c0_45 = arith.constant 0 : index
    %103 = vector.load %arg11[%c0_44, %c0_45] : memref<32x64xbf16, #tpu.memory_space<vmem>>, vector<32x64xbf16>
    %cst_46 = arith.constant dense<0.000000e+00> : vector<16x64xf32>
    %104 = tpu.matmul %102, %103, %cst_46 {dimension_numbers = #tpu.dot_dimension_numbers<[1], [0], [0], [1], [0, 0, 1, 1], [], []>} : vector<16x32xbf16>, vector<32x64xbf16>, vector<16x64xf32> -> vector<16x64xf32>
    %c0_47 = arith.constant 0 : index
    %c0_48 = arith.constant 0 : index
    %105 = vector.load %arg12[%c0_47, %c0_48] : memref<1x64xf32, #tpu.memory_space<vmem>>, vector<1x64xf32>
    %106 = vector.broadcast %105 : vector<1x64xf32> to vector<16x64xf32>
    %107 = arith.addf %104, %106 : vector<16x64xf32>
    %cst_49 = arith.constant 0.000000e+00 : f32
    %108 = vector.broadcast %cst_49 : f32 to vector<16x64xf32>
    %109 = arith.maximumf %107, %108 : vector<16x64xf32>
    %110 = arith.truncf %109 : vector<16x64xf32> to vector<16x64xbf16>
    %c0_50 = arith.constant 0 : index
    %c0_51 = arith.constant 0 : index
    %111 = vector.load %arg13[%c0_50, %c0_51] : memref<64x32xbf16, #tpu.memory_space<vmem>>, vector<64x32xbf16>
    %cst_52 = arith.constant dense<0.000000e+00> : vector<16x32xf32>
    %112 = tpu.matmul %110, %111, %cst_52 {dimension_numbers = #tpu.dot_dimension_numbers<[1], [0], [0], [1], [0, 0, 1, 1], [], []>} : vector<16x64xbf16>, vector<64x32xbf16>, vector<16x32xf32> -> vector<16x32xf32>
    %c0_53 = arith.constant 0 : index
    %c0_54 = arith.constant 0 : index
    %113 = vector.load %arg14[%c0_53, %c0_54] : memref<1x32xf32, #tpu.memory_space<vmem>>, vector<1x32xf32>
    %114 = vector.broadcast %113 : vector<1x32xf32> to vector<16x32xf32>
    %115 = arith.addf %112, %114 : vector<16x32xf32>
    %116 = arith.addf %115, %77 : vector<16x32xf32>
    %117 = vector.shape_cast %116 : vector<16x32xf32> to vector<2x8x32xf32>
    %c0_55 = arith.constant 0 : index
    %c0_56 = arith.constant 0 : index
    %c0_57 = arith.constant 0 : index
    %118 = vector.load %arg15[%c0_55, %c0_56, %c0_57] : memref<2x8x32xf32, #tpu.memory_space<vmem>>, vector<2x8x32xf32>
    tpu.vector_store %arg15[%c0_55, %c0_56, %c0_57], %117 {strides = array<i32>} : memref<2x8x32xf32, #tpu.memory_space<vmem>>, vector<2x8x32xf32>,
    return
  }
  func.func @transform_0(%arg0: i32) -> (i32, i32, i32) {
    %c0_i32 = arith.constant 0 : i32
    %c0_i32_0 = arith.constant 0 : i32
    %c0_i32_1 = arith.constant 0 : i32
    return %arg0, %c0_i32, %c0_i32_0 : i32, i32, i32
  }
  func.func @transform_1(%arg0: i32) -> (i32, i32, i32) {
    %c0_i32 = arith.constant 0 : i32
    %c0_i32_0 = arith.constant 0 : i32
    %c0_i32_1 = arith.constant 0 : i32
    return %arg0, %c0_i32, %c0_i32_0 : i32, i32, i32
  }
  func.func @transform_2(%arg0: i32) -> (i32, i32) {
    %c0_i32 = arith.constant 0 : i32
    %c0_i32_0 = arith.constant 0 : i32
    %c0_i32_1 = arith.constant 0 : i32
    return %c0_i32, %c0_i32_0 : i32, i32
  }
  func.func @transform_3(%arg0: i32) -> (i32, i32) {
    %c0_i32 = arith.constant 0 : i32
    %c0_i32_0 = arith.constant 0 : i32
    %c0_i32_1 = arith.constant 0 : i32
    return %c0_i32, %c0_i32_0 : i32, i32
  }
  func.func @transform_4(%arg0: i32) -> (i32, i32) {
    %c0_i32 = arith.constant 0 : i32
    %c0_i32_0 = arith.constant 0 : i32
    %c0_i32_1 = arith.constant 0 : i32
    return %c0_i32, %c0_i32_0 : i32, i32
  }
  func.func @transform_5(%arg0: i32) -> (i32, i32) {
    %c0_i32 = arith.constant 0 : i32
    %c0_i32_0 = arith.constant 0 : i32
    %c0_i32_1 = arith.constant 0 : i32
    return %c0_i32, %c0_i32_0 : i32, i32
  }
  func.func @transform_6(%arg0: i32) -> (i32, i32) {
    %c0_i32 = arith.constant 0 : i32
    %c0_i32_0 = arith.constant 0 : i32
    %c0_i32_1 = arith.constant 0 : i32
    return %c0_i32, %c0_i32_0 : i32, i32
  }
  func.func @transform_7(%arg0: i32) -> (i32, i32) {
    %c0_i32 = arith.constant 0 : i32
    %c0_i32_0 = arith.constant 0 : i32
    %c0_i32_1 = arith.constant 0 : i32
    return %c0_i32, %c0_i32_0 : i32, i32
  }
  func.func @transform_8(%arg0: i32) -> (i32, i32) {
    %c0_i32 = arith.constant 0 : i32
    %c0_i32_0 = arith.constant 0 : i32
    %c0_i32_1 = arith.constant 0 : i32
    return %c0_i32, %c0_i32_0 : i32, i32
  }
  func.func @transform_9(%arg0: i32) -> (i32, i32) {
    %c0_i32 = arith.constant 0 : i32
    %c0_i32_0 = arith.constant 0 : i32
    %c0_i32_1 = arith.constant 0 : i32
    return %c0_i32, %c0_i32_0 : i32, i32
  }
  func.func @transform_10(%arg0: i32) -> (i32, i32) {
    %c0_i32 = arith.constant 0 : i32
    %c0_i32_0 = arith.constant 0 : i32
    %c0_i32_1 = arith.constant 0 : i32
    return %c0_i32, %c0_i32_0 : i32, i32
  }
  func.func @transform_11(%arg0: i32) -> (i32, i32) {
    %c0_i32 = arith.constant 0 : i32
    %c0_i32_0 = arith.constant 0 : i32
    %c0_i32_1 = arith.constant 0 : i32
    return %c0_i32, %c0_i32_0 : i32, i32
  }
  func.func @transform_12(%arg0: i32) -> (i32, i32) {
    %c0_i32 = arith.constant 0 : i32
    %c0_i32_0 = arith.constant 0 : i32
    %c0_i32_1 = arith.constant 0 : i32
    return %c0_i32, %c0_i32_0 : i32, i32
  }
  func.func @transform_13(%arg0: i32) -> (i32, i32) {
    %c0_i32 = arith.constant 0 : i32
    %c0_i32_0 = arith.constant 0 : i32
    %c0_i32_1 = arith.constant 0 : i32
    return %c0_i32, %c0_i32_0 : i32, i32
  }
  func.func @transform_14(%arg0: i32) -> (i32, i32, i32) {
    %c0_i32 = arith.constant 0 : i32
    %c0_i32_0 = arith.constant 0 : i32
    %c0_i32_1 = arith.constant 0 : i32
    return %arg0, %c0_i32, %c0_i32_0 : i32, i32, i32
  }
  func.func @transform_15(%arg0: i32) -> (i32, i32, i32) {
    %c0_i32 = arith.constant 0 : i32
    %c0_i32_0 = arith.constant 0 : i32
    %c0_i32_1 = arith.constant 0 : i32
    return %arg0, %c0_i32, %c0_i32_0 : i32, i32, i32
  }
}

</mosaic_0001>

<llo_original>
// kernel: tpu_custom_call.1
$region0: #{tpu_custom_call.1}
  #allocation0 [shape = 'u32[]', space=smem, size = 0x4, offset = 0x4, fixed_abs, tag = 'smem constant byte address 0x4 - core index']
  #allocation1 [shape = 'u32[72,128]{1,0:T(1,128)}', space=vmem, size = 0x9000, scoped, tag = 'internal scratch']
  %s0 = inlined_call_operand.vmem [shape: f32[2,8,32], index: 0, kind: input, shape index: {}]
  %s1 = inlined_call_operand.hbm [shape: f32[2,1,8], index: 1, kind: input, shape index: {}]
  %s2 = inlined_call_operand.vmem [shape: f32[1,32], index: 2, kind: input, shape index: {}]
  %s3 = inlined_call_operand.vmem [shape: f32[1,32], index: 3, kind: input, shape index: {}]
  %s4 = inlined_call_operand.vmem [shape: bf16[32,32], index: 4, kind: input, shape index: {}]
  %s5 = inlined_call_operand.vmem [shape: bf16[32,32], index: 5, kind: input, shape index: {}]
  %s6 = inlined_call_operand.hbm [shape: bf16[32,32], index: 6, kind: input, shape index: {}]
  %s7 = inlined_call_operand.hbm [shape: bf16[32,32], index: 7, kind: input, shape index: {}]
  %s8 = inlined_call_operand.vmem [shape: f32[1,32], index: 8, kind: input, shape index: {}]
  %s9 = inlined_call_operand.vmem [shape: f32[1,32], index: 9, kind: input, shape index: {}]
  %s10 = inlined_call_operand.hbm [shape: bf16[32,64], index: 10, kind: input, shape index: {}]
  %s11 = inlined_call_operand.vmem [shape: f32[1,64], index: 11, kind: input, shape index: {}]
  %s12 = inlined_call_operand.vmem [shape: bf16[64,32], index: 12, kind: input, shape index: {}]
  %s13 = inlined_call_operand.vmem [shape: f32[1,32], index: 13, kind: input, shape index: {}]
  %s14 = inlined_call_operand.hbm [shape: f32[2,8,32], index: 14, kind: output, shape index: {0}]
  %s15 = inlined_call_operand.hbm [shape: f32[2,8,32], index: 15, kind: output, shape index: {1}]
  %16 = xla_tuple %s14, %s15
  %s17 = sld [smem:[#allocation0]]
  $region90: #{tpu_custom_call.1} parent=0
    _
  %s19 = ssub.s32 1, %s17
  %s20 = scalar_select 0, %s19, %s17
  $region1: #{tpu_custom_call.1} parent=0
    #allocation2 [shape = 'u8[1024]{0}', space=vmem, size = 0x400, scoped, tag = 'input window, operand 1, single buffered']
    #allocation3 [shape = 's32[1]{0}', space=sflag, size = 0x4, scoped, tag = 'scoped memory for tpu_custom_call.1']
    #allocation4 [shape = 's32[1]{0}', space=sflag, size = 0x4, scoped, tag = 'scoped memory for tpu_custom_call.1']
    #allocation5 [shape = 'u8[8192]{0}', space=vmem, size = 0x2000, scoped, tag = 'input window, operand 6, single buffered']
    #allocation6 [shape = 's32[1]{0}', space=sflag, size = 0x4, scoped, tag = 'scoped memory for tpu_custom_call.1']
    #allocation7 [shape = 'u8[8192]{0}', space=vmem, size = 0x2000, scoped, tag = 'input window, operand 7, single buffered']
    #allocation8 [shape = 'u8[8192]{0}', space=vmem, size = 0x2000, scoped, tag = 'input window, operand 10, single buffered']
    #allocation9 [shape = 's32[1]{0}', space=sflag, size = 0x4, scoped, tag = 'scoped memory for tpu_custom_call.1']
    #allocation10 [shape = 'u8[8192]{0}', space=vmem, size = 0x2000, scoped, tag = 'output window, operand 0, single buffered']
    #allocation11 [shape = 'u8[8192]{0}', space=vmem, size = 0x2000, scoped, tag = 'output window, operand 1, single buffered']
    #allocation12 [shape = 's32[1]{0}', space=sflag, size = 0x4, scoped, tag = 'scoped memory for tpu_custom_call.1']
    %21 = vsyncpa [#allocation3], 0
    %22 = vsyncpa [#allocation6], 0
    %23 = vsyncpa [#allocation9], 0
    %24 = vsyncpa [#allocation4], 0
    %25 = vsyncpa [#allocation12], 0
    // Predicated region
    $region2: #{tpu_custom_call.1} parent=1 // pred_check
      _
    $region3: #{tpu_custom_call.1} parent=1 // pred_check_branch
      %27 = sbr.rel (0) target = $region5
    $region4: #{tpu_custom_call.1} parent=1 // pred_region
      _
    $region5: #{tpu_custom_call.1} parent=1 // pred_fallthru
      _
    // Predicated region
    $region6: #{tpu_custom_call.1} parent=1 // pred_check
      _
    $region7: #{tpu_custom_call.1} parent=1 // pred_check_branch
      %29 = sbr.rel (0) target = $region9
    $region8: #{tpu_custom_call.1} parent=1 // pred_region
      %31 = vsyncadd [#allocation3], 0
      %s32 = sshll.u32 %s1, 4
      %s33 = int_to_ptr.hbm [resolvable:$true] %s32
      %s34 = sshll.u32 [#allocation2], 4
      %s35 = int_to_ptr.vmem [resolvable:$true] %s34
      %40 = dma.hbm_to_vmem [thread:$0]  %s33, 32, %s35, [#allocation3], 16, 16, 1
    $region9: #{tpu_custom_call.1} parent=1 // pred_fallthru
      _
    // Predicated region
    $region10: #{tpu_custom_call.1} parent=1 // pred_check
      _
    $region11: #{tpu_custom_call.1} parent=1 // pred_check_branch
      %42 = sbr.rel (0) target = $region13
    $region12: #{tpu_custom_call.1} parent=1 // pred_region
      _
    $region13: #{tpu_custom_call.1} parent=1 // pred_fallthru
      _
    // Predicated region
    $region14: #{tpu_custom_call.1} parent=1 // pred_check
      _
    $region15: #{tpu_custom_call.1} parent=1 // pred_check_branch
      %44 = sbr.rel (0) target = $region17
    $region16: #{tpu_custom_call.1} parent=1 // pred_region
      _
    $region17: #{tpu_custom_call.1} parent=1 // pred_fallthru
      _
    // Predicated region
    $region18: #{tpu_custom_call.1} parent=1 // pred_check
      _
    $region19: #{tpu_custom_call.1} parent=1 // pred_check_branch
      %46 = sbr.rel (0) target = $region21
    $region20: #{tpu_custom_call.1} parent=1 // pred_region
      _
    $region21: #{tpu_custom_call.1} parent=1 // pred_fallthru
      _
    // Predicated region
    $region22: #{tpu_custom_call.1} parent=1 // pred_check
      _
    $region23: #{tpu_custom_call.1} parent=1 // pred_check_branch
      %48 = sbr.rel (0) target = $region25
    $region24: #{tpu_custom_call.1} parent=1 // pred_region
      _
    $region25: #{tpu_custom_call.1} parent=1 // pred_fallthru
      _
    // Predicated region
    $region26: #{tpu_custom_call.1} parent=1 // pred_check
      _
    $region27: #{tpu_custom_call.1} parent=1 // pred_check_branch
      %50 = sbr.rel (0) target = $region29
    $region28: #{tpu_custom_call.1} parent=1 // pred_region
      %52 = vsyncadd [#allocation6], 0
      %s53 = sshll.u32 %s6, 4
      %s54 = int_to_ptr.hbm [resolvable:$true] %s53
      %s55 = sshll.u32 [#allocation5], 4
      %s56 = int_to_ptr.vmem [resolvable:$true] %s55
      %61 = dma.hbm_to_vmem [thread:$0]  %s54, 256, %s56, [#allocation6], 64, 64, 4
    $region29: #{tpu_custom_call.1} parent=1 // pred_fallthru
      _
    // Predicated region
    $region30: #{tpu_custom_call.1} parent=1 // pred_check
      _
    $region31: #{tpu_custom_call.1} parent=1 // pred_check_branch
      %63 = sbr.rel (0) target = $region33
    $region32: #{tpu_custom_call.1} parent=1 // pred_region
      %65 = vsyncadd [#allocation6], 0
      %s66 = sshll.u32 %s7, 4
      %s67 = int_to_ptr.hbm [resolvable:$true] %s66
      %s68 = sshll.u32 [#allocation7], 4
      %s69 = int_to_ptr.vmem [resolvable:$true] %s68
      %74 = dma.hbm_to_vmem [thread:$0]  %s67, 256, %s69, [#allocation6], 64, 64, 4
    $region33: #{tpu_custom_call.1} parent=1 // pred_fallthru
      _
    // Predicated region
    $region34: #{tpu_custom_call.1} parent=1 // pred_check
      _
    $region35: #{tpu_custom_call.1} parent=1 // pred_check_branch
      %76 = sbr.rel (0) target = $region37
    $region36: #{tpu_custom_call.1} parent=1 // pred_region
      _
    $region37: #{tpu_custom_call.1} parent=1 // pred_fallthru
      _
    // Predicated region
    $region38: #{tpu_custom_call.1} parent=1 // pred_check
      _
    $region39: #{tpu_custom_call.1} parent=1 // pred_check_branch
      %78 = sbr.rel (0) target = $region41
    $region40: #{tpu_custom_call.1} parent=1 // pred_region
      _
    $region41: #{tpu_custom_call.1} parent=1 // pred_fallthru
      _
    // Predicated region
    $region42: #{tpu_custom_call.1} parent=1 // pred_check
      _
    $region43: #{tpu_custom_call.1} parent=1 // pred_check_branch
      %80 = sbr.rel (0) target = $region45
    $region44: #{tpu_custom_call.1} parent=1 // pred_region
      %82 = vsyncadd [#allocation9], 0
      %s83 = sshll.u32 %s10, 4
      %s84 = int_to_ptr.hbm [resolvable:$true] %s83
      %s85 = sshll.u32 [#allocation8], 4
      %s86 = int_to_ptr.vmem [resolvable:$true] %s85
      %91 = dma.hbm_to_vmem [thread:$0]  %s84, 256, %s86, [#allocation9], 64, 64, 4
    $region45: #{tpu_custom_call.1} parent=1 // pred_fallthru
      _
    // Predicated region
    $region46: #{tpu_custom_call.1} parent=1 // pred_check
      _
    $region47: #{tpu_custom_call.1} parent=1 // pred_check_branch
      %93 = sbr.rel (0) target = $region49
    $region48: #{tpu_custom_call.1} parent=1 // pred_region
      _
    $region49: #{tpu_custom_call.1} parent=1 // pred_fallthru
      _
    // Predicated region
    $region50: #{tpu_custom_call.1} parent=1 // pred_check
      _
    $region51: #{tpu_custom_call.1} parent=1 // pred_check_branch
      %95 = sbr.rel (0) target = $region53
    $region52: #{tpu_custom_call.1} parent=1 // pred_region
      _
    $region53: #{tpu_custom_call.1} parent=1 // pred_fallthru
      _
    // Predicated region
    $region54: #{tpu_custom_call.1} parent=1 // pred_check
      _
    $region55: #{tpu_custom_call.1} parent=1 // pred_check_branch
      %97 = sbr.rel (0) target = $region57
    $region56: #{tpu_custom_call.1} parent=1 // pred_region
      _
    $region57: #{tpu_custom_call.1} parent=1 // pred_fallthru
      _
    // Predicated region
    $region58: #{tpu_custom_call.1} parent=1 // pred_check
      _
    $region59: #{tpu_custom_call.1} parent=1 // pred_check_branch
      %99 = sbr.rel (0) target = $region61
    $region60: #{tpu_custom_call.1} parent=1 // pred_region
      %101 = dma.done [#allocation3], 32
    $region61: #{tpu_custom_call.1} parent=1 // pred_fallthru
      _
    // Predicated region
    $region62: #{tpu_custom_call.1} parent=1 // pred_check
      _
    $region63: #{tpu_custom_call.1} parent=1 // pred_check_branch
      %103 = sbr.rel (0) target = $region65
    $region64: #{tpu_custom_call.1} parent=1 // pred_region
      %105 = dma.done [#allocation6], 256
    $region65: #{tpu_custom_call.1} parent=1 // pred_fallthru
      _
    // Predicated region
    $region66: #{tpu_custom_call.1} parent=1 // pred_check
      _
    $region67: #{tpu_custom_call.1} parent=1 // pred_check_branch
      %107 = sbr.rel (0) target = $region69
    $region68: #{tpu_custom_call.1} parent=1 // pred_region
      %109 = dma.done [#allocation6], 256
    $region69: #{tpu_custom_call.1} parent=1 // pred_fallthru
      _
    // Predicated region
    $region70: #{tpu_custom_call.1} parent=1 // pred_check
      _
    $region71: #{tpu_custom_call.1} parent=1 // pred_check_branch
      %111 = sbr.rel (0) target = $region73
    $region72: #{tpu_custom_call.1} parent=1 // pred_region
      %113 = dma.done [#allocation9], 256
    $region73: #{tpu_custom_call.1} parent=1 // pred_fallthru
      _
    %v115 = vld [vmem:[%s0] sm:$0xff]
    %v116 = vld [vmem:[%s0 + $0x8] sm:$0xff]
    %v117 = vld [vmem:[%s2] sm:$0x1]
    %v118 = vld [vmem:[%s3] sm:$0x1]
    %vm119 = vcmask 261120
    %v120 = vsel %vm119, %v115, 0.0
    %121 = vadd.xlane.f32.xlu0 %v120
    %v122 = vpop.xlane.xlu0 %121
    %v123 = vsel %vm119, %v116, 0.0
    %124 = vadd.xlane.f32.xlu0 %v123
    %v125 = vpop.xlane.xlu0 %124
    %v126 = vrcp.pop 32.0
    %v127 = vmul.f32 32.0, %v126
    %v128 = vsub.f32 1.0, %v127
    %v129 = vmul.f32 %v126, %v128
    %v130 = vadd.f32 %v126, %v129
    %vm131 = vweird.f32 %v126
    %v132 = vsel %vm131, %v126, %v130
    %v133 = vmul.f32 %v122, %v132
    %v134 = vmul.f32 %v125, %v132
    %v135 = vsub.f32 %v115, %v133
    %v136 = vsub.f32 %v116, %v134
    %v137 = vmul.f32 %v135, %v135
    %v138 = vmul.f32 %v136, %v136
    %v139 = vsel %vm119, %v137, 0.0
    %140 = vadd.xlane.f32.xlu0 %v139
    %v141 = vpop.xlane.xlu0 %140
    %v142 = vsel %vm119, %v138, 0.0
    %143 = vadd.xlane.f32.xlu0 %v142
    %v144 = vpop.xlane.xlu0 %143
    %v145 = vmul.f32 %v141, %v132
    %v146 = vmul.f32 %v144, %v132
    %v147 = vadd.f32 %v145, 1e-05
    %v148 = vadd.f32 %v146, 1e-05
    %v149 = vrsqrt.pop %v147
    %v150 = vmul.f32 %v149, %v147
    %v151 = vmul.f32 %v150, %v149
    %v152 = vmul.f32 0.5, %v151
    %v153 = vsub.f32 1.5, %v152
    %v154 = vmul.f32 %v149, %v153
    %vm155 = vweird.f32 %v147
    %vm156 = vweird.f32 %v149
    %vm157 = vmor %vm155, %vm156
    %v158 = vsel %vm157, %v149, %v154
    %v159 = vrsqrt.pop %v148
    %v160 = vmul.f32 %v159, %v148
    %v161 = vmul.f32 %v160, %v159
    %v162 = vmul.f32 0.5, %v161
    %v163 = vsub.f32 1.5, %v162
    %v164 = vmul.f32 %v159, %v163
    %vm165 = vweird.f32 %v148
    %vm166 = vweird.f32 %v159
    %vm167 = vmor %vm165, %vm166
    %v168 = vsel %vm167, %v159, %v164
    %v169 = vmul.f32 %v135, %v158
    %v170 = vmul.f32 %v136, %v168
    %v172 = vperm.slane %v117, 0
    %v174 = vmul.f32 %v169, %v172
    %v175 = vmul.f32 %v170, %v172
    %v177 = vperm.slane %v118, 0
    %v179 = vadd.f32 %v174, %v177
    %v180 = vadd.f32 %v175, %v177
    %181 = vst.msk [vmem:[#allocation11] sm:$0xff] %vm119, %v179
    %182 = vst.msk [vmem:[#allocation11 + $0x8] sm:$0xff] %vm119, %v180
    %v183 = vpack.c.bf16 %v180, %v179
    %v184 = vld [vmem:[%s4] sm:$0xf]
    %v185 = vld [vmem:[%s4 + $0x4] sm:$0xf]
    %v186 = vld [vmem:[%s4 + $0x8] sm:$0xf]
    %v187 = vld [vmem:[%s4 + $0xc] sm:$0xf]
    %v192 = vunpack.c.l.b16 %v184
    %v193 = vunpack.c.l.b16 %v185
    %v194 = vunpack.c.l.b16 %v186
    %v195 = vunpack.c.l.b16 %v187
    %v196 = vpack.c.b16 %v193, %v192
    %v197 = vpack.c.b16 %v195, %v194
    %v201 = vsel %vm119, %v183, 0
    %203 = vmatpush.bf16.msra.mxu0 0
    %204 = vmatpush.bf16.msra.mxu0 0
    %205 = vmatpush.bf16.msra.mxu0 0
    %206 = vmatpush.bf16.msra.mxu0 0
    %207 = vmatpush.bf16.msra.mxu0 0
    %208 = vmatpush.bf16.msra.mxu0 0
    %209 = vmatpush.bf16.msra.mxu0 %v197
    %210 = vmatpush.bf16.msra.mxu0 %v196
    %211 = vmatmul.bf16.gmra.mxu0 %v201
    %v212 = vpop.f32.mrf.mxu0
    %v213 = vadd.f32 0.0, %v212
    %v214 = vpop.f32.mrf.mxu0
    %v215 = vadd.f32 0.0, %v214
    %216 = vdwg.mxu0
    %v217 = vld [vmem:[%s5] sm:$0xf]
    %v218 = vld [vmem:[%s5 + $0x4] sm:$0xf]
    %v219 = vld [vmem:[%s5 + $0x8] sm:$0xf]
    %v220 = vld [vmem:[%s5 + $0xc] sm:$0xf]
    %v225 = vunpack.c.l.b16 %v217
    %v226 = vunpack.c.l.b16 %v218
    %v227 = vunpack.c.l.b16 %v219
    %v228 = vunpack.c.l.b16 %v220
    %v229 = vpack.c.b16 %v226, %v225
    %v230 = vpack.c.b16 %v228, %v227
    %233 = vmatpush.bf16.msra.mxu0 0
    %234 = vmatpush.bf16.msra.mxu0 0
    %235 = vmatpush.bf16.msra.mxu0 0
    %236 = vmatpush.bf16.msra.mxu0 0
    %237 = vmatpush.bf16.msra.mxu0 0
    %238 = vmatpush.bf16.msra.mxu0 0
    %239 = vmatpush.bf16.msra.mxu0 %v230
    %240 = vmatpush.bf16.msra.mxu0 %v229
    %241 = vmatmul.bf16.gmra.mxu0 %v201
    %v242 = vpop.f32.mrf.mxu0
    %v243 = vadd.f32 0.0, %v242
    %v244 = vpop.f32.mrf.mxu0
    %v245 = vadd.f32 0.0, %v244
    %246 = vdwg.mxu0
    %v247 = vld [vmem:[#allocation5] sm:$0xf]
    %v248 = vld [vmem:[#allocation5 + $0x4] sm:$0xf]
    %v249 = vld [vmem:[#allocation5 + $0x8] sm:$0xf]
    %v250 = vld [vmem:[#allocation5 + $0xc] sm:$0xf]
    %v255 = vunpack.c.l.b16 %v247
    %v256 = vunpack.c.l.b16 %v248
    %v257 = vunpack.c.l.b16 %v249
    %v258 = vunpack.c.l.b16 %v250
    %v259 = vpack.c.b16 %v256, %v255
    %v260 = vpack.c.b16 %v258, %v257
    %263 = vmatpush.bf16.msra.mxu0 0
    %264 = vmatpush.bf16.msra.mxu0 0
    %265 = vmatpush.bf16.msra.mxu0 0
    %266 = vmatpush.bf16.msra.mxu0 0
    %267 = vmatpush.bf16.msra.mxu0 0
    %268 = vmatpush.bf16.msra.mxu0 0
    %269 = vmatpush.bf16.msra.mxu0 %v260
    %270 = vmatpush.bf16.msra.mxu0 %v259
    %271 = vmatmul.bf16.gmra.mxu0 %v201
    %v272 = vpop.f32.mrf.mxu0
    %v273 = vadd.f32 0.0, %v272
    %v274 = vpop.f32.mrf.mxu0
    %v275 = vadd.f32 0.0, %v274
    %276 = vdwg.mxu0
    %279 = vrot.lane.b32.xlu0 %v213, 120
    %v280 = vpop.permute.xlu0 %279
    %281 = vrot.lane.b32.xlu0 %v215, 120
    %v282 = vpop.permute.xlu0 %281
    %285 = vrot.lane.b32.xlu0 %v213, 112
    %v286 = vpop.permute.xlu0 %285
    %287 = vrot.lane.b32.xlu0 %v215, 112
    %v288 = vpop.permute.xlu0 %287
    %291 = vrot.lane.b32.xlu0 %v213, 104
    %v292 = vpop.permute.xlu0 %291
    %293 = vrot.lane.b32.xlu0 %v215, 104
    %v294 = vpop.permute.xlu0 %293
    %v297 = vrot.slane %v286, 4
    %vm298 = vcmask 1047556
    %v299 = vsel %vm298, %v297, %v213
    %v300 = vrot.slane %v213, 4
    %v301 = vsel %vm298, %v286, %v300
    %v303 = vunpack.c.l.s4 1983009808
    %v304 = vunpack.c.0.s8 %v303
    %v305 = vperm.slane %v299, %v304
    %v307 = vunpack.c.l.s4 1983009808
    %v308 = vunpack.c.0.s8 %v307
    %v309 = vperm.slane %v301, %v308
    %v310 = vrot.slane %v292, 4
    %v311 = vsel %vm298, %v310, %v280
    %v312 = vrot.slane %v280, 4
    %v313 = vsel %vm298, %v292, %v312
    %v315 = vunpack.c.l.s4 1983009808
    %v316 = vunpack.c.0.s8 %v315
    %v317 = vperm.slane %v311, %v316
    %v319 = vunpack.c.l.s4 1983009808
    %v320 = vunpack.c.0.s8 %v319
    %v321 = vperm.slane %v313, %v320
    %v322 = vrot.slane %v317, 4
    %v323 = vsel %vm298, %v322, %v305
    %v324 = vrot.slane %v305, 4
    %v325 = vsel %vm298, %v317, %v324
    %v327 = vunpack.c.l.s4 1934713408
    %v328 = vunpack.c.0.s8 %v327
    %v329 = vperm.slane %v323, %v328
    %v331 = vunpack.c.l.s4 1934713408
    %v332 = vunpack.c.0.s8 %v331
    %v333 = vperm.slane %v325, %v332
    %v334 = vrot.slane %v321, 4
    %v335 = vsel %vm298, %v334, %v309
    %v336 = vrot.slane %v309, 4
    %v337 = vsel %vm298, %v321, %v336
    %v339 = vunpack.c.l.s4 1934713408
    %v340 = vunpack.c.0.s8 %v339
    %v341 = vperm.slane %v335, %v340
    %v343 = vunpack.c.l.s4 1934713408
    %v344 = vunpack.c.0.s8 %v343
    %v345 = vperm.slane %v337, %v344
    %v346 = vrot.slane %v329, 4
    %v347 = vsel %vm298, 0.0, %v346
    %v348 = vrot.slane %v333, 4
    %v349 = vsel %vm298, 0.0, %v348
    %v350 = vrot.slane %v341, 4
    %v351 = vsel %vm298, 0.0, %v350
    %v352 = vrot.slane %v345, 4
    %v353 = vsel %vm298, 0.0, %v352
    %v354 = vrot.slane %v288, 4
    %v355 = vsel %vm298, %v354, %v215
    %v356 = vrot.slane %v215, 4
    %v357 = vsel %vm298, %v288, %v356
    %v359 = vunpack.c.l.s4 1983009808
    %v360 = vunpack.c.0.s8 %v359
    %v361 = vperm.slane %v355, %v360
    %v363 = vunpack.c.l.s4 1983009808
    %v364 = vunpack.c.0.s8 %v363
    %v365 = vperm.slane %v357, %v364
    %v366 = vrot.slane %v294, 4
    %v367 = vsel %vm298, %v366, %v282
    %v368 = vrot.slane %v282, 4
    %v369 = vsel %vm298, %v294, %v368
    %v371 = vunpack.c.l.s4 1983009808
    %v372 = vunpack.c.0.s8 %v371
    %v373 = vperm.slane %v367, %v372
    %v375 = vunpack.c.l.s4 1983009808
    %v376 = vunpack.c.0.s8 %v375
    %v377 = vperm.slane %v369, %v376
    %v378 = vrot.slane %v373, 4
    %v379 = vsel %vm298, %v378, %v361
    %v380 = vrot.slane %v361, 4
    %v381 = vsel %vm298, %v373, %v380
    %v383 = vunpack.c.l.s4 1934713408
    %v384 = vunpack.c.0.s8 %v383
    %v385 = vperm.slane %v379, %v384
    %v387 = vunpack.c.l.s4 1934713408
    %v388 = vunpack.c.0.s8 %v387
    %v389 = vperm.slane %v381, %v388
    %v390 = vrot.slane %v377, 4
    %v391 = vsel %vm298, %v390, %v365
    %v392 = vrot.slane %v365, 4
    %v393 = vsel %vm298, %v377, %v392
    %v395 = vunpack.c.l.s4 1934713408
    %v396 = vunpack.c.0.s8 %v395
    %v397 = vperm.slane %v391, %v396
    %v399 = vunpack.c.l.s4 1934713408
    %v400 = vunpack.c.0.s8 %v399
    %v401 = vperm.slane %v393, %v400
    %v402 = vrot.slane %v385, 4
    %v403 = vsel %vm298, 0.0, %v402
    %v404 = vrot.slane %v389, 4
    %v405 = vsel %vm298, 0.0, %v404
    %v406 = vrot.slane %v397, 4
    %v407 = vsel %vm298, 0.0, %v406
    %v408 = vrot.slane %v401, 4
    %v409 = vsel %vm298, 0.0, %v408
    %v410 = vsel %vm298, %v348, %v329
    %v412 = vunpack.c.l.s4 1983009808
    %v413 = vunpack.c.0.s8 %v412
    %v414 = vperm.slane %v410, %v413
    %v415 = vrot.slane %v349, 4
    %v416 = vsel %vm298, %v415, %v347
    %v418 = vunpack.c.l.s4 1983009808
    %v419 = vunpack.c.0.s8 %v418
    %v420 = vperm.slane %v416, %v419
    %v421 = vsel %vm298, %v352, %v341
    %v423 = vunpack.c.l.s4 1983009808
    %v424 = vunpack.c.0.s8 %v423
    %v425 = vperm.slane %v421, %v424
    %v426 = vrot.slane %v353, 4
    %v427 = vsel %vm298, %v426, %v351
    %v429 = vunpack.c.l.s4 1983009808
    %v430 = vunpack.c.0.s8 %v429
    %v431 = vperm.slane %v427, %v430
    %v432 = vrot.slane %v420, 4
    %v433 = vsel %vm298, %v432, %v414
    %v434 = vrot.slane %v414, 4
    %v435 = vsel %vm298, %v420, %v434
    %v437 = vunpack.c.l.s4 1934713408
    %v438 = vunpack.c.0.s8 %v437
    %v439 = vperm.slane %v433, %v438
    %v441 = vunpack.c.l.s4 1934713408
    %v442 = vunpack.c.0.s8 %v441
    %v443 = vperm.slane %v435, %v442
    %v444 = vrot.slane %v431, 4
    %v445 = vsel %vm298, %v444, %v425
    %v446 = vrot.slane %v425, 4
    %v447 = vsel %vm298, %v431, %v446
    %v449 = vunpack.c.l.s4 1934713408
    %v450 = vunpack.c.0.s8 %v449
    %v451 = vperm.slane %v445, %v450
    %v453 = vunpack.c.l.s4 1934713408
    %v454 = vunpack.c.0.s8 %v453
    %v455 = vperm.slane %v447, %v454
    %v456 = vrot.slane %v451, 4
    %v457 = vsel %vm298, %v456, %v439
    %v458 = vrot.slane %v439, 4
    %v459 = vsel %vm298, %v451, %v458
    %v460 = vrot.slane %v455, 4
    %v461 = vsel %vm298, %v460, %v443
    %v462 = vrot.slane %v443, 4
    %v463 = vsel %vm298, %v455, %v462
    %v464 = vsel %vm298, %v404, %v385
    %v466 = vunpack.c.l.s4 1983009808
    %v467 = vunpack.c.0.s8 %v466
    %v468 = vperm.slane %v464, %v467
    %v469 = vrot.slane %v405, 4
    %v470 = vsel %vm298, %v469, %v403
    %v472 = vunpack.c.l.s4 1983009808
    %v473 = vunpack.c.0.s8 %v472
    %v474 = vperm.slane %v470, %v473
    %v475 = vsel %vm298, %v408, %v397
    %v477 = vunpack.c.l.s4 1983009808
    %v478 = vunpack.c.0.s8 %v477
    %v479 = vperm.slane %v475, %v478
    %v480 = vrot.slane %v409, 4
    %v481 = vsel %vm298, %v480, %v407
    %v483 = vunpack.c.l.s4 1983009808
    %v484 = vunpack.c.0.s8 %v483
    %v485 = vperm.slane %v481, %v484
    %v486 = vrot.slane %v474, 4
    %v487 = vsel %vm298, %v486, %v468
    %v488 = vrot.slane %v468, 4
    %v489 = vsel %vm298, %v474, %v488
    %v491 = vunpack.c.l.s4 1934713408
    %v492 = vunpack.c.0.s8 %v491
    %v493 = vperm.slane %v487, %v492
    %v495 = vunpack.c.l.s4 1934713408
    %v496 = vunpack.c.0.s8 %v495
    %v497 = vperm.slane %v489, %v496
    %v498 = vrot.slane %v485, 4
    %v499 = vsel %vm298, %v498, %v479
    %v500 = vrot.slane %v479, 4
    %v501 = vsel %vm298, %v485, %v500
    %v503 = vunpack.c.l.s4 1934713408
    %v504 = vunpack.c.0.s8 %v503
    %v505 = vperm.slane %v499, %v504
    %v507 = vunpack.c.l.s4 1934713408
    %v508 = vunpack.c.0.s8 %v507
    %v509 = vperm.slane %v501, %v508
    %v510 = vrot.slane %v505, 4
    %v511 = vsel %vm298, %v510, %v493
    %v512 = vrot.slane %v493, 4
    %v513 = vsel %vm298, %v505, %v512
    %v514 = vrot.slane %v509, 4
    %v515 = vsel %vm298, %v514, %v497
    %v516 = vrot.slane %v497, 4
    %v517 = vsel %vm298, %v509, %v516
    %v518 = vpack.c.bf16 %v457, %v457
    %v519 = vpack.c.bf16 %v459, %v459
    %v520 = vpack.c.bf16 %v461, %v461
    %v521 = vpack.c.bf16 %v463, %v463
    %v522 = vpack.c.bf16 %v511, %v511
    %v523 = vpack.c.bf16 %v513, %v513
    %v524 = vpack.c.bf16 %v515, %v515
    %v525 = vpack.c.bf16 %v517, %v517
    %528 = vrot.lane.b32.xlu0 %v243, 120
    %v529 = vpop.permute.xlu0 %528
    %530 = vrot.lane.b32.xlu0 %v245, 120
    %v531 = vpop.permute.xlu0 %530
    %534 = vrot.lane.b32.xlu0 %v243, 112
    %v535 = vpop.permute.xlu0 %534
    %536 = vrot.lane.b32.xlu0 %v245, 112
    %v537 = vpop.permute.xlu0 %536
    %540 = vrot.lane.b32.xlu0 %v243, 104
    %v541 = vpop.permute.xlu0 %540
    %542 = vrot.lane.b32.xlu0 %v245, 104
    %v543 = vpop.permute.xlu0 %542
    %v546 = vrot.slane %v535, 4
    %v547 = vsel %vm298, %v546, %v243
    %v548 = vrot.slane %v243, 4
    %v549 = vsel %vm298, %v535, %v548
    %v551 = vunpack.c.l.s4 1983009808
    %v552 = vunpack.c.0.s8 %v551
    %v553 = vperm.slane %v547, %v552
    %v555 = vunpack.c.l.s4 1983009808
    %v556 = vunpack.c.0.s8 %v555
    %v557 = vperm.slane %v549, %v556
    %v558 = vrot.slane %v541, 4
    %v559 = vsel %vm298, %v558, %v529
    %v560 = vrot.slane %v529, 4
    %v561 = vsel %vm298, %v541, %v560
    %v563 = vunpack.c.l.s4 1983009808
    %v564 = vunpack.c.0.s8 %v563
    %v565 = vperm.slane %v559, %v564
    %v567 = vunpack.c.l.s4 1983009808
    %v568 = vunpack.c.0.s8 %v567
    %v569 = vperm.slane %v561, %v568
    %v570 = vrot.slane %v565, 4
    %v571 = vsel %vm298, %v570, %v553
    %v572 = vrot.slane %v553, 4
    %v573 = vsel %vm298, %v565, %v572
    %v575 = vunpack.c.l.s4 1934713408
    %v576 = vunpack.c.0.s8 %v575
    %v577 = vperm.slane %v571, %v576
    %v579 = vunpack.c.l.s4 1934713408
    %v580 = vunpack.c.0.s8 %v579
    %v581 = vperm.slane %v573, %v580
    %v582 = vrot.slane %v569, 4
    %v583 = vsel %vm298, %v582, %v557
    %v584 = vrot.slane %v557, 4
    %v585 = vsel %vm298, %v569, %v584
    %v587 = vunpack.c.l.s4 1934713408
    %v588 = vunpack.c.0.s8 %v587
    %v589 = vperm.slane %v583, %v588
    %v591 = vunpack.c.l.s4 1934713408
    %v592 = vunpack.c.0.s8 %v591
    %v593 = vperm.slane %v585, %v592
    %v594 = vrot.slane %v577, 4
    %v595 = vsel %vm298, 0.0, %v594
    %v596 = vrot.slane %v581, 4
    %v597 = vsel %vm298, 0.0, %v596
    %v598 = vrot.slane %v589, 4
    %v599 = vsel %vm298, 0.0, %v598
    %v600 = vrot.slane %v593, 4
    %v601 = vsel %vm298, 0.0, %v600
    %v602 = vrot.slane %v537, 4
    %v603 = vsel %vm298, %v602, %v245
    %v604 = vrot.slane %v245, 4
    %v605 = vsel %vm298, %v537, %v604
    %v607 = vunpack.c.l.s4 1983009808
    %v608 = vunpack.c.0.s8 %v607
    %v609 = vperm.slane %v603, %v608
    %v611 = vunpack.c.l.s4 1983009808
    %v612 = vunpack.c.0.s8 %v611
    %v613 = vperm.slane %v605, %v612
    %v614 = vrot.slane %v543, 4
    %v615 = vsel %vm298, %v614, %v531
    %v616 = vrot.slane %v531, 4
    %v617 = vsel %vm298, %v543, %v616
    %v619 = vunpack.c.l.s4 1983009808
    %v620 = vunpack.c.0.s8 %v619
    %v621 = vperm.slane %v615, %v620
    %v623 = vunpack.c.l.s4 1983009808
    %v624 = vunpack.c.0.s8 %v623
    %v625 = vperm.slane %v617, %v624
    %v626 = vrot.slane %v621, 4
    %v627 = vsel %vm298, %v626, %v609
    %v628 = vrot.slane %v609, 4
    %v629 = vsel %vm298, %v621, %v628
    %v631 = vunpack.c.l.s4 1934713408
    %v632 = vunpack.c.0.s8 %v631
    %v633 = vperm.slane %v627, %v632
    %v635 = vunpack.c.l.s4 1934713408
    %v636 = vunpack.c.0.s8 %v635
    %v637 = vperm.slane %v629, %v636
    %v638 = vrot.slane %v625, 4
    %v639 = vsel %vm298, %v638, %v613
    %v640 = vrot.slane %v613, 4
    %v641 = vsel %vm298, %v625, %v640
    %v643 = vunpack.c.l.s4 1934713408
    %v644 = vunpack.c.0.s8 %v643
    %v645 = vperm.slane %v639, %v644
    %v647 = vunpack.c.l.s4 1934713408
    %v648 = vunpack.c.0.s8 %v647
    %v649 = vperm.slane %v641, %v648
    %v650 = vrot.slane %v633, 4
    %v651 = vsel %vm298, 0.0, %v650
    %v652 = vrot.slane %v637, 4
    %v653 = vsel %vm298, 0.0, %v652
    %v654 = vrot.slane %v645, 4
    %v655 = vsel %vm298, 0.0, %v654
    %v656 = vrot.slane %v649, 4
    %v657 = vsel %vm298, 0.0, %v656
    %v658 = vsel %vm298, %v596, %v577
    %v660 = vunpack.c.l.s4 1983009808
    %v661 = vunpack.c.0.s8 %v660
    %v662 = vperm.slane %v658, %v661
    %v663 = vrot.slane %v597, 4
    %v664 = vsel %vm298, %v663, %v595
    %v666 = vunpack.c.l.s4 1983009808
    %v667 = vunpack.c.0.s8 %v666
    %v668 = vperm.slane %v664, %v667
    %v669 = vsel %vm298, %v600, %v589
    %v671 = vunpack.c.l.s4 1983009808
    %v672 = vunpack.c.0.s8 %v671
    %v673 = vperm.slane %v669, %v672
    %v674 = vrot.slane %v601, 4
    %v675 = vsel %vm298, %v674, %v599
    %v677 = vunpack.c.l.s4 1983009808
    %v678 = vunpack.c.0.s8 %v677
    %v679 = vperm.slane %v675, %v678
    %v680 = vrot.slane %v668, 4
    %v681 = vsel %vm298, %v680, %v662
    %v682 = vrot.slane %v662, 4
    %v683 = vsel %vm298, %v668, %v682
    %v685 = vunpack.c.l.s4 1934713408
    %v686 = vunpack.c.0.s8 %v685
    %v687 = vperm.slane %v681, %v686
    %v689 = vunpack.c.l.s4 1934713408
    %v690 = vunpack.c.0.s8 %v689
    %v691 = vperm.slane %v683, %v690
    %v692 = vrot.slane %v679, 4
    %v693 = vsel %vm298, %v692, %v673
    %v694 = vrot.slane %v673, 4
    %v695 = vsel %vm298, %v679, %v694
    %v697 = vunpack.c.l.s4 1934713408
    %v698 = vunpack.c.0.s8 %v697
    %v699 = vperm.slane %v693, %v698
    %v701 = vunpack.c.l.s4 1934713408
    %v702 = vunpack.c.0.s8 %v701
    %v703 = vperm.slane %v695, %v702
    %v704 = vrot.slane %v699, 4
    %v705 = vsel %vm298, %v704, %v687
    %v706 = vrot.slane %v687, 4
    %v707 = vsel %vm298, %v699, %v706
    %v708 = vrot.slane %v703, 4
    %v709 = vsel %vm298, %v708, %v691
    %v710 = vrot.slane %v691, 4
    %v711 = vsel %vm298, %v703, %v710
    %v712 = vsel %vm298, %v652, %v633
    %v714 = vunpack.c.l.s4 1983009808
    %v715 = vunpack.c.0.s8 %v714
    %v716 = vperm.slane %v712, %v715
    %v717 = vrot.slane %v653, 4
    %v718 = vsel %vm298, %v717, %v651
    %v720 = vunpack.c.l.s4 1983009808
    %v721 = vunpack.c.0.s8 %v720
    %v722 = vperm.slane %v718, %v721
    %v723 = vsel %vm298, %v656, %v645
    %v725 = vunpack.c.l.s4 1983009808
    %v726 = vunpack.c.0.s8 %v725
    %v727 = vperm.slane %v723, %v726
    %v728 = vrot.slane %v657, 4
    %v729 = vsel %vm298, %v728, %v655
    %v731 = vunpack.c.l.s4 1983009808
    %v732 = vunpack.c.0.s8 %v731
    %v733 = vperm.slane %v729, %v732
    %v734 = vrot.slane %v722, 4
    %v735 = vsel %vm298, %v734, %v716
    %v736 = vrot.slane %v716, 4
    %v737 = vsel %vm298, %v722, %v736
    %v739 = vunpack.c.l.s4 1934713408
    %v740 = vunpack.c.0.s8 %v739
    %v741 = vperm.slane %v735, %v740
    %v743 = vunpack.c.l.s4 1934713408
    %v744 = vunpack.c.0.s8 %v743
    %v745 = vperm.slane %v737, %v744
    %v746 = vrot.slane %v733, 4
    %v747 = vsel %vm298, %v746, %v727
    %v748 = vrot.slane %v727, 4
    %v749 = vsel %vm298, %v733, %v748
    %v751 = vunpack.c.l.s4 1934713408
    %v752 = vunpack.c.0.s8 %v751
    %v753 = vperm.slane %v747, %v752
    %v755 = vunpack.c.l.s4 1934713408
    %v756 = vunpack.c.0.s8 %v755
    %v757 = vperm.slane %v749, %v756
    %v758 = vrot.slane %v753, 4
    %v759 = vsel %vm298, %v758, %v741
    %v760 = vrot.slane %v741, 4
    %v761 = vsel %vm298, %v753, %v760
    %v762 = vrot.slane %v757, 4
    %v763 = vsel %vm298, %v762, %v745
    %v764 = vrot.slane %v745, 4
    %v765 = vsel %vm298, %v757, %v764
    %v766 = vpack.c.bf16 %v705, %v705
    %v767 = vpack.c.bf16 %v707, %v707
    %v768 = vpack.c.bf16 %v709, %v709
    %v769 = vpack.c.bf16 %v711, %v711
    %v770 = vpack.c.bf16 %v759, %v759
    %v771 = vpack.c.bf16 %v761, %v761
    %v772 = vpack.c.bf16 %v763, %v763
    %v773 = vpack.c.bf16 %v765, %v765
    %776 = vrot.lane.b32.xlu0 %v273, 120
    %v777 = vpop.permute.xlu0 %776
    %778 = vrot.lane.b32.xlu0 %v275, 120
    %v779 = vpop.permute.xlu0 %778
    %782 = vrot.lane.b32.xlu0 %v273, 112
    %v783 = vpop.permute.xlu0 %782
    %784 = vrot.lane.b32.xlu0 %v275, 112
    %v785 = vpop.permute.xlu0 %784
    %788 = vrot.lane.b32.xlu0 %v273, 104
    %v789 = vpop.permute.xlu0 %788
    %790 = vrot.lane.b32.xlu0 %v275, 104
    %v791 = vpop.permute.xlu0 %790
    %v794 = vrot.slane %v783, 4
    %v795 = vsel %vm298, %v794, %v273
    %v796 = vrot.slane %v273, 4
    %v797 = vsel %vm298, %v783, %v796
    %v799 = vunpack.c.l.s4 1983009808
    %v800 = vunpack.c.0.s8 %v799
    %v801 = vperm.slane %v795, %v800
    %v803 = vunpack.c.l.s4 1983009808
    %v804 = vunpack.c.0.s8 %v803
    %v805 = vperm.slane %v797, %v804
    %v806 = vrot.slane %v789, 4
    %v807 = vsel %vm298, %v806, %v777
    %v808 = vrot.slane %v777, 4
    %v809 = vsel %vm298, %v789, %v808
    %v811 = vunpack.c.l.s4 1983009808
    %v812 = vunpack.c.0.s8 %v811
    %v813 = vperm.slane %v807, %v812
    %v815 = vunpack.c.l.s4 1983009808
    %v816 = vunpack.c.0.s8 %v815
    %v817 = vperm.slane %v809, %v816
    %v818 = vrot.slane %v813, 4
    %v819 = vsel %vm298, %v818, %v801
    %v820 = vrot.slane %v801, 4
    %v821 = vsel %vm298, %v813, %v820
    %v823 = vunpack.c.l.s4 1934713408
    %v824 = vunpack.c.0.s8 %v823
    %v825 = vperm.slane %v819, %v824
    %v827 = vunpack.c.l.s4 1934713408
    %v828 = vunpack.c.0.s8 %v827
    %v829 = vperm.slane %v821, %v828
    %v830 = vrot.slane %v817, 4
    %v831 = vsel %vm298, %v830, %v805
    %v832 = vrot.slane %v805, 4
    %v833 = vsel %vm298, %v817, %v832
    %v835 = vunpack.c.l.s4 1934713408
    %v836 = vunpack.c.0.s8 %v835
    %v837 = vperm.slane %v831, %v836
    %v839 = vunpack.c.l.s4 1934713408
    %v840 = vunpack.c.0.s8 %v839
    %v841 = vperm.slane %v833, %v840
    %v842 = vrot.slane %v825, 4
    %v843 = vsel %vm298, 0.0, %v842
    %v844 = vrot.slane %v829, 4
    %v845 = vsel %vm298, 0.0, %v844
    %v846 = vrot.slane %v837, 4
    %v847 = vsel %vm298, 0.0, %v846
    %v848 = vrot.slane %v841, 4
    %v849 = vsel %vm298, 0.0, %v848
    %v850 = vrot.slane %v785, 4
    %v851 = vsel %vm298, %v850, %v275
    %v852 = vrot.slane %v275, 4
    %v853 = vsel %vm298, %v785, %v852
    %v855 = vunpack.c.l.s4 1983009808
    %v856 = vunpack.c.0.s8 %v855
    %v857 = vperm.slane %v851, %v856
    %v859 = vunpack.c.l.s4 1983009808
    %v860 = vunpack.c.0.s8 %v859
    %v861 = vperm.slane %v853, %v860
    %v862 = vrot.slane %v791, 4
    %v863 = vsel %vm298, %v862, %v779
    %v864 = vrot.slane %v779, 4
    %v865 = vsel %vm298, %v791, %v864
    %v867 = vunpack.c.l.s4 1983009808
    %v868 = vunpack.c.0.s8 %v867
    %v869 = vperm.slane %v863, %v868
    %v871 = vunpack.c.l.s4 1983009808
    %v872 = vunpack.c.0.s8 %v871
    %v873 = vperm.slane %v865, %v872
    %v874 = vrot.slane %v869, 4
    %v875 = vsel %vm298, %v874, %v857
    %v876 = vrot.slane %v857, 4
    %v877 = vsel %vm298, %v869, %v876
    %v879 = vunpack.c.l.s4 1934713408
    %v880 = vunpack.c.0.s8 %v879
    %v881 = vperm.slane %v875, %v880
    %v883 = vunpack.c.l.s4 1934713408
    %v884 = vunpack.c.0.s8 %v883
    %v885 = vperm.slane %v877, %v884
    %v886 = vrot.slane %v873, 4
    %v887 = vsel %vm298, %v886, %v861
    %v888 = vrot.slane %v861, 4
    %v889 = vsel %vm298, %v873, %v888
    %v891 = vunpack.c.l.s4 1934713408
    %v892 = vunpack.c.0.s8 %v891
    %v893 = vperm.slane %v887, %v892
    %v895 = vunpack.c.l.s4 1934713408
    %v896 = vunpack.c.0.s8 %v895
    %v897 = vperm.slane %v889, %v896
    %v898 = vrot.slane %v881, 4
    %v899 = vsel %vm298, 0.0, %v898
    %v900 = vrot.slane %v885, 4
    %v901 = vsel %vm298, 0.0, %v900
    %v902 = vrot.slane %v893, 4
    %v903 = vsel %vm298, 0.0, %v902
    %v904 = vrot.slane %v897, 4
    %v905 = vsel %vm298, 0.0, %v904
    %v906 = vsel %vm298, %v844, %v825
    %v908 = vunpack.c.l.s4 1983009808
    %v909 = vunpack.c.0.s8 %v908
    %v910 = vperm.slane %v906, %v909
    %v911 = vrot.slane %v845, 4
    %v912 = vsel %vm298, %v911, %v843
    %v914 = vunpack.c.l.s4 1983009808
    %v915 = vunpack.c.0.s8 %v914
    %v916 = vperm.slane %v912, %v915
    %v917 = vsel %vm298, %v848, %v837
    %v919 = vunpack.c.l.s4 1983009808
    %v920 = vunpack.c.0.s8 %v919
    %v921 = vperm.slane %v917, %v920
    %v922 = vrot.slane %v849, 4
    %v923 = vsel %vm298, %v922, %v847
    %v925 = vunpack.c.l.s4 1983009808
    %v926 = vunpack.c.0.s8 %v925
    %v927 = vperm.slane %v923, %v926
    %v928 = vrot.slane %v916, 4
    %v929 = vsel %vm298, %v928, %v910
    %v930 = vrot.slane %v910, 4
    %v931 = vsel %vm298, %v916, %v930
    %v933 = vunpack.c.l.s4 1934713408
    %v934 = vunpack.c.0.s8 %v933
    %v935 = vperm.slane %v929, %v934
    %v937 = vunpack.c.l.s4 1934713408
    %v938 = vunpack.c.0.s8 %v937
    %v939 = vperm.slane %v931, %v938
    %v940 = vrot.slane %v927, 4
    %v941 = vsel %vm298, %v940, %v921
    %v942 = vrot.slane %v921, 4
    %v943 = vsel %vm298, %v927, %v942
    %v945 = vunpack.c.l.s4 1934713408
    %v946 = vunpack.c.0.s8 %v945
    %v947 = vperm.slane %v941, %v946
    %v949 = vunpack.c.l.s4 1934713408
    %v950 = vunpack.c.0.s8 %v949
    %v951 = vperm.slane %v943, %v950
    %v952 = vrot.slane %v947, 4
    %v953 = vsel %vm298, %v952, %v935
    %v954 = vrot.slane %v935, 4
    %v955 = vsel %vm298, %v947, %v954
    %v956 = vrot.slane %v951, 4
    %v957 = vsel %vm298, %v956, %v939
    %v958 = vrot.slane %v939, 4
    %v959 = vsel %vm298, %v951, %v958
    %v960 = vsel %vm298, %v900, %v881
    %v962 = vunpack.c.l.s4 1983009808
    %v963 = vunpack.c.0.s8 %v962
    %v964 = vperm.slane %v960, %v963
    %v965 = vrot.slane %v901, 4
    %v966 = vsel %vm298, %v965, %v899
    %v968 = vunpack.c.l.s4 1983009808
    %v969 = vunpack.c.0.s8 %v968
    %v970 = vperm.slane %v966, %v969
    %v971 = vsel %vm298, %v904, %v893
    %v973 = vunpack.c.l.s4 1983009808
    %v974 = vunpack.c.0.s8 %v973
    %v975 = vperm.slane %v971, %v974
    %v976 = vrot.slane %v905, 4
    %v977 = vsel %vm298, %v976, %v903
    %v979 = vunpack.c.l.s4 1983009808
    %v980 = vunpack.c.0.s8 %v979
    %v981 = vperm.slane %v977, %v980
    %v982 = vrot.slane %v970, 4
    %v983 = vsel %vm298, %v982, %v964
    %v984 = vrot.slane %v964, 4
    %v985 = vsel %vm298, %v970, %v984
    %v987 = vunpack.c.l.s4 1934713408
    %v988 = vunpack.c.0.s8 %v987
    %v989 = vperm.slane %v983, %v988
    %v991 = vunpack.c.l.s4 1934713408
    %v992 = vunpack.c.0.s8 %v991
    %v993 = vperm.slane %v985, %v992
    %v994 = vrot.slane %v981, 4
    %v995 = vsel %vm298, %v994, %v975
    %v996 = vrot.slane %v975, 4
    %v997 = vsel %vm298, %v981, %v996
    %v999 = vunpack.c.l.s4 1934713408
    %v1000 = vunpack.c.0.s8 %v999
    %v1001 = vperm.slane %v995, %v1000
    %v1003 = vunpack.c.l.s4 1934713408
    %v1004 = vunpack.c.0.s8 %v1003
    %v1005 = vperm.slane %v997, %v1004
    %v1006 = vrot.slane %v1001, 4
    %v1007 = vsel %vm298, %v1006, %v989
    %v1008 = vrot.slane %v989, 4
    %v1009 = vsel %vm298, %v1001, %v1008
    %v1010 = vrot.slane %v1005, 4
    %v1011 = vsel %vm298, %v1010, %v993
    %v1012 = vrot.slane %v993, 4
    %v1013 = vsel %vm298, %v1005, %v1012
    %v1014 = vpack.c.bf16 %v953, %v953
    %v1015 = vpack.c.bf16 %v955, %v955
    %v1016 = vpack.c.bf16 %v957, %v957
    %v1017 = vpack.c.bf16 %v959, %v959
    %v1018 = vpack.c.bf16 %v1007, %v1007
    %v1019 = vpack.c.bf16 %v1009, %v1009
    %v1020 = vpack.c.bf16 %v1011, %v1011
    %v1021 = vpack.c.bf16 %v1013, %v1013
    %v1022 = vld [vmem:[#allocation2] sm:$0x1]
    %v1023 = vld [vmem:[#allocation2 + $0x1] sm:$0x1]
    %vm1024 = vcmp.gt.f32.partialorder %v1022, 0.0
    %vm1025 = vcmp.gt.f32.partialorder %v1023, 0.0
    %v1026 = vsel %vm1024, -1e+09, 0.0
    %v1027 = vsel %vm1025, -1e+09, 0.0
    %vm1028 = vcmask 64512
    %v1030 = vsel %vm1028, %v518, 0
    %v1033 = vsel %vm1028, %v766, 0
    %1035 = vmatpush.bf16.xpose.msra.mxu0 0
    %1036 = vmatpush.bf16.xpose.msra.mxu0 0
    %1037 = vmatpush.bf16.xpose.msra.mxu0 0
    %1038 = vmatpush.bf16.xpose.msra.mxu0 0
    %1039 = vmatpush.bf16.xpose.msra.mxu0 0
    %1040 = vmatpush.bf16.xpose.msra.mxu0 0
    %1041 = vmatpush.bf16.xpose.msra.mxu0 0
    %1042 = vmatpush.bf16.xpose.msra.mxu0 %v1033
    %1043 = vmatmul.bf16.gmra.mxu0 %v1030
    %v1044 = vpop.f32.mrf.mxu0
    %v1045 = vadd.f32 0.0, %v1044
    %v1046 = vpop.f32.mrf.mxu0
    %1047 = vdwg.mxu0
    %v1049 = vsel %vm1028, %v519, 0
    %v1052 = vsel %vm1028, %v767, 0
    %1054 = vmatpush.bf16.xpose.msra.mxu0 0
    %1055 = vmatpush.bf16.xpose.msra.mxu0 0
    %1056 = vmatpush.bf16.xpose.msra.mxu0 0
    %1057 = vmatpush.bf16.xpose.msra.mxu0 0
    %1058 = vmatpush.bf16.xpose.msra.mxu0 0
    %1059 = vmatpush.bf16.xpose.msra.mxu0 0
    %1060 = vmatpush.bf16.xpose.msra.mxu0 0
    %1061 = vmatpush.bf16.xpose.msra.mxu0 %v1052
    %1062 = vmatmul.bf16.gmra.mxu0 %v1049
    %v1063 = vpop.f32.mrf.mxu0
    %v1064 = vadd.f32 0.0, %v1063
    %v1065 = vpop.f32.mrf.mxu0
    %1066 = vdwg.mxu0
    %v1068 = vsel %vm1028, %v520, 0
    %v1071 = vsel %vm1028, %v768, 0
    %1073 = vmatpush.bf16.xpose.msra.mxu0 0
    %1074 = vmatpush.bf16.xpose.msra.mxu0 0
    %1075 = vmatpush.bf16.xpose.msra.mxu0 0
    %1076 = vmatpush.bf16.xpose.msra.mxu0 0
    %1077 = vmatpush.bf16.xpose.msra.mxu0 0
    %1078 = vmatpush.bf16.xpose.msra.mxu0 0
    %1079 = vmatpush.bf16.xpose.msra.mxu0 0
    %1080 = vmatpush.bf16.xpose.msra.mxu0 %v1071
    %1081 = vmatmul.bf16.gmra.mxu0 %v1068
    %v1082 = vpop.f32.mrf.mxu0
    %v1083 = vadd.f32 0.0, %v1082
    %v1084 = vpop.f32.mrf.mxu0
    %1085 = vdwg.mxu0
    %v1087 = vsel %vm1028, %v521, 0
    %v1090 = vsel %vm1028, %v769, 0
    %1092 = vmatpush.bf16.xpose.msra.mxu0 0
    %1093 = vmatpush.bf16.xpose.msra.mxu0 0
    %1094 = vmatpush.bf16.xpose.msra.mxu0 0
    %1095 = vmatpush.bf16.xpose.msra.mxu0 0
    %1096 = vmatpush.bf16.xpose.msra.mxu0 0
    %1097 = vmatpush.bf16.xpose.msra.mxu0 0
    %1098 = vmatpush.bf16.xpose.msra.mxu0 0
    %1099 = vmatpush.bf16.xpose.msra.mxu0 %v1090
    %1100 = vmatmul.bf16.gmra.mxu0 %v1087
    %v1101 = vpop.f32.mrf.mxu0
    %v1102 = vadd.f32 0.0, %v1101
    %v1103 = vpop.f32.mrf.mxu0
    %1104 = vdwg.mxu0
    %v1106 = vsel %vm1028, %v522, 0
    %v1109 = vsel %vm1028, %v770, 0
    %1111 = vmatpush.bf16.xpose.msra.mxu0 0
    %1112 = vmatpush.bf16.xpose.msra.mxu0 0
    %1113 = vmatpush.bf16.xpose.msra.mxu0 0
    %1114 = vmatpush.bf16.xpose.msra.mxu0 0
    %1115 = vmatpush.bf16.xpose.msra.mxu0 0
    %1116 = vmatpush.bf16.xpose.msra.mxu0 0
    %1117 = vmatpush.bf16.xpose.msra.mxu0 0
    %1118 = vmatpush.bf16.xpose.msra.mxu0 %v1109
    %1119 = vmatmul.bf16.gmra.mxu0 %v1106
    %v1120 = vpop.f32.mrf.mxu0
    %v1121 = vadd.f32 0.0, %v1120
    %v1122 = vpop.f32.mrf.mxu0
    %1123 = vdwg.mxu0
    %v1125 = vsel %vm1028, %v523, 0
    %v1128 = vsel %vm1028, %v771, 0
    %1130 = vmatpush.bf16.xpose.msra.mxu0 0
    %1131 = vmatpush.bf16.xpose.msra.mxu0 0
    %1132 = vmatpush.bf16.xpose.msra.mxu0 0
    %1133 = vmatpush.bf16.xpose.msra.mxu0 0
    %1134 = vmatpush.bf16.xpose.msra.mxu0 0
    %1135 = vmatpush.bf16.xpose.msra.mxu0 0
    %1136 = vmatpush.bf16.xpose.msra.mxu0 0
    %1137 = vmatpush.bf16.xpose.msra.mxu0 %v1128
    %1138 = vmatmul.bf16.gmra.mxu0 %v1125
    %v1139 = vpop.f32.mrf.mxu0
    %v1140 = vadd.f32 0.0, %v1139
    %v1141 = vpop.f32.mrf.mxu0
    %1142 = vdwg.mxu0
    %v1144 = vsel %vm1028, %v524, 0
    %v1147 = vsel %vm1028, %v772, 0
    %1149 = vmatpush.bf16.xpose.msra.mxu0 0
    %1150 = vmatpush.bf16.xpose.msra.mxu0 0
    %1151 = vmatpush.bf16.xpose.msra.mxu0 0
    %1152 = vmatpush.bf16.xpose.msra.mxu0 0
    %1153 = vmatpush.bf16.xpose.msra.mxu0 0
    %1154 = vmatpush.bf16.xpose.msra.mxu0 0
    %1155 = vmatpush.bf16.xpose.msra.mxu0 0
    %1156 = vmatpush.bf16.xpose.msra.mxu0 %v1147
    %1157 = vmatmul.bf16.gmra.mxu0 %v1144
    %v1158 = vpop.f32.mrf.mxu0
    %v1159 = vadd.f32 0.0, %v1158
    %v1160 = vpop.f32.mrf.mxu0
    %1161 = vdwg.mxu0
    %v1163 = vsel %vm1028, %v525, 0
    %v1166 = vsel %vm1028, %v773, 0
    %1168 = vmatpush.bf16.xpose.msra.mxu0 0
    %1169 = vmatpush.bf16.xpose.msra.mxu0 0
    %1170 = vmatpush.bf16.xpose.msra.mxu0 0
    %1171 = vmatpush.bf16.xpose.msra.mxu0 0
    %1172 = vmatpush.bf16.xpose.msra.mxu0 0
    %1173 = vmatpush.bf16.xpose.msra.mxu0 0
    %1174 = vmatpush.bf16.xpose.msra.mxu0 0
    %1175 = vmatpush.bf16.xpose.msra.mxu0 %v1166
    %1176 = vmatmul.bf16.gmra.mxu0 %v1163
    %v1177 = vpop.f32.mrf.mxu0
    %v1178 = vadd.f32 0.0, %v1177
    %v1179 = vpop.f32.mrf.mxu0
    %1180 = vdwg.mxu0
    %v1183 = vperm.slane %v1026, 0
    %v1184 = vperm.slane %v1027, 0
    %v1187 = vadd.f32 %v1045, %v1183
    %v1188 = vadd.f32 %v1064, %v1183
    %v1189 = vadd.f32 %v1083, %v1183
    %v1190 = vadd.f32 %v1102, %v1183
    %v1191 = vadd.f32 %v1121, %v1184
    %v1192 = vadd.f32 %v1140, %v1184
    %v1193 = vadd.f32 %v1159, %v1184
    %v1194 = vadd.f32 %v1178, %v1184
    %v1195 = vsel %vm1028, %v1187, -inf
    %1196 = vmax.xlane.f32.xlu0 %v1195
    %v1197 = vpop.xlane.xlu0 %1196
    %v1198 = vsel %vm1028, %v1188, -inf
    %1199 = vmax.xlane.f32.xlu0 %v1198
    %v1200 = vpop.xlane.xlu0 %1199
    %v1201 = vsel %vm1028, %v1189, -inf
    %1202 = vmax.xlane.f32.xlu0 %v1201
    %v1203 = vpop.xlane.xlu0 %1202
    %v1204 = vsel %vm1028, %v1190, -inf
    %1205 = vmax.xlane.f32.xlu0 %v1204
    %v1206 = vpop.xlane.xlu0 %1205
    %v1207 = vsel %vm1028, %v1191, -inf
    %1208 = vmax.xlane.f32.xlu0 %v1207
    %v1209 = vpop.xlane.xlu0 %1208
    %v1210 = vsel %vm1028, %v1192, -inf
    %1211 = vmax.xlane.f32.xlu0 %v1210
    %v1212 = vpop.xlane.xlu0 %1211
    %v1213 = vsel %vm1028, %v1193, -inf
    %1214 = vmax.xlane.f32.xlu0 %v1213
    %v1215 = vpop.xlane.xlu0 %1214
    %v1216 = vsel %vm1028, %v1194, -inf
    %1217 = vmax.xlane.f32.xlu0 %v1216
    %v1218 = vpop.xlane.xlu0 %1217
    %v1219 = vsub.f32 %v1187, %v1197
    %v1220 = vsub.f32 %v1188, %v1200
    %v1221 = vsub.f32 %v1189, %v1203
    %v1222 = vsub.f32 %v1190, %v1206
    %v1223 = vsub.f32 %v1191, %v1209
    %v1224 = vsub.f32 %v1192, %v1212
    %v1225 = vsub.f32 %v1193, %v1215
    %v1226 = vsub.f32 %v1194, %v1218
    %v1227 = vmul.f32 %v1219, 1.442695
    %v1228 = vpow.pop %v1227
    %v1229 = vmul.f32 %v1220, 1.442695
    %v1230 = vpow.pop %v1229
    %v1231 = vmul.f32 %v1221, 1.442695
    %v1232 = vpow.pop %v1231
    %v1233 = vmul.f32 %v1222, 1.442695
    %v1234 = vpow.pop %v1233
    %v1235 = vmul.f32 %v1223, 1.442695
    %v1236 = vpow.pop %v1235
    %v1237 = vmul.f32 %v1224, 1.442695
    %v1238 = vpow.pop %v1237
    %v1239 = vmul.f32 %v1225, 1.442695
    %v1240 = vpow.pop %v1239
    %v1241 = vmul.f32 %v1226, 1.442695
    %v1242 = vpow.pop %v1241
    %v1243 = vsel %vm1028, %v1228, 0.0
    %1244 = vadd.xlane.f32.xlu0 %v1243
    %v1245 = vpop.xlane.xlu0 %1244
    %v1246 = vsel %vm1028, %v1230, 0.0
    %1247 = vadd.xlane.f32.xlu0 %v1246
    %v1248 = vpop.xlane.xlu0 %1247
    %v1249 = vsel %vm1028, %v1232, 0.0
    %1250 = vadd.xlane.f32.xlu0 %v1249
    %v1251 = vpop.xlane.xlu0 %1250
    %v1252 = vsel %vm1028, %v1234, 0.0
    %1253 = vadd.xlane.f32.xlu0 %v1252
    %v1254 = vpop.xlane.xlu0 %1253
    %v1255 = vsel %vm1028, %v1236, 0.0
    %1256 = vadd.xlane.f32.xlu0 %v1255
    %v1257 = vpop.xlane.xlu0 %1256
    %v1258 = vsel %vm1028, %v1238, 0.0
    %1259 = vadd.xlane.f32.xlu0 %v1258
    %v1260 = vpop.xlane.xlu0 %1259
    %v1261 = vsel %vm1028, %v1240, 0.0
    %1262 = vadd.xlane.f32.xlu0 %v1261
    %v1263 = vpop.xlane.xlu0 %1262
    %v1264 = vsel %vm1028, %v1242, 0.0
    %1265 = vadd.xlane.f32.xlu0 %v1264
    %v1266 = vpop.xlane.xlu0 %1265
    %v1267 = vpack.c.bf16 %v1228, %v1228
    %v1268 = vpack.c.bf16 %v1230, %v1230
    %v1269 = vpack.c.bf16 %v1232, %v1232
    %v1270 = vpack.c.bf16 %v1234, %v1234
    %v1271 = vpack.c.bf16 %v1236, %v1236
    %v1272 = vpack.c.bf16 %v1238, %v1238
    %v1273 = vpack.c.bf16 %v1240, %v1240
    %v1274 = vpack.c.bf16 %v1242, %v1242
    %v1276 = vsel %vm1028, %v1267, 0
    %vm1278 = vcmask 1043456
    %v1280 = vsel %vm1278, %v1014, 0
    %1282 = vmatpush.bf16.msra.mxu0 0
    %1283 = vmatpush.bf16.msra.mxu0 0
    %1284 = vmatpush.bf16.msra.mxu0 0
    %1285 = vmatpush.bf16.msra.mxu0 0
    %1286 = vmatpush.bf16.msra.mxu0 0
    %1287 = vmatpush.bf16.msra.mxu0 0
    %1288 = vmatpush.bf16.msra.mxu0 0
    %1289 = vmatpush.bf16.msra.mxu0 %v1280
    %1290 = vmatmul.bf16.gmra.mxu0 %v1276
    %v1291 = vpop.f32.mrf.mxu0
    %v1292 = vadd.f32 0.0, %v1291
    %v1293 = vpop.f32.mrf.mxu0
    %1294 = vdwg.mxu0
    %v1296 = vsel %vm1028, %v1268, 0
    %v1299 = vsel %vm1278, %v1015, 0
    %1301 = vmatpush.bf16.msra.mxu0 0
    %1302 = vmatpush.bf16.msra.mxu0 0
    %1303 = vmatpush.bf16.msra.mxu0 0
    %1304 = vmatpush.bf16.msra.mxu0 0
    %1305 = vmatpush.bf16.msra.mxu0 0
    %1306 = vmatpush.bf16.msra.mxu0 0
    %1307 = vmatpush.bf16.msra.mxu0 0
    %1308 = vmatpush.bf16.msra.mxu0 %v1299
    %1309 = vmatmul.bf16.gmra.mxu0 %v1296
    %v1310 = vpop.f32.mrf.mxu0
    %v1311 = vadd.f32 0.0, %v1310
    %v1312 = vpop.f32.mrf.mxu0
    %1313 = vdwg.mxu0
    %v1315 = vsel %vm1028, %v1269, 0
    %v1318 = vsel %vm1278, %v1016, 0
    %1320 = vmatpush.bf16.msra.mxu0 0
    %1321 = vmatpush.bf16.msra.mxu0 0
    %1322 = vmatpush.bf16.msra.mxu0 0
    %1323 = vmatpush.bf16.msra.mxu0 0
    %1324 = vmatpush.bf16.msra.mxu0 0
    %1325 = vmatpush.bf16.msra.mxu0 0
    %1326 = vmatpush.bf16.msra.mxu0 0
    %1327 = vmatpush.bf16.msra.mxu0 %v1318
    %1328 = vmatmul.bf16.gmra.mxu0 %v1315
    %v1329 = vpop.f32.mrf.mxu0
    %v1330 = vadd.f32 0.0, %v1329
    %v1331 = vpop.f32.mrf.mxu0
    %1332 = vdwg.mxu0
    %v1334 = vsel %vm1028, %v1270, 0
    %v1337 = vsel %vm1278, %v1017, 0
    %1339 = vmatpush.bf16.msra.mxu0 0
    %1340 = vmatpush.bf16.msra.mxu0 0
    %1341 = vmatpush.bf16.msra.mxu0 0
    %1342 = vmatpush.bf16.msra.mxu0 0
    %1343 = vmatpush.bf16.msra.mxu0 0
    %1344 = vmatpush.bf16.msra.mxu0 0
    %1345 = vmatpush.bf16.msra.mxu0 0
    %1346 = vmatpush.bf16.msra.mxu0 %v1337
    %1347 = vmatmul.bf16.gmra.mxu0 %v1334
    %v1348 = vpop.f32.mrf.mxu0
    %v1349 = vadd.f32 0.0, %v1348
    %v1350 = vpop.f32.mrf.mxu0
    %1351 = vdwg.mxu0
    %v1353 = vsel %vm1028, %v1271, 0
    %v1356 = vsel %vm1278, %v1018, 0
    %1358 = vmatpush.bf16.msra.mxu0 0
    %1359 = vmatpush.bf16.msra.mxu0 0
    %1360 = vmatpush.bf16.msra.mxu0 0
    %1361 = vmatpush.bf16.msra.mxu0 0
    %1362 = vmatpush.bf16.msra.mxu0 0
    %1363 = vmatpush.bf16.msra.mxu0 0
    %1364 = vmatpush.bf16.msra.mxu0 0
    %1365 = vmatpush.bf16.msra.mxu0 %v1356
    %1366 = vmatmul.bf16.gmra.mxu0 %v1353
    %v1367 = vpop.f32.mrf.mxu0
    %v1368 = vadd.f32 0.0, %v1367
    %v1369 = vpop.f32.mrf.mxu0
    %1370 = vdwg.mxu0
    %v1372 = vsel %vm1028, %v1272, 0
    %v1375 = vsel %vm1278, %v1019, 0
    %1377 = vmatpush.bf16.msra.mxu0 0
    %1378 = vmatpush.bf16.msra.mxu0 0
    %1379 = vmatpush.bf16.msra.mxu0 0
    %1380 = vmatpush.bf16.msra.mxu0 0
    %1381 = vmatpush.bf16.msra.mxu0 0
    %1382 = vmatpush.bf16.msra.mxu0 0
    %1383 = vmatpush.bf16.msra.mxu0 0
    %1384 = vmatpush.bf16.msra.mxu0 %v1375
    %1385 = vmatmul.bf16.gmra.mxu0 %v1372
    %v1386 = vpop.f32.mrf.mxu0
    %v1387 = vadd.f32 0.0, %v1386
    %v1388 = vpop.f32.mrf.mxu0
    %1389 = vdwg.mxu0
    %v1391 = vsel %vm1028, %v1273, 0
    %v1394 = vsel %vm1278, %v1020, 0
    %1396 = vmatpush.bf16.msra.mxu0 0
    %1397 = vmatpush.bf16.msra.mxu0 0
    %1398 = vmatpush.bf16.msra.mxu0 0
    %1399 = vmatpush.bf16.msra.mxu0 0
    %1400 = vmatpush.bf16.msra.mxu0 0
    %1401 = vmatpush.bf16.msra.mxu0 0
    %1402 = vmatpush.bf16.msra.mxu0 0
    %1403 = vmatpush.bf16.msra.mxu0 %v1394
    %1404 = vmatmul.bf16.gmra.mxu0 %v1391
    %v1405 = vpop.f32.mrf.mxu0
    %v1406 = vadd.f32 0.0, %v1405
    %v1407 = vpop.f32.mrf.mxu0
    %1408 = vdwg.mxu0
    %v1410 = vsel %vm1028, %v1274, 0
    %v1413 = vsel %vm1278, %v1021, 0
    %1415 = vmatpush.bf16.msra.mxu0 0
    %1416 = vmatpush.bf16.msra.mxu0 0
    %1417 = vmatpush.bf16.msra.mxu0 0
    %1418 = vmatpush.bf16.msra.mxu0 0
    %1419 = vmatpush.bf16.msra.mxu0 0
    %1420 = vmatpush.bf16.msra.mxu0 0
    %1421 = vmatpush.bf16.msra.mxu0 0
    %1422 = vmatpush.bf16.msra.mxu0 %v1413
    %1423 = vmatmul.bf16.gmra.mxu0 %v1410
    %v1424 = vpop.f32.mrf.mxu0
    %v1425 = vadd.f32 0.0, %v1424
    %v1426 = vpop.f32.mrf.mxu0
    %1427 = vdwg.mxu0
    %v1428 = vrcp.pop %v1245
    %v1429 = vmul.f32 %v1245, %v1428
    %v1430 = vsub.f32 1.0, %v1429
    %v1431 = vmul.f32 %v1428, %v1430
    %v1432 = vadd.f32 %v1428, %v1431
    %vm1433 = vweird.f32 %v1245
    %vm1434 = vweird.f32 %v1428
    %vm1435 = vmor %vm1433, %vm1434
    %v1436 = vsel %vm1435, %v1428, %v1432
    %v1437 = vand.u32 2147483647, %v1245
    %vm1438 = vcmp.eq.f32.partialorder %v1437, 8.507059e+37
    %v1439 = vand.u32 %v1245, 2147483648
    %v1440 = vor.u32 1.1754944e-38, %v1439
    %v1441 = vsel %vm1438, %v1440, %v1436
    %v1442 = vrcp.pop %v1248
    %v1443 = vmul.f32 %v1248, %v1442
    %v1444 = vsub.f32 1.0, %v1443
    %v1445 = vmul.f32 %v1442, %v1444
    %v1446 = vadd.f32 %v1442, %v1445
    %vm1447 = vweird.f32 %v1248
    %vm1448 = vweird.f32 %v1442
    %vm1449 = vmor %vm1447, %vm1448
    %v1450 = vsel %vm1449, %v1442, %v1446
    %v1451 = vand.u32 2147483647, %v1248
    %vm1452 = vcmp.eq.f32.partialorder %v1451, 8.507059e+37
    %v1453 = vand.u32 %v1248, 2147483648
    %v1454 = vor.u32 1.1754944e-38, %v1453
    %v1455 = vsel %vm1452, %v1454, %v1450
    %v1456 = vrcp.pop %v1251
    %v1457 = vmul.f32 %v1251, %v1456
    %v1458 = vsub.f32 1.0, %v1457
    %v1459 = vmul.f32 %v1456, %v1458
    %v1460 = vadd.f32 %v1456, %v1459
    %vm1461 = vweird.f32 %v1251
    %vm1462 = vweird.f32 %v1456
    %vm1463 = vmor %vm1461, %vm1462
    %v1464 = vsel %vm1463, %v1456, %v1460
    %v1465 = vand.u32 2147483647, %v1251
    %vm1466 = vcmp.eq.f32.partialorder %v1465, 8.507059e+37
    %v1467 = vand.u32 %v1251, 2147483648
    %v1468 = vor.u32 1.1754944e-38, %v1467
    %v1469 = vsel %vm1466, %v1468, %v1464
    %v1470 = vrcp.pop %v1254
    %v1471 = vmul.f32 %v1254, %v1470
    %v1472 = vsub.f32 1.0, %v1471
    %v1473 = vmul.f32 %v1470, %v1472
    %v1474 = vadd.f32 %v1470, %v1473
    %vm1475 = vweird.f32 %v1254
    %vm1476 = vweird.f32 %v1470
    %vm1477 = vmor %vm1475, %vm1476
    %v1478 = vsel %vm1477, %v1470, %v1474
    %v1479 = vand.u32 2147483647, %v1254
    %vm1480 = vcmp.eq.f32.partialorder %v1479, 8.507059e+37
    %v1481 = vand.u32 %v1254, 2147483648
    %v1482 = vor.u32 1.1754944e-38, %v1481
    %v1483 = vsel %vm1480, %v1482, %v1478
    %v1484 = vrcp.pop %v1257
    %v1485 = vmul.f32 %v1257, %v1484
    %v1486 = vsub.f32 1.0, %v1485
    %v1487 = vmul.f32 %v1484, %v1486
    %v1488 = vadd.f32 %v1484, %v1487
    %vm1489 = vweird.f32 %v1257
    %vm1490 = vweird.f32 %v1484
    %vm1491 = vmor %vm1489, %vm1490
    %v1492 = vsel %vm1491, %v1484, %v1488
    %v1493 = vand.u32 2147483647, %v1257
    %vm1494 = vcmp.eq.f32.partialorder %v1493, 8.507059e+37
    %v1495 = vand.u32 %v1257, 2147483648
    %v1496 = vor.u32 1.1754944e-38, %v1495
    %v1497 = vsel %vm1494, %v1496, %v1492
    %v1498 = vrcp.pop %v1260
    %v1499 = vmul.f32 %v1260, %v1498
    %v1500 = vsub.f32 1.0, %v1499
    %v1501 = vmul.f32 %v1498, %v1500
    %v1502 = vadd.f32 %v1498, %v1501
    %vm1503 = vweird.f32 %v1260
    %vm1504 = vweird.f32 %v1498
    %vm1505 = vmor %vm1503, %vm1504
    %v1506 = vsel %vm1505, %v1498, %v1502
    %v1507 = vand.u32 2147483647, %v1260
    %vm1508 = vcmp.eq.f32.partialorder %v1507, 8.507059e+37
    %v1509 = vand.u32 %v1260, 2147483648
    %v1510 = vor.u32 1.1754944e-38, %v1509
    %v1511 = vsel %vm1508, %v1510, %v1506
    %v1512 = vrcp.pop %v1263
    %v1513 = vmul.f32 %v1263, %v1512
    %v1514 = vsub.f32 1.0, %v1513
    %v1515 = vmul.f32 %v1512, %v1514
    %v1516 = vadd.f32 %v1512, %v1515
    %vm1517 = vweird.f32 %v1263
    %vm1518 = vweird.f32 %v1512
    %vm1519 = vmor %vm1517, %vm1518
    %v1520 = vsel %vm1519, %v1512, %v1516
    %v1521 = vand.u32 2147483647, %v1263
    %vm1522 = vcmp.eq.f32.partialorder %v1521, 8.507059e+37
    %v1523 = vand.u32 %v1263, 2147483648
    %v1524 = vor.u32 1.1754944e-38, %v1523
    %v1525 = vsel %vm1522, %v1524, %v1520
    %v1526 = vrcp.pop %v1266
    %v1527 = vmul.f32 %v1266, %v1526
    %v1528 = vsub.f32 1.0, %v1527
    %v1529 = vmul.f32 %v1526, %v1528
    %v1530 = vadd.f32 %v1526, %v1529
    %vm1531 = vweird.f32 %v1266
    %vm1532 = vweird.f32 %v1526
    %vm1533 = vmor %vm1531, %vm1532
    %v1534 = vsel %vm1533, %v1526, %v1530
    %v1535 = vand.u32 2147483647, %v1266
    %vm1536 = vcmp.eq.f32.partialorder %v1535, 8.507059e+37
    %v1537 = vand.u32 %v1266, 2147483648
    %v1538 = vor.u32 1.1754944e-38, %v1537
    %v1539 = vsel %vm1536, %v1538, %v1534
    %v1540 = vmul.f32 %v1292, %v1441
    %v1541 = vmul.f32 %v1311, %v1455
    %v1542 = vmul.f32 %v1330, %v1469
    %v1543 = vmul.f32 %v1349, %v1483
    %v1544 = vmul.f32 %v1368, %v1497
    %v1545 = vmul.f32 %v1387, %v1511
    %v1546 = vmul.f32 %v1406, %v1525
    %v1547 = vmul.f32 %v1425, %v1539
    %v1548 = vrot.slane %v1542, 4
    %v1549 = vsel %vm298, %v1548, %v1540
    %v1550 = vrot.slane %v1540, 4
    %v1551 = vsel %vm298, %v1542, %v1550
    %v1553 = vunpack.c.l.s4 1983009808
    %v1554 = vunpack.c.0.s8 %v1553
    %v1555 = vperm.slane %v1549, %v1554
    %v1557 = vunpack.c.l.s4 1983009808
    %v1558 = vunpack.c.0.s8 %v1557
    %v1559 = vperm.slane %v1551, %v1558
    %v1560 = vrot.slane %v1543, 4
    %v1561 = vsel %vm298, %v1560, %v1541
    %v1562 = vrot.slane %v1541, 4
    %v1563 = vsel %vm298, %v1543, %v1562
    %v1565 = vunpack.c.l.s4 1983009808
    %v1566 = vunpack.c.0.s8 %v1565
    %v1567 = vperm.slane %v1561, %v1566
    %v1569 = vunpack.c.l.s4 1983009808
    %v1570 = vunpack.c.0.s8 %v1569
    %v1571 = vperm.slane %v1563, %v1570
    %v1572 = vrot.slane %v1567, 4
    %v1573 = vsel %vm298, %v1572, %v1555
    %v1574 = vrot.slane %v1555, 4
    %v1575 = vsel %vm298, %v1567, %v1574
    %v1577 = vunpack.c.l.s4 1934713408
    %v1578 = vunpack.c.0.s8 %v1577
    %v1579 = vperm.slane %v1573, %v1578
    %v1581 = vunpack.c.l.s4 1934713408
    %v1582 = vunpack.c.0.s8 %v1581
    %v1583 = vperm.slane %v1575, %v1582
    %v1584 = vrot.slane %v1571, 4
    %v1585 = vsel %vm298, %v1584, %v1559
    %v1586 = vrot.slane %v1559, 4
    %v1587 = vsel %vm298, %v1571, %v1586
    %v1589 = vunpack.c.l.s4 1934713408
    %v1590 = vunpack.c.0.s8 %v1589
    %v1591 = vperm.slane %v1585, %v1590
    %v1593 = vunpack.c.l.s4 1934713408
    %v1594 = vunpack.c.0.s8 %v1593
    %v1595 = vperm.slane %v1587, %v1594
    %v1596 = vrot.slane %v1579, 4
    %v1597 = vsel %vm298, 0.0, %v1596
    %v1598 = vrot.slane %v1583, 4
    %v1599 = vsel %vm298, 0.0, %v1598
    %v1600 = vrot.slane %v1591, 4
    %v1601 = vsel %vm298, 0.0, %v1600
    %v1602 = vrot.slane %v1595, 4
    %v1603 = vsel %vm298, 0.0, %v1602
    %v1604 = vrot.slane %v1546, 4
    %v1605 = vsel %vm298, %v1604, %v1544
    %v1606 = vrot.slane %v1544, 4
    %v1607 = vsel %vm298, %v1546, %v1606
    %v1609 = vunpack.c.l.s4 1983009808
    %v1610 = vunpack.c.0.s8 %v1609
    %v1611 = vperm.slane %v1605, %v1610
    %v1613 = vunpack.c.l.s4 1983009808
    %v1614 = vunpack.c.0.s8 %v1613
    %v1615 = vperm.slane %v1607, %v1614
    %v1616 = vrot.slane %v1547, 4
    %v1617 = vsel %vm298, %v1616, %v1545
    %v1618 = vrot.slane %v1545, 4
    %v1619 = vsel %vm298, %v1547, %v1618
    %v1621 = vunpack.c.l.s4 1983009808
    %v1622 = vunpack.c.0.s8 %v1621
    %v1623 = vperm.slane %v1617, %v1622
    %v1625 = vunpack.c.l.s4 1983009808
    %v1626 = vunpack.c.0.s8 %v1625
    %v1627 = vperm.slane %v1619, %v1626
    %v1628 = vrot.slane %v1623, 4
    %v1629 = vsel %vm298, %v1628, %v1611
    %v1630 = vrot.slane %v1611, 4
    %v1631 = vsel %vm298, %v1623, %v1630
    %v1633 = vunpack.c.l.s4 1934713408
    %v1634 = vunpack.c.0.s8 %v1633
    %v1635 = vperm.slane %v1629, %v1634
    %v1637 = vunpack.c.l.s4 1934713408
    %v1638 = vunpack.c.0.s8 %v1637
    %v1639 = vperm.slane %v1631, %v1638
    %v1640 = vrot.slane %v1627, 4
    %v1641 = vsel %vm298, %v1640, %v1615
    %v1642 = vrot.slane %v1615, 4
    %v1643 = vsel %vm298, %v1627, %v1642
    %v1645 = vunpack.c.l.s4 1934713408
    %v1646 = vunpack.c.0.s8 %v1645
    %v1647 = vperm.slane %v1641, %v1646
    %v1649 = vunpack.c.l.s4 1934713408
    %v1650 = vunpack.c.0.s8 %v1649
    %v1651 = vperm.slane %v1643, %v1650
    %v1652 = vrot.slane %v1635, 4
    %v1653 = vsel %vm298, 0.0, %v1652
    %v1654 = vrot.slane %v1639, 4
    %v1655 = vsel %vm298, 0.0, %v1654
    %v1656 = vrot.slane %v1647, 4
    %v1657 = vsel %vm298, 0.0, %v1656
    %v1658 = vrot.slane %v1651, 4
    %v1659 = vsel %vm298, 0.0, %v1658
    %v1660 = vsel %vm298, %v1598, %v1579
    %v1662 = vunpack.c.l.s4 1983009808
    %v1663 = vunpack.c.0.s8 %v1662
    %v1664 = vperm.slane %v1660, %v1663
    %v1665 = vrot.slane %v1599, 4
    %v1666 = vsel %vm298, %v1665, %v1597
    %v1668 = vunpack.c.l.s4 1983009808
    %v1669 = vunpack.c.0.s8 %v1668
    %v1670 = vperm.slane %v1666, %v1669
    %v1671 = vsel %vm298, %v1602, %v1591
    %v1673 = vunpack.c.l.s4 1983009808
    %v1674 = vunpack.c.0.s8 %v1673
    %v1675 = vperm.slane %v1671, %v1674
    %v1676 = vrot.slane %v1603, 4
    %v1677 = vsel %vm298, %v1676, %v1601
    %v1679 = vunpack.c.l.s4 1983009808
    %v1680 = vunpack.c.0.s8 %v1679
    %v1681 = vperm.slane %v1677, %v1680
    %v1682 = vrot.slane %v1670, 4
    %v1683 = vsel %vm298, %v1682, %v1664
    %v1684 = vrot.slane %v1664, 4
    %v1685 = vsel %vm298, %v1670, %v1684
    %v1687 = vunpack.c.l.s4 1934713408
    %v1688 = vunpack.c.0.s8 %v1687
    %v1689 = vperm.slane %v1683, %v1688
    %v1691 = vunpack.c.l.s4 1934713408
    %v1692 = vunpack.c.0.s8 %v1691
    %v1693 = vperm.slane %v1685, %v1692
    %v1694 = vrot.slane %v1681, 4
    %v1695 = vsel %vm298, %v1694, %v1675
    %v1696 = vrot.slane %v1675, 4
    %v1697 = vsel %vm298, %v1681, %v1696
    %v1699 = vunpack.c.l.s4 1934713408
    %v1700 = vunpack.c.0.s8 %v1699
    %v1701 = vperm.slane %v1695, %v1700
    %v1703 = vunpack.c.l.s4 1934713408
    %v1704 = vunpack.c.0.s8 %v1703
    %v1705 = vperm.slane %v1697, %v1704
    %v1706 = vrot.slane %v1701, 4
    %v1707 = vsel %vm298, %v1706, %v1689
    %v1708 = vrot.slane %v1689, 4
    %v1709 = vsel %vm298, %v1701, %v1708
    %v1710 = vrot.slane %v1705, 4
    %v1711 = vsel %vm298, %v1710, %v1693
    %v1712 = vrot.slane %v1693, 4
    %v1713 = vsel %vm298, %v1705, %v1712
    %v1714 = vsel %vm298, %v1654, %v1635
    %v1716 = vunpack.c.l.s4 1983009808
    %v1717 = vunpack.c.0.s8 %v1716
    %v1718 = vperm.slane %v1714, %v1717
    %v1719 = vrot.slane %v1655, 4
    %v1720 = vsel %vm298, %v1719, %v1653
    %v1722 = vunpack.c.l.s4 1983009808
    %v1723 = vunpack.c.0.s8 %v1722
    %v1724 = vperm.slane %v1720, %v1723
    %v1725 = vsel %vm298, %v1658, %v1647
    %v1727 = vunpack.c.l.s4 1983009808
    %v1728 = vunpack.c.0.s8 %v1727
    %v1729 = vperm.slane %v1725, %v1728
    %v1730 = vrot.slane %v1659, 4
    %v1731 = vsel %vm298, %v1730, %v1657
    %v1733 = vunpack.c.l.s4 1983009808
    %v1734 = vunpack.c.0.s8 %v1733
    %v1735 = vperm.slane %v1731, %v1734
    %v1736 = vrot.slane %v1724, 4
    %v1737 = vsel %vm298, %v1736, %v1718
    %v1738 = vrot.slane %v1718, 4
    %v1739 = vsel %vm298, %v1724, %v1738
    %v1741 = vunpack.c.l.s4 1934713408
    %v1742 = vunpack.c.0.s8 %v1741
    %v1743 = vperm.slane %v1737, %v1742
    %v1745 = vunpack.c.l.s4 1934713408
    %v1746 = vunpack.c.0.s8 %v1745
    %v1747 = vperm.slane %v1739, %v1746
    %v1748 = vrot.slane %v1735, 4
    %v1749 = vsel %vm298, %v1748, %v1729
    %v1750 = vrot.slane %v1729, 4
    %v1751 = vsel %vm298, %v1735, %v1750
    %v1753 = vunpack.c.l.s4 1934713408
    %v1754 = vunpack.c.0.s8 %v1753
    %v1755 = vperm.slane %v1749, %v1754
    %v1757 = vunpack.c.l.s4 1934713408
    %v1758 = vunpack.c.0.s8 %v1757
    %v1759 = vperm.slane %v1751, %v1758
    %v1760 = vrot.slane %v1755, 4
    %v1761 = vsel %vm298, %v1760, %v1743
    %v1762 = vrot.slane %v1743, 4
    %v1763 = vsel %vm298, %v1755, %v1762
    %v1764 = vrot.slane %v1759, 4
    %v1765 = vsel %vm298, %v1764, %v1747
    %v1766 = vrot.slane %v1747, 4
    %v1767 = vsel %vm298, %v1759, %v1766
    %1770 = vrot.lane.b32.xlu0 %v1709, 8
    %v1771 = vpop.permute.xlu0 %1770
    %1772 = vrot.lane.b32.xlu0 %v1763, 8
    %v1773 = vpop.permute.xlu0 %1772
    %1778 = vrot.lane.b32.xlu0 %v1711, 16
    %v1779 = vpop.permute.xlu0 %1778
    %1780 = vrot.lane.b32.xlu0 %v1765, 16
    %v1781 = vpop.permute.xlu0 %1780
    %1786 = vrot.lane.b32.xlu0 %v1713, 24
    %v1787 = vpop.permute.xlu0 %1786
    %1788 = vrot.lane.b32.xlu0 %v1767, 24
    %v1789 = vpop.permute.xlu0 %1788
    %v1792 = vsel %vm1028, %v1707, %v1771
    %v1793 = vsel %vm1028, %v1761, %v1773
    %vm1794 = vcmask 130048
    %v1795 = vsel %vm1794, %v1792, %v1779
    %v1796 = vsel %vm1794, %v1793, %v1781
    %vm1797 = vcmask 195584
    %v1798 = vsel %vm1797, %v1795, %v1787
    %v1799 = vsel %vm1797, %v1796, %v1789
    %v1800 = vpack.c.bf16 %v1799, %v1798
    %v1801 = vld [vmem:[#allocation7] sm:$0xf]
    %v1802 = vld [vmem:[#allocation7 + $0x4] sm:$0xf]
    %v1803 = vld [vmem:[#allocation7 + $0x8] sm:$0xf]
    %v1804 = vld [vmem:[#allocation7 + $0xc] sm:$0xf]
    %v1809 = vunpack.c.l.b16 %v1801
    %v1810 = vunpack.c.l.b16 %v1802
    %v1811 = vunpack.c.l.b16 %v1803
    %v1812 = vunpack.c.l.b16 %v1804
    %v1813 = vpack.c.b16 %v1810, %v1809
    %v1814 = vpack.c.b16 %v1812, %v1811
    %v1818 = vsel %vm119, %v1800, 0
    %1820 = vmatpush.bf16.msra.mxu0 0
    %1821 = vmatpush.bf16.msra.mxu0 0
    %1822 = vmatpush.bf16.msra.mxu0 0
    %1823 = vmatpush.bf16.msra.mxu0 0
    %1824 = vmatpush.bf16.msra.mxu0 0
    %1825 = vmatpush.bf16.msra.mxu0 0
    %1826 = vmatpush.bf16.msra.mxu0 %v1814
    %1827 = vmatpush.bf16.msra.mxu0 %v1813
    %1828 = vmatmul.bf16.gmra.mxu0 %v1818
    %v1829 = vpop.f32.mrf.mxu0
    %v1830 = vadd.f32 %v115, %v1829
    %v1831 = vpop.f32.mrf.mxu0
    %v1832 = vadd.f32 %v116, %v1831
    %1833 = vdwg.mxu0
    %v1834 = vld [vmem:[%s8] sm:$0x1]
    %v1835 = vld [vmem:[%s9] sm:$0x1]
    %v1836 = vsel %vm119, %v1830, 0.0
    %1837 = vadd.xlane.f32.xlu0 %v1836
    %v1838 = vpop.xlane.xlu0 %1837
    %v1839 = vsel %vm119, %v1832, 0.0
    %1840 = vadd.xlane.f32.xlu0 %v1839
    %v1841 = vpop.xlane.xlu0 %1840
    %v1842 = vmul.f32 %v1838, %v132
    %v1843 = vmul.f32 %v1841, %v132
    %v1844 = vsub.f32 %v1830, %v1842
    %v1845 = vsub.f32 %v1832, %v1843
    %v1846 = vmul.f32 %v1844, %v1844
    %v1847 = vmul.f32 %v1845, %v1845
    %v1848 = vsel %vm119, %v1846, 0.0
    %1849 = vadd.xlane.f32.xlu0 %v1848
    %v1850 = vpop.xlane.xlu0 %1849
    %v1851 = vsel %vm119, %v1847, 0.0
    %1852 = vadd.xlane.f32.xlu0 %v1851
    %v1853 = vpop.xlane.xlu0 %1852
    %v1854 = vmul.f32 %v1850, %v132
    %v1855 = vmul.f32 %v1853, %v132
    %v1856 = vadd.f32 %v1854, 1e-05
    %v1857 = vadd.f32 %v1855, 1e-05
    %v1858 = vrsqrt.pop %v1856
    %v1859 = vmul.f32 %v1858, %v1856
    %v1860 = vmul.f32 %v1859, %v1858
    %v1861 = vmul.f32 0.5, %v1860
    %v1862 = vsub.f32 1.5, %v1861
    %v1863 = vmul.f32 %v1858, %v1862
    %vm1864 = vweird.f32 %v1856
    %vm1865 = vweird.f32 %v1858
    %vm1866 = vmor %vm1864, %vm1865
    %v1867 = vsel %vm1866, %v1858, %v1863
    %v1868 = vrsqrt.pop %v1857
    %v1869 = vmul.f32 %v1868, %v1857
    %v1870 = vmul.f32 %v1869, %v1868
    %v1871 = vmul.f32 0.5, %v1870
    %v1872 = vsub.f32 1.5, %v1871
    %v1873 = vmul.f32 %v1868, %v1872
    %vm1874 = vweird.f32 %v1857
    %vm1875 = vweird.f32 %v1868
    %vm1876 = vmor %vm1874, %vm1875
    %v1877 = vsel %vm1876, %v1868, %v1873
    %v1878 = vmul.f32 %v1844, %v1867
    %v1879 = vmul.f32 %v1845, %v1877
    %v1881 = vperm.slane %v1834, 0
    %v1883 = vmul.f32 %v1878, %v1881
    %v1884 = vmul.f32 %v1879, %v1881
    %v1886 = vperm.slane %v1835, 0
    %v1888 = vadd.f32 %v1883, %v1886
    %v1889 = vadd.f32 %v1884, %v1886
    %v1890 = vpack.c.bf16 %v1889, %v1888
    %v1891 = vld [vmem:[#allocation8] sm:$0xf]
    %v1892 = vld [vmem:[#allocation8 + $0x4] sm:$0xf]
    %v1893 = vld [vmem:[#allocation8 + $0x8] sm:$0xf]
    %v1894 = vld [vmem:[#allocation8 + $0xc] sm:$0xf]
    %v1895 = vld [vmem:[%s11] sm:$0x1]
    %v1897 = vperm.slane %v1895, 0
    %v1903 = vunpack.c.l.b16 %v1891
    %v1904 = vunpack.c.l.b16 %v1892
    %v1905 = vunpack.c.l.b16 %v1893
    %v1906 = vunpack.c.l.b16 %v1894
    %v1907 = vpack.c.b16 %v1904, %v1903
    %v1908 = vpack.c.b16 %v1906, %v1905
    %v1912 = vsel %vm119, %v1890, 0
    %1914 = vmatpush.bf16.msra.mxu0 0
    %1915 = vmatpush.bf16.msra.mxu0 0
    %1916 = vmatpush.bf16.msra.mxu0 0
    %1917 = vmatpush.bf16.msra.mxu0 0
    %1918 = vmatpush.bf16.msra.mxu0 0
    %1919 = vmatpush.bf16.msra.mxu0 0
    %1920 = vmatpush.bf16.msra.mxu0 %v1908
    %1921 = vmatpush.bf16.msra.mxu0 %v1907
    %1922 = vmatmul.bf16.gmra.mxu0 %v1912
    %v1923 = vpop.f32.mrf.mxu0
    %v1924 = vadd.f32 %v1897, %v1923
    %v1925 = vpop.f32.mrf.mxu0
    %v1926 = vadd.f32 %v1897, %v1925
    %1927 = vdwg.mxu0
    %v1928 = vmax.f32 %v1924, 0.0
    %v1929 = vmax.f32 %v1926, 0.0
    %v1930 = vpack.c.bf16 %v1929, %v1928
    %v1931 = vld [vmem:[%s12] sm:$0xf]
    %v1932 = vld [vmem:[%s12 + $0x4] sm:$0xf]
    %v1933 = vld [vmem:[%s12 + $0x8] sm:$0xf]
    %v1934 = vld [vmem:[%s12 + $0xc] sm:$0xf]
    %v1935 = vld [vmem:[%s12 + $0x10] sm:$0xf]
    %v1936 = vld [vmem:[%s12 + $0x14] sm:$0xf]
    %v1937 = vld [vmem:[%s12 + $0x18] sm:$0xf]
    %v1938 = vld [vmem:[%s12 + $0x1c] sm:$0xf]
    %v1939 = vld [vmem:[%s13] sm:$0x1]
    %v1941 = vperm.slane %v1939, 0
    %v1951 = vunpack.c.l.b16 %v1931
    %v1952 = vunpack.c.l.b16 %v1932
    %v1953 = vunpack.c.l.b16 %v1933
    %v1954 = vunpack.c.l.b16 %v1934
    %v1955 = vunpack.c.l.b16 %v1935
    %v1956 = vunpack.c.l.b16 %v1936
    %v1957 = vunpack.c.l.b16 %v1937
    %v1958 = vunpack.c.l.b16 %v1938
    %v1959 = vpack.c.b16 %v1952, %v1951
    %v1960 = vpack.c.b16 %v1954, %v1953
    %v1961 = vpack.c.b16 %v1956, %v1955
    %v1962 = vpack.c.b16 %v1958, %v1957
    %vm1967 = vcmask 523264
    %v1969 = vsel %vm1967, %v1930, 0
    %1971 = vmatpush.bf16.msra.mxu0 0
    %1972 = vmatpush.bf16.msra.mxu0 0
    %1973 = vmatpush.bf16.msra.mxu0 0
    %1974 = vmatpush.bf16.msra.mxu0 0
    %1975 = vmatpush.bf16.msra.mxu0 %v1962
    %1976 = vmatpush.bf16.msra.mxu0 %v1961
    %1977 = vmatpush.bf16.msra.mxu0 %v1960
    %1978 = vmatpush.bf16.msra.mxu0 %v1959
    %1979 = vmatmul.bf16.gmra.mxu0 %v1969
    %v1980 = vpop.f32.mrf.mxu0
    %v1981 = vadd.f32 %v1941, %v1980
    %v1982 = vpop.f32.mrf.mxu0
    %v1983 = vadd.f32 %v1941, %v1982
    %1984 = vdwg.mxu0
    %v1985 = vadd.f32 %v1981, %v1830
    %v1986 = vadd.f32 %v1983, %v1832
    %1987 = vst.msk [vmem:[#allocation10] sm:$0xff] %vm119, %v1985
    %1988 = vst.msk [vmem:[#allocation10 + $0x8] sm:$0xff] %vm119, %v1986
    // Predicated region
    $region74: #{tpu_custom_call.1} parent=1 // pred_check
      _
    $region75: #{tpu_custom_call.1} parent=1 // pred_check_branch
      %1990 = sbr.rel (0) target = $region77
    $region76: #{tpu_custom_call.1} parent=1 // pred_region
      %1992 = vsyncadd [#allocation4], 0
      %s1993 = sshll.u32 [#allocation10], 4
      %s1994 = int_to_ptr.vmem [resolvable:$true] %s1993
      %s1995 = sshll.u32 %s14, 4
      %s1996 = int_to_ptr.hbm [resolvable:$true] %s1995
      %2001 = dma.vmem_to_hbm [thread:$0]  %s1994, 256, %s1996, [#allocation4], 128, 128, 8
    $region77: #{tpu_custom_call.1} parent=1 // pred_fallthru
      _
    // Predicated region
    $region78: #{tpu_custom_call.1} parent=1 // pred_check
      _
    $region79: #{tpu_custom_call.1} parent=1 // pred_check_branch
      %2003 = sbr.rel (0) target = $region81
    $region80: #{tpu_custom_call.1} parent=1 // pred_region
      %2005 = vsyncadd [#allocation12], 0
      %s2006 = sshll.u32 [#allocation11], 4
      %s2007 = int_to_ptr.vmem [resolvable:$true] %s2006
      %s2008 = sshll.u32 %s15, 4
      %s2009 = int_to_ptr.hbm [resolvable:$true] %s2008
      %2014 = dma.vmem_to_hbm [thread:$0]  %s2007, 256, %s2009, [#allocation12], 128, 128, 8
    $region81: #{tpu_custom_call.1} parent=1 // pred_fallthru
      _
    // Predicated region
    $region82: #{tpu_custom_call.1} parent=1 // pred_check
      _
    $region83: #{tpu_custom_call.1} parent=1 // pred_check_branch
      %2016 = sbr.rel (0) target = $region85
    $region84: #{tpu_custom_call.1} parent=1 // pred_region
      %2018 = dma.done [#allocation4], 256
    $region85: #{tpu_custom_call.1} parent=1 // pred_fallthru
      _
    // Predicated region
    $region86: #{tpu_custom_call.1} parent=1 // pred_check
      _
    $region87: #{tpu_custom_call.1} parent=1 // pred_check_branch
      %2020 = sbr.rel (0) target = $region89
    $region88: #{tpu_custom_call.1} parent=1 // pred_region
      %2022 = dma.done [#allocation12], 256
    $region89: #{tpu_custom_call.1} parent=1 // pred_fallthru
      _
    %2023 = vsyncpa [#allocation3], 1
    %2024 = vsyncpa [#allocation6], 1
    %2025 = vsyncpa [#allocation9], 1
    %2026 = vsyncpa [#allocation4], 1
    %2027 = vsyncpa [#allocation12], 1

// kernel: tpu_custom_call.1
$region0: #{tpu_custom_call.1}
  #allocation0 [shape = 'u32[]', space=smem, size = 0x4, offset = 0x4, fixed_abs, tag = 'smem constant byte address 0x4 - core index']
  #allocation1 [shape = 'u32[72,128]{1,0:T(1,128)}', space=vmem, size = 0x9000, scoped, tag = 'internal scratch']
  %s0 = inlined_call_operand.vmem [shape: f32[2,8,32], index: 0, kind: input, shape index: {}]
  %s1 = inlined_call_operand.hbm [shape: f32[2,1,8], index: 1, kind: input, shape index: {}]
  %s2 = inlined_call_operand.vmem [shape: f32[1,32], index: 2, kind: input, shape index: {}]
  %s3 = inlined_call_operand.vmem [shape: f32[1,32], index: 3, kind: input, shape index: {}]
  %s4 = inlined_call_operand.vmem [shape: bf16[32,32], index: 4, kind: input, shape index: {}]
  %s5 = inlined_call_operand.vmem [shape: bf16[32,32], index: 5, kind: input, shape index: {}]
  %s6 = inlined_call_operand.hbm [shape: bf16[32,32], index: 6, kind: input, shape index: {}]
  %s7 = inlined_call_operand.hbm [shape: bf16[32,32], index: 7, kind: input, shape index: {}]
  %s8 = inlined_call_operand.vmem [shape: f32[1,32], index: 8, kind: input, shape index: {}]
  %s9 = inlined_call_operand.vmem [shape: f32[1,32], index: 9, kind: input, shape index: {}]
  %s10 = inlined_call_operand.hbm [shape: bf16[32,64], index: 10, kind: input, shape index: {}]
  %s11 = inlined_call_operand.vmem [shape: f32[1,64], index: 11, kind: input, shape index: {}]
  %s12 = inlined_call_operand.vmem [shape: bf16[64,32], index: 12, kind: input, shape index: {}]
  %s13 = inlined_call_operand.vmem [shape: f32[1,32], index: 13, kind: input, shape index: {}]
  %s14 = inlined_call_operand.hbm [shape: f32[2,8,32], index: 14, kind: output, shape index: {0}]
  %s15 = inlined_call_operand.hbm [shape: f32[2,8,32], index: 15, kind: output, shape index: {1}]
  %16 = xla_tuple %s14, %s15
  %s17 = sld [smem:[#allocation0]]
  $region90: #{tpu_custom_call.1} parent=0
    _
  %s19 = ssub.s32 1, %s17
  %s20 = scalar_select 0, %s19, %s17
  $region1: #{tpu_custom_call.1} parent=0
    #allocation2 [shape = 'u8[1024]{0}', space=vmem, size = 0x400, scoped, tag = 'input window, operand 1, single buffered']
    #allocation3 [shape = 's32[1]{0}', space=sflag, size = 0x4, scoped, tag = 'scoped memory for tpu_custom_call.1']
    #allocation4 [shape = 's32[1]{0}', space=sflag, size = 0x4, scoped, tag = 'scoped memory for tpu_custom_call.1']
    #allocation5 [shape = 'u8[8192]{0}', space=vmem, size = 0x2000, scoped, tag = 'input window, operand 6, single buffered']
    #allocation6 [shape = 's32[1]{0}', space=sflag, size = 0x4, scoped, tag = 'scoped memory for tpu_custom_call.1']
    #allocation7 [shape = 'u8[8192]{0}', space=vmem, size = 0x2000, scoped, tag = 'input window, operand 7, single buffered']
    #allocation8 [shape = 'u8[8192]{0}', space=vmem, size = 0x2000, scoped, tag = 'input window, operand 10, single buffered']
    #allocation9 [shape = 's32[1]{0}', space=sflag, size = 0x4, scoped, tag = 'scoped memory for tpu_custom_call.1']
    #allocation10 [shape = 'u8[8192]{0}', space=vmem, size = 0x2000, scoped, tag = 'output window, operand 0, single buffered']
    #allocation11 [shape = 'u8[8192]{0}', space=vmem, size = 0x2000, scoped, tag = 'output window, operand 1, single buffered']
    #allocation12 [shape = 's32[1]{0}', space=sflag, size = 0x4, scoped, tag = 'scoped memory for tpu_custom_call.1']
    %21 = vsyncpa [#allocation3], 0
    %22 = vsyncpa [#allocation6], 0
    %23 = vsyncpa [#allocation9], 0
    %24 = vsyncpa [#allocation4], 0
    %25 = vsyncpa [#allocation12], 0
    // Predicated region
    $region2: #{tpu_custom_call.1} parent=1 // pred_check
      _
    $region3: #{tpu_custom_call.1} parent=1 // pred_check_branch
      %27 = sbr.rel (0) target = $region5
    $region4: #{tpu_custom_call.1} parent=1 // pred_region
      _
    $region5: #{tpu_custom_call.1} parent=1 // pred_fallthru
      _
    // Predicated region
    $region6: #{tpu_custom_call.1} parent=1 // pred_check
      _
    $region7: #{tpu_custom_call.1} parent=1 // pred_check_branch
      %29 = sbr.rel (0) target = $region9
    $region8: #{tpu_custom_call.1} parent=1 // pred_region
      %31 = vsyncadd [#allocation3], 0
      %s32 = sshll.u32 %s1, 4
      %s33 = int_to_ptr.hbm [resolvable:$true] %s32
      %s34 = sshll.u32 [#allocation2], 4
      %s35 = int_to_ptr.vmem [resolvable:$true] %s34
      %40 = dma.hbm_to_vmem [thread:$0]  %s33, 32, %s35, [#allocation3], 16, 16, 1
    $region9: #{tpu_custom_call.1} parent=1 // pred_fallthru
      _
    // Predicated region
    $region10: #{tpu_custom_call.1} parent=1 // pred_check
      _
    $region11: #{tpu_custom_call.1} parent=1 // pred_check_branch
      %42 = sbr.rel (0) target = $region13
    $region12: #{tpu_custom_call.1} parent=1 // pred_region
      _
    $region13: #{tpu_custom_call.1} parent=1 // pred_fallthru
      _
    // Predicated region
    $region14: #{tpu_custom_call.1} parent=1 // pred_check
      _
    $region15: #{tpu_custom_call.1} parent=1 // pred_check_branch
      %44 = sbr.rel (0) target = $region17
    $region16: #{tpu_custom_call.1} parent=1 // pred_region
      _
    $region17: #{tpu_custom_call.1} parent=1 // pred_fallthru
      _
    // Predicated region
    $region18: #{tpu_custom_call.1} parent=1 // pred_check
      _
    $region19: #{tpu_custom_call.1} parent=1 // pred_check_branch
      %46 = sbr.rel (0) target = $region21
    $region20: #{tpu_custom_call.1} parent=1 // pred_region
      _
    $region21: #{tpu_custom_call.1} parent=1 // pred_fallthru
      _
    // Predicated region
    $region22: #{tpu_custom_call.1} parent=1 // pred_check
      _
    $region23: #{tpu_custom_call.1} parent=1 // pred_check_branch
      %48 = sbr.rel (0) target = $region25
    $region24: #{tpu_custom_call.1} parent=1 // pred_region
      _
    $region25: #{tpu_custom_call.1} parent=1 // pred_fallthru
      _
    // Predicated region
    $region26: #{tpu_custom_call.1} parent=1 // pred_check
      _
    $region27: #{tpu_custom_call.1} parent=1 // pred_check_branch
      %50 = sbr.rel (0) target = $region29
    $region28: #{tpu_custom_call.1} parent=1 // pred_region
      %52 = vsyncadd [#allocation6], 0
      %s53 = sshll.u32 %s6, 4
      %s54 = int_to_ptr.hbm [resolvable:$true] %s53
      %s55 = sshll.u32 [#allocation5], 4
      %s56 = int_to_ptr.vmem [resolvable:$true] %s55
      %61 = dma.hbm_to_vmem [thread:$0]  %s54, 256, %s56, [#allocation6], 64, 64, 4
    $region29: #{tpu_custom_call.1} parent=1 // pred_fallthru
      _
    // Predicated region
    $region30: #{tpu_custom_call.1} parent=1 // pred_check
      _
    $region31: #{tpu_custom_call.1} parent=1 // pred_check_branch
      %63 = sbr.rel (0) target = $region33
    $region32: #{tpu_custom_call.1} parent=1 // pred_region
      %65 = vsyncadd [#allocation6], 0
      %s66 = sshll.u32 %s7, 4
      %s67 = int_to_ptr.hbm [resolvable:$true] %s66
      %s68 = sshll.u32 [#allocation7], 4
      %s69 = int_to_ptr.vmem [resolvable:$true] %s68
      %74 = dma.hbm_to_vmem [thread:$0]  %s67, 256, %s69, [#allocation6], 64, 64, 4
    $region33: #{tpu_custom_call.1} parent=1 // pred_fallthru
      _
    // Predicated region
    $region34: #{tpu_custom_call.1} parent=1 // pred_check
      _
    $region35: #{tpu_custom_call.1} parent=1 // pred_check_branch
      %76 = sbr.rel (0) target = $region37
    $region36: #{tpu_custom_call.1} parent=1 // pred_region
      _
    $region37: #{tpu_custom_call.1} parent=1 // pred_fallthru
      _
    // Predicated region
    $region38: #{tpu_custom_call.1} parent=1 // pred_check
      _
    $region39: #{tpu_custom_call.1} parent=1 // pred_check_branch
      %78 = sbr.rel (0) target = $region41
    $region40: #{tpu_custom_call.1} parent=1 // pred_region
      _
    $region41: #{tpu_custom_call.1} parent=1 // pred_fallthru
      _
    // Predicated region
    $region42: #{tpu_custom_call.1} parent=1 // pred_check
      _
    $region43: #{tpu_custom_call.1} parent=1 // pred_check_branch
      %80 = sbr.rel (0) target = $region45
    $region44: #{tpu_custom_call.1} parent=1 // pred_region
      %82 = vsyncadd [#allocation9], 0
      %s83 = sshll.u32 %s10, 4
      %s84 = int_to_ptr.hbm [resolvable:$true] %s83
      %s85 = sshll.u32 [#allocation8], 4
      %s86 = int_to_ptr.vmem [resolvable:$true] %s85
      %91 = dma.hbm_to_vmem [thread:$0]  %s84, 256, %s86, [#allocation9], 64, 64, 4
    $region45: #{tpu_custom_call.1} parent=1 // pred_fallthru
      _
    // Predicated region
    $region46: #{tpu_custom_call.1} parent=1 // pred_check
      _
    $region47: #{tpu_custom_call.1} parent=1 // pred_check_branch
      %93 = sbr.rel (0) target = $region49
    $region48: #{tpu_custom_call.1} parent=1 // pred_region
      _
    $region49: #{tpu_custom_call.1} parent=1 // pred_fallthru
      _
    // Predicated region
    $region50: #{tpu_custom_call.1} parent=1 // pred_check
      _
    $region51: #{tpu_custom_call.1} parent=1 // pred_check_branch
      %95 = sbr.rel (0) target = $region53
    $region52: #{tpu_custom_call.1} parent=1 // pred_region
      _
    $region53: #{tpu_custom_call.1} parent=1 // pred_fallthru
      _
    // Predicated region
    $region54: #{tpu_custom_call.1} parent=1 // pred_check
      _
    $region55: #{tpu_custom_call.1} parent=1 // pred_check_branch
      %97 = sbr.rel (0) target = $region57
    $region56: #{tpu_custom_call.1} parent=1 // pred_region
      _
    $region57: #{tpu_custom_call.1} parent=1 // pred_fallthru
      _
    // Predicated region
    $region58: #{tpu_custom_call.1} parent=1 // pred_check
      _
    $region59: #{tpu_custom_call.1} parent=1 // pred_check_branch
      %99 = sbr.rel (0) target = $region61
    $region60: #{tpu_custom_call.1} parent=1 // pred_region
      %101 = dma.done [#allocation3], 32
    $region61: #{tpu_custom_call.1} parent=1 // pred_fallthru
      _
    // Predicated region
    $region62: #{tpu_custom_call.1} parent=1 // pred_check
      _
    $region63: #{tpu_custom_call.1} parent=1 // pred_check_branch
      %103 = sbr.rel (0) target = $region65
    $region64: #{tpu_custom_call.1} parent=1 // pred_region
      %105 = dma.done [#allocation6], 256
    $region65: #{tpu_custom_call.1} parent=1 // pred_fallthru
      _
    // Predicated region
    $region66: #{tpu_custom_call.1} parent=1 // pred_check
      _
    $region67: #{tpu_custom_call.1} parent=1 // pred_check_branch
      %107 = sbr.rel (0) target = $region69
    $region68: #{tpu_custom_call.1} parent=1 // pred_region
      %109 = dma.done [#allocation6], 256
    $region69: #{tpu_custom_call.1} parent=1 // pred_fallthru
      _
    // Predicated region
    $region70: #{tpu_custom_call.1} parent=1 // pred_check
      _
    $region71: #{tpu_custom_call.1} parent=1 // pred_check_branch
      %111 = sbr.rel (0) target = $region73
    $region72: #{tpu_custom_call.1} parent=1 // pred_region
      %113 = dma.done [#allocation9], 256
    $region73: #{tpu_custom_call.1} parent=1 // pred_fallthru
      _
    %v115 = vld [vmem:[%s0] sm:$0xff]
    %v116 = vld [vmem:[%s0 + $0x8] sm:$0xff]
    %v117 = vld [vmem:[%s2] sm:$0x1]
    %v118 = vld [vmem:[%s3] sm:$0x1]
    %vm119 = vcmask 261120
    %v120 = vsel %vm119, %v115, 0.0
    %121 = vadd.xlane.f32.xlu0 %v120
    %v122 = vpop.xlane.xlu0 %121
    %v123 = vsel %vm119, %v116, 0.0
    %124 = vadd.xlane.f32.xlu0 %v123
    %v125 = vpop.xlane.xlu0 %124
    %v126 = vrcp.pop 32.0
    %v127 = vmul.f32 32.0, %v126
    %v128 = vsub.f32 1.0, %v127
    %v129 = vmul.f32 %v126, %v128
    %v130 = vadd.f32 %v126, %v129
    %vm131 = vweird.f32 %v126
    %v132 = vsel %vm131, %v126, %v130
    %v133 = vmul.f32 %v122, %v132
    %v134 = vmul.f32 %v125, %v132
    %v135 = vsub.f32 %v115, %v133
    %v136 = vsub.f32 %v116, %v134
    %v137 = vmul.f32 %v135, %v135
    %v138 = vmul.f32 %v136, %v136
    %v139 = vsel %vm119, %v137, 0.0
    %140 = vadd.xlane.f32.xlu0 %v139
    %v141 = vpop.xlane.xlu0 %140
    %v142 = vsel %vm119, %v138, 0.0
    %143 = vadd.xlane.f32.xlu0 %v142
    %v144 = vpop.xlane.xlu0 %143
    %v145 = vmul.f32 %v141, %v132
    %v146 = vmul.f32 %v144, %v132
    %v147 = vadd.f32 %v145, 1e-05
    %v148 = vadd.f32 %v146, 1e-05
    %v149 = vrsqrt.pop %v147
    %v150 = vmul.f32 %v149, %v147
    %v151 = vmul.f32 %v150, %v149
    %v152 = vmul.f32 0.5, %v151
    %v153 = vsub.f32 1.5, %v152
    %v154 = vmul.f32 %v149, %v153
    %vm155 = vweird.f32 %v147
    %vm156 = vweird.f32 %v149
    %vm157 = vmor %vm155, %vm156
    %v158 = vsel %vm157, %v149, %v154
    %v159 = vrsqrt.pop %v148
    %v160 = vmul.f32 %v159, %v148
    %v161 = vmul.f32 %v160, %v159
    %v162 = vmul.f32 0.5, %v161
    %v163 = vsub.f32 1.5, %v162
    %v164 = vmul.f32 %v159, %v163
    %vm165 = vweird.f32 %v148
    %vm166 = vweird.f32 %v159
    %vm167 = vmor %vm165, %vm166
    %v168 = vsel %vm167, %v159, %v164
    %v169 = vmul.f32 %v135, %v158
    %v170 = vmul.f32 %v136, %v168
    %v172 = vperm.slane %v117, 0
    %v174 = vmul.f32 %v169, %v172
    %v175 = vmul.f32 %v170, %v172
    %v177 = vperm.slane %v118, 0
    %v179 = vadd.f32 %v174, %v177
    %v180 = vadd.f32 %v175, %v177
    %181 = vst.msk [vmem:[#allocation11] sm:$0xff] %vm119, %v179
    %182 = vst.msk [vmem:[#allocation11 + $0x8] sm:$0xff] %vm119, %v180
    %v183 = vpack.c.bf16 %v180, %v179
    %v184 = vld [vmem:[%s4] sm:$0xf]
    %v185 = vld [vmem:[%s4 + $0x4] sm:$0xf]
    %v186 = vld [vmem:[%s4 + $0x8] sm:$0xf]
    %v187 = vld [vmem:[%s4 + $0xc] sm:$0xf]
    %v192 = vunpack.c.l.b16 %v184
    %v193 = vunpack.c.l.b16 %v185
    %v194 = vunpack.c.l.b16 %v186
    %v195 = vunpack.c.l.b16 %v187
    %v196 = vpack.c.b16 %v193, %v192
    %v197 = vpack.c.b16 %v195, %v194
    %v201 = vsel %vm119, %v183, 0
    %203 = vmatpush.bf16.msra.mxu0 0
    %204 = vmatpush.bf16.msra.mxu0 0
    %205 = vmatpush.bf16.msra.mxu0 0
    %206 = vmatpush.bf16.msra.mxu0 0
    %207 = vmatpush.bf16.msra.mxu0 0
    %208 = vmatpush.bf16.msra.mxu0 0
    %209 = vmatpush.bf16.msra.mxu0 %v197
    %210 = vmatpush.bf16.msra.mxu0 %v196
    %211 = vmatmul.bf16.gmra.mxu0 %v201
    %v212 = vpop.f32.mrf.mxu0
    %v213 = vadd.f32 0.0, %v212
    %v214 = vpop.f32.mrf.mxu0
    %v215 = vadd.f32 0.0, %v214
    %216 = vdwg.mxu0
    %v217 = vld [vmem:[%s5] sm:$0xf]
    %v218 = vld [vmem:[%s5 + $0x4] sm:$0xf]
    %v219 = vld [vmem:[%s5 + $0x8] sm:$0xf]
    %v220 = vld [vmem:[%s5 + $0xc] sm:$0xf]
    %v225 = vunpack.c.l.b16 %v217
    %v226 = vunpack.c.l.b16 %v218
    %v227 = vunpack.c.l.b16 %v219
    %v228 = vunpack.c.l.b16 %v220
    %v229 = vpack.c.b16 %v226, %v225
    %v230 = vpack.c.b16 %v228, %v227
    %233 = vmatpush.bf16.msra.mxu0 0
    %234 = vmatpush.bf16.msra.mxu0 0
    %235 = vmatpush.bf16.msra.mxu0 0
    %236 = vmatpush.bf16.msra.mxu0 0
    %237 = vmatpush.bf16.msra.mxu0 0
    %238 = vmatpush.bf16.msra.mxu0 0
    %239 = vmatpush.bf16.msra.mxu0 %v230
    %240 = vmatpush.bf16.msra.mxu0 %v229
    %241 = vmatmul.bf16.gmra.mxu0 %v201
    %v242 = vpop.f32.mrf.mxu0
    %v243 = vadd.f32 0.0, %v242
    %v244 = vpop.f32.mrf.mxu0
    %v245 = vadd.f32 0.0, %v244
    %246 = vdwg.mxu0
    %v247 = vld [vmem:[#allocation5] sm:$0xf]
    %v248 = vld [vmem:[#allocation5 + $0x4] sm:$0xf]
    %v249 = vld [vmem:[#allocation5 + $0x8] sm:$0xf]
    %v250 = vld [vmem:[#allocation5 + $0xc] sm:$0xf]
    %v255 = vunpack.c.l.b16 %v247
    %v256 = vunpack.c.l.b16 %v248
    %v257 = vunpack.c.l.b16 %v249
    %v258 = vunpack.c.l.b16 %v250
    %v259 = vpack.c.b16 %v256, %v255
    %v260 = vpack.c.b16 %v258, %v257
    %263 = vmatpush.bf16.msra.mxu0 0
    %264 = vmatpush.bf16.msra.mxu0 0
    %265 = vmatpush.bf16.msra.mxu0 0
    %266 = vmatpush.bf16.msra.mxu0 0
    %267 = vmatpush.bf16.msra.mxu0 0
    %268 = vmatpush.bf16.msra.mxu0 0
    %269 = vmatpush.bf16.msra.mxu0 %v260
    %270 = vmatpush.bf16.msra.mxu0 %v259
    %271 = vmatmul.bf16.gmra.mxu0 %v201
    %v272 = vpop.f32.mrf.mxu0
    %v273 = vadd.f32 0.0, %v272
    %v274 = vpop.f32.mrf.mxu0
    %v275 = vadd.f32 0.0, %v274
    %276 = vdwg.mxu0
    %279 = vrot.lane.b32.xlu0 %v213, 120
    %v280 = vpop.permute.xlu0 %279
    %281 = vrot.lane.b32.xlu0 %v215, 120
    %v282 = vpop.permute.xlu0 %281
    %285 = vrot.lane.b32.xlu0 %v213, 112
    %v286 = vpop.permute.xlu0 %285
    %287 = vrot.lane.b32.xlu0 %v215, 112
    %v288 = vpop.permute.xlu0 %287
    %291 = vrot.lane.b32.xlu0 %v213, 104
    %v292 = vpop.permute.xlu0 %291
    %293 = vrot.lane.b32.xlu0 %v215, 104
    %v294 = vpop.permute.xlu0 %293
    %v297 = vrot.slane %v286, 4
    %vm298 = vcmask 1047556
    %v299 = vsel %vm298, %v297, %v213
    %v300 = vrot.slane %v213, 4
    %v301 = vsel %vm298, %v286, %v300
    %v303 = vunpack.c.l.s4 1983009808
    %v304 = vunpack.c.0.s8 %v303
    %v305 = vperm.slane %v299, %v304
    %v307 = vunpack.c.l.s4 1983009808
    %v308 = vunpack.c.0.s8 %v307
    %v309 = vperm.slane %v301, %v308
    %v310 = vrot.slane %v292, 4
    %v311 = vsel %vm298, %v310, %v280
    %v312 = vrot.slane %v280, 4
    %v313 = vsel %vm298, %v292, %v312
    %v315 = vunpack.c.l.s4 1983009808
    %v316 = vunpack.c.0.s8 %v315
    %v317 = vperm.slane %v311, %v316
    %v319 = vunpack.c.l.s4 1983009808
    %v320 = vunpack.c.0.s8 %v319
    %v321 = vperm.slane %v313, %v320
    %v322 = vrot.slane %v317, 4
    %v323 = vsel %vm298, %v322, %v305
    %v324 = vrot.slane %v305, 4
    %v325 = vsel %vm298, %v317, %v324
    %v327 = vunpack.c.l.s4 1934713408
    %v328 = vunpack.c.0.s8 %v327
    %v329 = vperm.slane %v323, %v328
    %v331 = vunpack.c.l.s4 1934713408
    %v332 = vunpack.c.0.s8 %v331
    %v333 = vperm.slane %v325, %v332
    %v334 = vrot.slane %v321, 4
    %v335 = vsel %vm298, %v334, %v309
    %v336 = vrot.slane %v309, 4
    %v337 = vsel %vm298, %v321, %v336
    %v339 = vunpack.c.l.s4 1934713408
    %v340 = vunpack.c.0.s8 %v339
    %v341 = vperm.slane %v335, %v340
    %v343 = vunpack.c.l.s4 1934713408
    %v344 = vunpack.c.0.s8 %v343
    %v345 = vperm.slane %v337, %v344
    %v346 = vrot.slane %v329, 4
    %v347 = vsel %vm298, 0.0, %v346
    %v348 = vrot.slane %v333, 4
    %v349 = vsel %vm298, 0.0, %v348
    %v350 = vrot.slane %v341, 4
    %v351 = vsel %vm298, 0.0, %v350
    %v352 = vrot.slane %v345, 4
    %v353 = vsel %vm298, 0.0, %v352
    %v354 = vrot.slane %v288, 4
    %v355 = vsel %vm298, %v354, %v215
    %v356 = vrot.slane %v215, 4
    %v357 = vsel %vm298, %v288, %v356
    %v359 = vunpack.c.l.s4 1983009808
    %v360 = vunpack.c.0.s8 %v359
    %v361 = vperm.slane %v355, %v360
    %v363 = vunpack.c.l.s4 1983009808
    %v364 = vunpack.c.0.s8 %v363
    %v365 = vperm.slane %v357, %v364
    %v366 = vrot.slane %v294, 4
    %v367 = vsel %vm298, %v366, %v282
    %v368 = vrot.slane %v282, 4
    %v369 = vsel %vm298, %v294, %v368
    %v371 = vunpack.c.l.s4 1983009808
    %v372 = vunpack.c.0.s8 %v371
    %v373 = vperm.slane %v367, %v372
    %v375 = vunpack.c.l.s4 1983009808
    %v376 = vunpack.c.0.s8 %v375
    %v377 = vperm.slane %v369, %v376
    %v378 = vrot.slane %v373, 4
    %v379 = vsel %vm298, %v378, %v361
    %v380 = vrot.slane %v361, 4
    %v381 = vsel %vm298, %v373, %v380
    %v383 = vunpack.c.l.s4 1934713408
    %v384 = vunpack.c.0.s8 %v383
    %v385 = vperm.slane %v379, %v384
    %v387 = vunpack.c.l.s4 1934713408
    %v388 = vunpack.c.0.s8 %v387
    %v389 = vperm.slane %v381, %v388
    %v390 = vrot.slane %v377, 4
    %v391 = vsel %vm298, %v390, %v365
    %v392 = vrot.slane %v365, 4
    %v393 = vsel %vm298, %v377, %v392
    %v395 = vunpack.c.l.s4 1934713408
    %v396 = vunpack.c.0.s8 %v395
    %v397 = vperm.slane %v391, %v396
    %v399 = vunpack.c.l.s4 1934713408
    %v400 = vunpack.c.0.s8 %v399
    %v401 = vperm.slane %v393, %v400
    %v402 = vrot.slane %v385, 4
    %v403 = vsel %vm298, 0.0, %v402
    %v404 = vrot.slane %v389, 4
    %v405 = vsel %vm298, 0.0, %v404
    %v406 = vrot.slane %v397, 4
    %v407 = vsel %vm298, 0.0, %v406
    %v408 = vrot.slane %v401, 4
    %v409 = vsel %vm298, 0.0, %v408
    %v410 = vsel %vm298, %v348, %v329
    %v412 = vunpack.c.l.s4 1983009808
    %v413 = vunpack.c.0.s8 %v412
    %v414 = vperm.slane %v410, %v413
    %v415 = vrot.slane %v349, 4
    %v416 = vsel %vm298, %v415, %v347
    %v418 = vunpack.c.l.s4 1983009808
    %v419 = vunpack.c.0.s8 %v418
    %v420 = vperm.slane %v416, %v419
    %v421 = vsel %vm298, %v352, %v341
    %v423 = vunpack.c.l.s4 1983009808
    %v424 = vunpack.c.0.s8 %v423
    %v425 = vperm.slane %v421, %v424
    %v426 = vrot.slane %v353, 4
    %v427 = vsel %vm298, %v426, %v351
    %v429 = vunpack.c.l.s4 1983009808
    %v430 = vunpack.c.0.s8 %v429
    %v431 = vperm.slane %v427, %v430
    %v432 = vrot.slane %v420, 4
    %v433 = vsel %vm298, %v432, %v414
    %v434 = vrot.slane %v414, 4
    %v435 = vsel %vm298, %v420, %v434
    %v437 = vunpack.c.l.s4 1934713408
    %v438 = vunpack.c.0.s8 %v437
    %v439 = vperm.slane %v433, %v438
    %v441 = vunpack.c.l.s4 1934713408
    %v442 = vunpack.c.0.s8 %v441
    %v443 = vperm.slane %v435, %v442
    %v444 = vrot.slane %v431, 4
    %v445 = vsel %vm298, %v444, %v425
    %v446 = vrot.slane %v425, 4
    %v447 = vsel %vm298, %v431, %v446
    %v449 = vunpack.c.l.s4 1934713408
    %v450 = vunpack.c.0.s8 %v449
    %v451 = vperm.slane %v445, %v450
    %v453 = vunpack.c.l.s4 1934713408
    %v454 = vunpack.c.0.s8 %v453
    %v455 = vperm.slane %v447, %v454
    %v456 = vrot.slane %v451, 4
    %v457 = vsel %vm298, %v456, %v439
    %v458 = vrot.slane %v439, 4
    %v459 = vsel %vm298, %v451, %v458
    %v460 = vrot.slane %v455, 4
    %v461 = vsel %vm298, %v460, %v443
    %v462 = vrot.slane %v443, 4
    %v463 = vsel %vm298, %v455, %v462
    %v464 = vsel %vm298, %v404, %v385
    %v466 = vunpack.c.l.s4 1983009808
    %v467 = vunpack.c.0.s8 %v466
    %v468 = vperm.slane %v464, %v467
    %v469 = vrot.slane %v405, 4
    %v470 = vsel %vm298, %v469, %v403
    %v472 = vunpack.c.l.s4 1983009808
    %v473 = vunpack.c.0.s8 %v472
    %v474 = vperm.slane %v470, %v473
    %v475 = vsel %vm298, %v408, %v397
    %v477 = vunpack.c.l.s4 1983009808
    %v478 = vunpack.c.0.s8 %v477
    %v479 = vperm.slane %v475, %v478
    %v480 = vrot.slane %v409, 4
    %v481 = vsel %vm298, %v480, %v407
    %v483 = vunpack.c.l.s4 1983009808
    %v484 = vunpack.c.0.s8 %v483
    %v485 = vperm.slane %v481, %v484
    %v486 = vrot.slane %v474, 4
    %v487 = vsel %vm298, %v486, %v468
    %v488 = vrot.slane %v468, 4
    %v489 = vsel %vm298, %v474, %v488
    %v491 = vunpack.c.l.s4 1934713408
    %v492 = vunpack.c.0.s8 %v491
    %v493 = vperm.slane %v487, %v492
    %v495 = vunpack.c.l.s4 1934713408
    %v496 = vunpack.c.0.s8 %v495
    %v497 = vperm.slane %v489, %v496
    %v498 = vrot.slane %v485, 4
    %v499 = vsel %vm298, %v498, %v479
    %v500 = vrot.slane %v479, 4
    %v501 = vsel %vm298, %v485, %v500
    %v503 = vunpack.c.l.s4 1934713408
    %v504 = vunpack.c.0.s8 %v503
    %v505 = vperm.slane %v499, %v504
    %v507 = vunpack.c.l.s4 1934713408
    %v508 = vunpack.c.0.s8 %v507
    %v509 = vperm.slane %v501, %v508
    %v510 = vrot.slane %v505, 4
    %v511 = vsel %vm298, %v510, %v493
    %v512 = vrot.slane %v493, 4
    %v513 = vsel %vm298, %v505, %v512
    %v514 = vrot.slane %v509, 4
    %v515 = vsel %vm298, %v514, %v497
    %v516 = vrot.slane %v497, 4
    %v517 = vsel %vm298, %v509, %v516
    %v518 = vpack.c.bf16 %v457, %v457
    %v519 = vpack.c.bf16 %v459, %v459
    %v520 = vpack.c.bf16 %v461, %v461
    %v521 = vpack.c.bf16 %v463, %v463
    %v522 = vpack.c.bf16 %v511, %v511
    %v523 = vpack.c.bf16 %v513, %v513
    %v524 = vpack.c.bf16 %v515, %v515
    %v525 = vpack.c.bf16 %v517, %v517
    %528 = vrot.lane.b32.xlu0 %v243, 120
    %v529 = vpop.permute.xlu0 %528
    %530 = vrot.lane.b32.xlu0 %v245, 120
    %v531 = vpop.permute.xlu0 %530
    %534 = vrot.lane.b32.xlu0 %v243, 112
    %v535 = vpop.permute.xlu0 %534
    %536 = vrot.lane.b32.xlu0 %v245, 112
    %v537 = vpop.permute.xlu0 %536
    %540 = vrot.lane.b32.xlu0 %v243, 104
    %v541 = vpop.permute.xlu0 %540
    %542 = vrot.lane.b32.xlu0 %v245, 104
    %v543 = vpop.permute.xlu0 %542
    %v546 = vrot.slane %v535, 4
    %v547 = vsel %vm298, %v546, %v243
    %v548 = vrot.slane %v243, 4
    %v549 = vsel %vm298, %v535, %v548
    %v551 = vunpack.c.l.s4 1983009808
    %v552 = vunpack.c.0.s8 %v551
    %v553 = vperm.slane %v547, %v552
    %v555 = vunpack.c.l.s4 1983009808
    %v556 = vunpack.c.0.s8 %v555
    %v557 = vperm.slane %v549, %v556
    %v558 = vrot.slane %v541, 4
    %v559 = vsel %vm298, %v558, %v529
    %v560 = vrot.slane %v529, 4
    %v561 = vsel %vm298, %v541, %v560
    %v563 = vunpack.c.l.s4 1983009808
    %v564 = vunpack.c.0.s8 %v563
    %v565 = vperm.slane %v559, %v564
    %v567 = vunpack.c.l.s4 1983009808
    %v568 = vunpack.c.0.s8 %v567
    %v569 = vperm.slane %v561, %v568
    %v570 = vrot.slane %v565, 4
    %v571 = vsel %vm298, %v570, %v553
    %v572 = vrot.slane %v553, 4
    %v573 = vsel %vm298, %v565, %v572
    %v575 = vunpack.c.l.s4 1934713408
    %v576 = vunpack.c.0.s8 %v575
    %v577 = vperm.slane %v571, %v576
    %v579 = vunpack.c.l.s4 1934713408
    %v580 = vunpack.c.0.s8 %v579
    %v581 = vperm.slane %v573, %v580
    %v582 = vrot.slane %v569, 4
    %v583 = vsel %vm298, %v582, %v557
    %v584 = vrot.slane %v557, 4
    %v585 = vsel %vm298, %v569, %v584
    %v587 = vunpack.c.l.s4 1934713408
    %v588 = vunpack.c.0.s8 %v587
    %v589 = vperm.slane %v583, %v588
    %v591 = vunpack.c.l.s4 1934713408
    %v592 = vunpack.c.0.s8 %v591
    %v593 = vperm.slane %v585, %v592
    %v594 = vrot.slane %v577, 4
    %v595 = vsel %vm298, 0.0, %v594
    %v596 = vrot.slane %v581, 4
    %v597 = vsel %vm298, 0.0, %v596
    %v598 = vrot.slane %v589, 4
    %v599 = vsel %vm298, 0.0, %v598
    %v600 = vrot.slane %v593, 4
    %v601 = vsel %vm298, 0.0, %v600
    %v602 = vrot.slane %v537, 4
    %v603 = vsel %vm298, %v602, %v245
    %v604 = vrot.slane %v245, 4
    %v605 = vsel %vm298, %v537, %v604
    %v607 = vunpack.c.l.s4 1983009808
    %v608 = vunpack.c.0.s8 %v607
    %v609 = vperm.slane %v603, %v608
    %v611 = vunpack.c.l.s4 1983009808
    %v612 = vunpack.c.0.s8 %v611
    %v613 = vperm.slane %v605, %v612
    %v614 = vrot.slane %v543, 4
    %v615 = vsel %vm298, %v614, %v531
    %v616 = vrot.slane %v531, 4
    %v617 = vsel %vm298, %v543, %v616
    %v619 = vunpack.c.l.s4 1983009808
    %v620 = vunpack.c.0.s8 %v619
    %v621 = vperm.slane %v615, %v620
    %v623 = vunpack.c.l.s4 1983009808
    %v624 = vunpack.c.0.s8 %v623
    %v625 = vperm.slane %v617, %v624
    %v626 = vrot.slane %v621, 4
    %v627 = vsel %vm298, %v626, %v609
    %v628 = vrot.slane %v609, 4
    %v629 = vsel %vm298, %v621, %v628
    %v631 = vunpack.c.l.s4 1934713408
    %v632 = vunpack.c.0.s8 %v631
    %v633 = vperm.slane %v627, %v632
    %v635 = vunpack.c.l.s4 1934713408
    %v636 = vunpack.c.0.s8 %v635
    %v637 = vperm.slane %v629, %v636
    %v638 = vrot.slane %v625, 4
    %v639 = vsel %vm298, %v638, %v613
    %v640 = vrot.slane %v613, 4
    %v641 = vsel %vm298, %v625, %v640
    %v643 = vunpack.c.l.s4 1934713408
    %v644 = vunpack.c.0.s8 %v643
    %v645 = vperm.slane %v639, %v644
    %v647 = vunpack.c.l.s4 1934713408
    %v648 = vunpack.c.0.s8 %v647
    %v649 = vperm.slane %v641, %v648
    %v650 = vrot.slane %v633, 4
    %v651 = vsel %vm298, 0.0, %v650
    %v652 = vrot.slane %v637, 4
    %v653 = vsel %vm298, 0.0, %v652
    %v654 = vrot.slane %v645, 4
    %v655 = vsel %vm298, 0.0, %v654
    %v656 = vrot.slane %v649, 4
    %v657 = vsel %vm298, 0.0, %v656
    %v658 = vsel %vm298, %v596, %v577
    %v660 = vunpack.c.l.s4 1983009808
    %v661 = vunpack.c.0.s8 %v660
    %v662 = vperm.slane %v658, %v661
    %v663 = vrot.slane %v597, 4
    %v664 = vsel %vm298, %v663, %v595
    %v666 = vunpack.c.l.s4 1983009808
    %v667 = vunpack.c.0.s8 %v666
    %v668 = vperm.slane %v664, %v667
    %v669 = vsel %vm298, %v600, %v589
    %v671 = vunpack.c.l.s4 1983009808
    %v672 = vunpack.c.0.s8 %v671
    %v673 = vperm.slane %v669, %v672
    %v674 = vrot.slane %v601, 4
    %v675 = vsel %vm298, %v674, %v599
    %v677 = vunpack.c.l.s4 1983009808
    %v678 = vunpack.c.0.s8 %v677
    %v679 = vperm.slane %v675, %v678
    %v680 = vrot.slane %v668, 4
    %v681 = vsel %vm298, %v680, %v662
    %v682 = vrot.slane %v662, 4
    %v683 = vsel %vm298, %v668, %v682
    %v685 = vunpack.c.l.s4 1934713408
    %v686 = vunpack.c.0.s8 %v685
    %v687 = vperm.slane %v681, %v686
    %v689 = vunpack.c.l.s4 1934713408
    %v690 = vunpack.c.0.s8 %v689
    %v691 = vperm.slane %v683, %v690
    %v692 = vrot.slane %v679, 4
    %v693 = vsel %vm298, %v692, %v673
    %v694 = vrot.slane %v673, 4
    %v695 = vsel %vm298, %v679, %v694
    %v697 = vunpack.c.l.s4 1934713408
    %v698 = vunpack.c.0.s8 %v697
    %v699 = vperm.slane %v693, %v698
    %v701 = vunpack.c.l.s4 1934713408
    %v702 = vunpack.c.0.s8 %v701
    %v703 = vperm.slane %v695, %v702
    %v704 = vrot.slane %v699, 4
    %v705 = vsel %vm298, %v704, %v687
    %v706 = vrot.slane %v687, 4
    %v707 = vsel %vm298, %v699, %v706
    %v708 = vrot.slane %v703, 4
    %v709 = vsel %vm298, %v708, %v691
    %v710 = vrot.slane %v691, 4
    %v711 = vsel %vm298, %v703, %v710
    %v712 = vsel %vm298, %v652, %v633
    %v714 = vunpack.c.l.s4 1983009808
    %v715 = vunpack.c.0.s8 %v714
    %v716 = vperm.slane %v712, %v715
    %v717 = vrot.slane %v653, 4
    %v718 = vsel %vm298, %v717, %v651
    %v720 = vunpack.c.l.s4 1983009808
    %v721 = vunpack.c.0.s8 %v720
    %v722 = vperm.slane %v718, %v721
    %v723 = vsel %vm298, %v656, %v645
    %v725 = vunpack.c.l.s4 1983009808
    %v726 = vunpack.c.0.s8 %v725
    %v727 = vperm.slane %v723, %v726
    %v728 = vrot.slane %v657, 4
    %v729 = vsel %vm298, %v728, %v655
    %v731 = vunpack.c.l.s4 1983009808
    %v732 = vunpack.c.0.s8 %v731
    %v733 = vperm.slane %v729, %v732
    %v734 = vrot.slane %v722, 4
    %v735 = vsel %vm298, %v734, %v716
    %v736 = vrot.slane %v716, 4
    %v737 = vsel %vm298, %v722, %v736
    %v739 = vunpack.c.l.s4 1934713408
    %v740 = vunpack.c.0.s8 %v739
    %v741 = vperm.slane %v735, %v740
    %v743 = vunpack.c.l.s4 1934713408
    %v744 = vunpack.c.0.s8 %v743
    %v745 = vperm.slane %v737, %v744
    %v746 = vrot.slane %v733, 4
    %v747 = vsel %vm298, %v746, %v727
    %v748 = vrot.slane %v727, 4
    %v749 = vsel %vm298, %v733, %v748
    %v751 = vunpack.c.l.s4 1934713408
    %v752 = vunpack.c.0.s8 %v751
    %v753 = vperm.slane %v747, %v752
    %v755 = vunpack.c.l.s4 1934713408
    %v756 = vunpack.c.0.s8 %v755
    %v757 = vperm.slane %v749, %v756
    %v758 = vrot.slane %v753, 4
    %v759 = vsel %vm298, %v758, %v741
    %v760 = vrot.slane %v741, 4
    %v761 = vsel %vm298, %v753, %v760
    %v762 = vrot.slane %v757, 4
    %v763 = vsel %vm298, %v762, %v745
    %v764 = vrot.slane %v745, 4
    %v765 = vsel %vm298, %v757, %v764
    %v766 = vpack.c.bf16 %v705, %v705
    %v767 = vpack.c.bf16 %v707, %v707
    %v768 = vpack.c.bf16 %v709, %v709
    %v769 = vpack.c.bf16 %v711, %v711
    %v770 = vpack.c.bf16 %v759, %v759
    %v771 = vpack.c.bf16 %v761, %v761
    %v772 = vpack.c.bf16 %v763, %v763
    %v773 = vpack.c.bf16 %v765, %v765
    %776 = vrot.lane.b32.xlu0 %v273, 120
    %v777 = vpop.permute.xlu0 %776
    %778 = vrot.lane.b32.xlu0 %v275, 120
    %v779 = vpop.permute.xlu0 %778
    %782 = vrot.lane.b32.xlu0 %v273, 112
    %v783 = vpop.permute.xlu0 %782
    %784 = vrot.lane.b32.xlu0 %v275, 112
    %v785 = vpop.permute.xlu0 %784
    %788 = vrot.lane.b32.xlu0 %v273, 104
    %v789 = vpop.permute.xlu0 %788
    %790 = vrot.lane.b32.xlu0 %v275, 104
    %v791 = vpop.permute.xlu0 %790
    %v794 = vrot.slane %v783, 4
    %v795 = vsel %vm298, %v794, %v273
    %v796 = vrot.slane %v273, 4
    %v797 = vsel %vm298, %v783, %v796
    %v799 = vunpack.c.l.s4 1983009808
    %v800 = vunpack.c.0.s8 %v799
    %v801 = vperm.slane %v795, %v800
    %v803 = vunpack.c.l.s4 1983009808
    %v804 = vunpack.c.0.s8 %v803
    %v805 = vperm.slane %v797, %v804
    %v806 = vrot.slane %v789, 4
    %v807 = vsel %vm298, %v806, %v777
    %v808 = vrot.slane %v777, 4
    %v809 = vsel %vm298, %v789, %v808
    %v811 = vunpack.c.l.s4 1983009808
    %v812 = vunpack.c.0.s8 %v811
    %v813 = vperm.slane %v807, %v812
    %v815 = vunpack.c.l.s4 1983009808
    %v816 = vunpack.c.0.s8 %v815
    %v817 = vperm.slane %v809, %v816
    %v818 = vrot.slane %v813, 4
    %v819 = vsel %vm298, %v818, %v801
    %v820 = vrot.slane %v801, 4
    %v821 = vsel %vm298, %v813, %v820
    %v823 = vunpack.c.l.s4 1934713408
    %v824 = vunpack.c.0.s8 %v823
    %v825 = vperm.slane %v819, %v824
    %v827 = vunpack.c.l.s4 1934713408
    %v828 = vunpack.c.0.s8 %v827
    %v829 = vperm.slane %v821, %v828
    %v830 = vrot.slane %v817, 4
    %v831 = vsel %vm298, %v830, %v805
    %v832 = vrot.slane %v805, 4
    %v833 = vsel %vm298, %v817, %v832
    %v835 = vunpack.c.l.s4 1934713408
    %v836 = vunpack.c.0.s8 %v835
    %v837 = vperm.slane %v831, %v836
    %v839 = vunpack.c.l.s4 1934713408
    %v840 = vunpack.c.0.s8 %v839
    %v841 = vperm.slane %v833, %v840
    %v842 = vrot.slane %v825, 4
    %v843 = vsel %vm298, 0.0, %v842
    %v844 = vrot.slane %v829, 4
    %v845 = vsel %vm298, 0.0, %v844
    %v846 = vrot.slane %v837, 4
    %v847 = vsel %vm298, 0.0, %v846
    %v848 = vrot.slane %v841, 4
    %v849 = vsel %vm298, 0.0, %v848
    %v850 = vrot.slane %v785, 4
    %v851 = vsel %vm298, %v850, %v275
    %v852 = vrot.slane %v275, 4
    %v853 = vsel %vm298, %v785, %v852
    %v855 = vunpack.c.l.s4 1983009808
    %v856 = vunpack.c.0.s8 %v855
    %v857 = vperm.slane %v851, %v856
    %v859 = vunpack.c.l.s4 1983009808
    %v860 = vunpack.c.0.s8 %v859
    %v861 = vperm.slane %v853, %v860
    %v862 = vrot.slane %v791, 4
    %v863 = vsel %vm298, %v862, %v779
    %v864 = vrot.slane %v779, 4
    %v865 = vsel %vm298, %v791, %v864
    %v867 = vunpack.c.l.s4 1983009808
    %v868 = vunpack.c.0.s8 %v867
    %v869 = vperm.slane %v863, %v868
    %v871 = vunpack.c.l.s4 1983009808
    %v872 = vunpack.c.0.s8 %v871
    %v873 = vperm.slane %v865, %v872
    %v874 = vrot.slane %v869, 4
    %v875 = vsel %vm298, %v874, %v857
    %v876 = vrot.slane %v857, 4
    %v877 = vsel %vm298, %v869, %v876
    %v879 = vunpack.c.l.s4 1934713408
    %v880 = vunpack.c.0.s8 %v879
    %v881 = vperm.slane %v875, %v880
    %v883 = vunpack.c.l.s4 1934713408
    %v884 = vunpack.c.0.s8 %v883
    %v885 = vperm.slane %v877, %v884
    %v886 = vrot.slane %v873, 4
    %v887 = vsel %vm298, %v886, %v861
    %v888 = vrot.slane %v861, 4
    %v889 = vsel %vm298, %v873, %v888
    %v891 = vunpack.c.l.s4 1934713408
    %v892 = vunpack.c.0.s8 %v891
    %v893 = vperm.slane %v887, %v892
    %v895 = vunpack.c.l.s4 1934713408
    %v896 = vunpack.c.0.s8 %v895
    %v897 = vperm.slane %v889, %v896
    %v898 = vrot.slane %v881, 4
    %v899 = vsel %vm298, 0.0, %v898
    %v900 = vrot.slane %v885, 4
    %v901 = vsel %vm298, 0.0, %v900
    %v902 = vrot.slane %v893, 4
    %v903 = vsel %vm298, 0.0, %v902
    %v904 = vrot.slane %v897, 4
    %v905 = vsel %vm298, 0.0, %v904
    %v906 = vsel %vm298, %v844, %v825
    %v908 = vunpack.c.l.s4 1983009808
    %v909 = vunpack.c.0.s8 %v908
    %v910 = vperm.slane %v906, %v909
    %v911 = vrot.slane %v845, 4
    %v912 = vsel %vm298, %v911, %v843
    %v914 = vunpack.c.l.s4 1983009808
    %v915 = vunpack.c.0.s8 %v914
    %v916 = vperm.slane %v912, %v915
    %v917 = vsel %vm298, %v848, %v837
    %v919 = vunpack.c.l.s4 1983009808
    %v920 = vunpack.c.0.s8 %v919
    %v921 = vperm.slane %v917, %v920
    %v922 = vrot.slane %v849, 4
    %v923 = vsel %vm298, %v922, %v847
    %v925 = vunpack.c.l.s4 1983009808
    %v926 = vunpack.c.0.s8 %v925
    %v927 = vperm.slane %v923, %v926
    %v928 = vrot.slane %v916, 4
    %v929 = vsel %vm298, %v928, %v910
    %v930 = vrot.slane %v910, 4
    %v931 = vsel %vm298, %v916, %v930
    %v933 = vunpack.c.l.s4 1934713408
    %v934 = vunpack.c.0.s8 %v933
    %v935 = vperm.slane %v929, %v934
    %v937 = vunpack.c.l.s4 1934713408
    %v938 = vunpack.c.0.s8 %v937
    %v939 = vperm.slane %v931, %v938
    %v940 = vrot.slane %v927, 4
    %v941 = vsel %vm298, %v940, %v921
    %v942 = vrot.slane %v921, 4
    %v943 = vsel %vm298, %v927, %v942
    %v945 = vunpack.c.l.s4 1934713408
    %v946 = vunpack.c.0.s8 %v945
    %v947 = vperm.slane %v941, %v946
    %v949 = vunpack.c.l.s4 1934713408
    %v950 = vunpack.c.0.s8 %v949
    %v951 = vperm.slane %v943, %v950
    %v952 = vrot.slane %v947, 4
    %v953 = vsel %vm298, %v952, %v935
    %v954 = vrot.slane %v935, 4
    %v955 = vsel %vm298, %v947, %v954
    %v956 = vrot.slane %v951, 4
    %v957 = vsel %vm298, %v956, %v939
    %v958 = vrot.slane %v939, 4
    %v959 = vsel %vm298, %v951, %v958
    %v960 = vsel %vm298, %v900, %v881
    %v962 = vunpack.c.l.s4 1983009808
    %v963 = vunpack.c.0.s8 %v962
    %v964 = vperm.slane %v960, %v963
    %v965 = vrot.slane %v901, 4
    %v966 = vsel %vm298, %v965, %v899
    %v968 = vunpack.c.l.s4 1983009808
    %v969 = vunpack.c.0.s8 %v968
    %v970 = vperm.slane %v966, %v969
    %v971 = vsel %vm298, %v904, %v893
    %v973 = vunpack.c.l.s4 1983009808
    %v974 = vunpack.c.0.s8 %v973
    %v975 = vperm.slane %v971, %v974
    %v976 = vrot.slane %v905, 4
    %v977 = vsel %vm298, %v976, %v903
    %v979 = vunpack.c.l.s4 1983009808
    %v980 = vunpack.c.0.s8 %v979
    %v981 = vperm.slane %v977, %v980
    %v982 = vrot.slane %v970, 4
    %v983 = vsel %vm298, %v982, %v964
    %v984 = vrot.slane %v964, 4
    %v985 = vsel %vm298, %v970, %v984
    %v987 = vunpack.c.l.s4 1934713408
    %v988 = vunpack.c.0.s8 %v987
    %v989 = vperm.slane %v983, %v988
    %v991 = vunpack.c.l.s4 1934713408
    %v992 = vunpack.c.0.s8 %v991
    %v993 = vperm.slane %v985, %v992
    %v994 = vrot.slane %v981, 4
    %v995 = vsel %vm298, %v994, %v975
    %v996 = vrot.slane %v975, 4
    %v997 = vsel %vm298, %v981, %v996
    %v999 = vunpack.c.l.s4 1934713408
    %v1000 = vunpack.c.0.s8 %v999
    %v1001 = vperm.slane %v995, %v1000
    %v1003 = vunpack.c.l.s4 1934713408
    %v1004 = vunpack.c.0.s8 %v1003
    %v1005 = vperm.slane %v997, %v1004
    %v1006 = vrot.slane %v1001, 4
    %v1007 = vsel %vm298, %v1006, %v989
    %v1008 = vrot.slane %v989, 4
    %v1009 = vsel %vm298, %v1001, %v1008
    %v1010 = vrot.slane %v1005, 4
    %v1011 = vsel %vm298, %v1010, %v993
    %v1012 = vrot.slane %v993, 4
    %v1013 = vsel %vm298, %v1005, %v1012
    %v1014 = vpack.c.bf16 %v953, %v953
    %v1015 = vpack.c.bf16 %v955, %v955
    %v1016 = vpack.c.bf16 %v957, %v957
    %v1017 = vpack.c.bf16 %v959, %v959
    %v1018 = vpack.c.bf16 %v1007, %v1007
    %v1019 = vpack.c.bf16 %v1009, %v1009
    %v1020 = vpack.c.bf16 %v1011, %v1011
    %v1021 = vpack.c.bf16 %v1013, %v1013
    %v1022 = vld [vmem:[#allocation2] sm:$0x1]
    %v1023 = vld [vmem:[#allocation2 + $0x1] sm:$0x1]
    %vm1024 = vcmp.gt.f32.partialorder %v1022, 0.0
    %vm1025 = vcmp.gt.f32.partialorder %v1023, 0.0
    %v1026 = vsel %vm1024, -1e+09, 0.0
    %v1027 = vsel %vm1025, -1e+09, 0.0
    %vm1028 = vcmask 64512
    %v1030 = vsel %vm1028, %v518, 0
    %v1033 = vsel %vm1028, %v766, 0
    %1035 = vmatpush.bf16.xpose.msra.mxu0 0
    %1036 = vmatpush.bf16.xpose.msra.mxu0 0
    %1037 = vmatpush.bf16.xpose.msra.mxu0 0
    %1038 = vmatpush.bf16.xpose.msra.mxu0 0
    %1039 = vmatpush.bf16.xpose.msra.mxu0 0
    %1040 = vmatpush.bf16.xpose.msra.mxu0 0
    %1041 = vmatpush.bf16.xpose.msra.mxu0 0
    %1042 = vmatpush.bf16.xpose.msra.mxu0 %v1033
    %1043 = vmatmul.bf16.gmra.mxu0 %v1030
    %v1044 = vpop.f32.mrf.mxu0
    %v1045 = vadd.f32 0.0, %v1044
    %v1046 = vpop.f32.mrf.mxu0
    %1047 = vdwg.mxu0
    %v1049 = vsel %vm1028, %v519, 0
    %v1052 = vsel %vm1028, %v767, 0
    %1054 = vmatpush.bf16.xpose.msra.mxu0 0
    %1055 = vmatpush.bf16.xpose.msra.mxu0 0
    %1056 = vmatpush.bf16.xpose.msra.mxu0 0
    %1057 = vmatpush.bf16.xpose.msra.mxu0 0
    %1058 = vmatpush.bf16.xpose.msra.mxu0 0
    %1059 = vmatpush.bf16.xpose.msra.mxu0 0
    %1060 = vmatpush.bf16.xpose.msra.mxu0 0
    %1061 = vmatpush.bf16.xpose.msra.mxu0 %v1052
    %1062 = vmatmul.bf16.gmra.mxu0 %v1049
    %v1063 = vpop.f32.mrf.mxu0
    %v1064 = vadd.f32 0.0, %v1063
    %v1065 = vpop.f32.mrf.mxu0
    %1066 = vdwg.mxu0
    %v1068 = vsel %vm1028, %v520, 0
    %v1071 = vsel %vm1028, %v768, 0
    %1073 = vmatpush.bf16.xpose.msra.mxu0 0
    %1074 = vmatpush.bf16.xpose.msra.mxu0 0
    %1075 = vmatpush.bf16.xpose.msra.mxu0 0
    %1076 = vmatpush.bf16.xpose.msra.mxu0 0
    %1077 = vmatpush.bf16.xpose.msra.mxu0 0
    %1078 = vmatpush.bf16.xpose.msra.mxu0 0
    %1079 = vmatpush.bf16.xpose.msra.mxu0 0
    %1080 = vmatpush.bf16.xpose.msra.mxu0 %v1071
    %1081 = vmatmul.bf16.gmra.mxu0 %v1068
    %v1082 = vpop.f32.mrf.mxu0
    %v1083 = vadd.f32 0.0, %v1082
    %v1084 = vpop.f32.mrf.mxu0
    %1085 = vdwg.mxu0
    %v1087 = vsel %vm1028, %v521, 0
    %v1090 = vsel %vm1028, %v769, 0
    %1092 = vmatpush.bf16.xpose.msra.mxu0 0
    %1093 = vmatpush.bf16.xpose.msra.mxu0 0
    %1094 = vmatpush.bf16.xpose.msra.mxu0 0
    %1095 = vmatpush.bf16.xpose.msra.mxu0 0
    %1096 = vmatpush.bf16.xpose.msra.mxu0 0
    %1097 = vmatpush.bf16.xpose.msra.mxu0 0
    %1098 = vmatpush.bf16.xpose.msra.mxu0 0
    %1099 = vmatpush.bf16.xpose.msra.mxu0 %v1090
    %1100 = vmatmul.bf16.gmra.mxu0 %v1087
    %v1101 = vpop.f32.mrf.mxu0
    %v1102 = vadd.f32 0.0, %v1101
    %v1103 = vpop.f32.mrf.mxu0
    %1104 = vdwg.mxu0
    %v1106 = vsel %vm1028, %v522, 0
    %v1109 = vsel %vm1028, %v770, 0
    %1111 = vmatpush.bf16.xpose.msra.mxu0 0
    %1112 = vmatpush.bf16.xpose.msra.mxu0 0
    %1113 = vmatpush.bf16.xpose.msra.mxu0 0
    %1114 = vmatpush.bf16.xpose.msra.mxu0 0
    %1115 = vmatpush.bf16.xpose.msra.mxu0 0
    %1116 = vmatpush.bf16.xpose.msra.mxu0 0
    %1117 = vmatpush.bf16.xpose.msra.mxu0 0
    %1118 = vmatpush.bf16.xpose.msra.mxu0 %v1109
    %1119 = vmatmul.bf16.gmra.mxu0 %v1106
    %v1120 = vpop.f32.mrf.mxu0
    %v1121 = vadd.f32 0.0, %v1120
    %v1122 = vpop.f32.mrf.mxu0
    %1123 = vdwg.mxu0
    %v1125 = vsel %vm1028, %v523, 0
    %v1128 = vsel %vm1028, %v771, 0
    %1130 = vmatpush.bf16.xpose.msra.mxu0 0
    %1131 = vmatpush.bf16.xpose.msra.mxu0 0
    %1132 = vmatpush.bf16.xpose.msra.mxu0 0
    %1133 = vmatpush.bf16.xpose.msra.mxu0 0
    %1134 = vmatpush.bf16.xpose.msra.mxu0 0
    %1135 = vmatpush.bf16.xpose.msra.mxu0 0
    %1136 = vmatpush.bf16.xpose.msra.mxu0 0
    %1137 = vmatpush.bf16.xpose.msra.mxu0 %v1128
    %1138 = vmatmul.bf16.gmra.mxu0 %v1125
    %v1139 = vpop.f32.mrf.mxu0
    %v1140 = vadd.f32 0.0, %v1139
    %v1141 = vpop.f32.mrf.mxu0
    %1142 = vdwg.mxu0
    %v1144 = vsel %vm1028, %v524, 0
    %v1147 = vsel %vm1028, %v772, 0
    %1149 = vmatpush.bf16.xpose.msra.mxu0 0
    %1150 = vmatpush.bf16.xpose.msra.mxu0 0
    %1151 = vmatpush.bf16.xpose.msra.mxu0 0
    %1152 = vmatpush.bf16.xpose.msra.mxu0 0
    %1153 = vmatpush.bf16.xpose.msra.mxu0 0
    %1154 = vmatpush.bf16.xpose.msra.mxu0 0
    %1155 = vmatpush.bf16.xpose.msra.mxu0 0
    %1156 = vmatpush.bf16.xpose.msra.mxu0 %v1147
    %1157 = vmatmul.bf16.gmra.mxu0 %v1144
    %v1158 = vpop.f32.mrf.mxu0
    %v1159 = vadd.f32 0.0, %v1158
    %v1160 = vpop.f32.mrf.mxu0
    %1161 = vdwg.mxu0
    %v1163 = vsel %vm1028, %v525, 0
    %v1166 = vsel %vm1028, %v773, 0
    %1168 = vmatpush.bf16.xpose.msra.mxu0 0
    %1169 = vmatpush.bf16.xpose.msra.mxu0 0
    %1170 = vmatpush.bf16.xpose.msra.mxu0 0
    %1171 = vmatpush.bf16.xpose.msra.mxu0 0
    %1172 = vmatpush.bf16.xpose.msra.mxu0 0
    %1173 = vmatpush.bf16.xpose.msra.mxu0 0
    %1174 = vmatpush.bf16.xpose.msra.mxu0 0
    %1175 = vmatpush.bf16.xpose.msra.mxu0 %v1166
    %1176 = vmatmul.bf16.gmra.mxu0 %v1163
    %v1177 = vpop.f32.mrf.mxu0
    %v1178 = vadd.f32 0.0, %v1177
    %v1179 = vpop.f32.mrf.mxu0
    %1180 = vdwg.mxu0
    %v1183 = vperm.slane %v1026, 0
    %v1184 = vperm.slane %v1027, 0
    %v1187 = vadd.f32 %v1045, %v1183
    %v1188 = vadd.f32 %v1064, %v1183
    %v1189 = vadd.f32 %v1083, %v1183
    %v1190 = vadd.f32 %v1102, %v1183
    %v1191 = vadd.f32 %v1121, %v1184
    %v1192 = vadd.f32 %v1140, %v1184
    %v1193 = vadd.f32 %v1159, %v1184
    %v1194 = vadd.f32 %v1178, %v1184
    %v1195 = vsel %vm1028, %v1187, -inf
    %1196 = vmax.xlane.f32.xlu0 %v1195
    %v1197 = vpop.xlane.xlu0 %1196
    %v1198 = vsel %vm1028, %v1188, -inf
    %1199 = vmax.xlane.f32.xlu0 %v1198
    %v1200 = vpop.xlane.xlu0 %1199
    %v1201 = vsel %vm1028, %v1189, -inf
    %1202 = vmax.xlane.f32.xlu0 %v1201
    %v1203 = vpop.xlane.xlu0 %1202
    %v1204 = vsel %vm1028, %v1190, -inf
    %1205 = vmax.xlane.f32.xlu0 %v1204
    %v1206 = vpop.xlane.xlu0 %1205
    %v1207 = vsel %vm1028, %v1191, -inf
    %1208 = vmax.xlane.f32.xlu0 %v1207
    %v1209 = vpop.xlane.xlu0 %1208
    %v1210 = vsel %vm1028, %v1192, -inf
    %1211 = vmax.xlane.f32.xlu0 %v1210
    %v1212 = vpop.xlane.xlu0 %1211
    %v1213 = vsel %vm1028, %v1193, -inf
    %1214 = vmax.xlane.f32.xlu0 %v1213
    %v1215 = vpop.xlane.xlu0 %1214
    %v1216 = vsel %vm1028, %v1194, -inf
    %1217 = vmax.xlane.f32.xlu0 %v1216
    %v1218 = vpop.xlane.xlu0 %1217
    %v1219 = vsub.f32 %v1187, %v1197
    %v1220 = vsub.f32 %v1188, %v1200
    %v1221 = vsub.f32 %v1189, %v1203
    %v1222 = vsub.f32 %v1190, %v1206
    %v1223 = vsub.f32 %v1191, %v1209
    %v1224 = vsub.f32 %v1192, %v1212
    %v1225 = vsub.f32 %v1193, %v1215
    %v1226 = vsub.f32 %v1194, %v1218
    %v1227 = vmul.f32 %v1219, 1.442695
    %v1228 = vpow.pop %v1227
    %v1229 = vmul.f32 %v1220, 1.442695
    %v1230 = vpow.pop %v1229
    %v1231 = vmul.f32 %v1221, 1.442695
    %v1232 = vpow.pop %v1231
    %v1233 = vmul.f32 %v1222, 1.442695
    %v1234 = vpow.pop %v1233
    %v1235 = vmul.f32 %v1223, 1.442695
    %v1236 = vpow.pop %v1235
    %v1237 = vmul.f32 %v1224, 1.442695
    %v1238 = vpow.pop %v1237
    %v1239 = vmul.f32 %v1225, 1.442695
    %v1240 = vpow.pop %v1239
    %v1241 = vmul.f32 %v1226, 1.442695
    %v1242 = vpow.pop %v1241
    %v1243 = vsel %vm1028, %v1228, 0.0
    %1244 = vadd.xlane.f32.xlu0 %v1243
    %v1245 = vpop.xlane.xlu0 %1244
    %v1246 = vsel %vm1028, %v1230, 0.0
    %1247 = vadd.xlane.f32.xlu0 %v1246
    %v1248 = vpop.xlane.xlu0 %1247
    %v1249 = vsel %vm1028, %v1232, 0.0
    %1250 = vadd.xlane.f32.xlu0 %v1249
    %v1251 = vpop.xlane.xlu0 %1250
    %v1252 = vsel %vm1028, %v1234, 0.0
    %1253 = vadd.xlane.f32.xlu0 %v1252
    %v1254 = vpop.xlane.xlu0 %1253
    %v1255 = vsel %vm1028, %v1236, 0.0
    %1256 = vadd.xlane.f32.xlu0 %v1255
    %v1257 = vpop.xlane.xlu0 %1256
    %v1258 = vsel %vm1028, %v1238, 0.0
    %1259 = vadd.xlane.f32.xlu0 %v1258
    %v1260 = vpop.xlane.xlu0 %1259
    %v1261 = vsel %vm1028, %v1240, 0.0
    %1262 = vadd.xlane.f32.xlu0 %v1261
    %v1263 = vpop.xlane.xlu0 %1262
    %v1264 = vsel %vm1028, %v1242, 0.0
    %1265 = vadd.xlane.f32.xlu0 %v1264
    %v1266 = vpop.xlane.xlu0 %1265
    %v1267 = vpack.c.bf16 %v1228, %v1228
    %v1268 = vpack.c.bf16 %v1230, %v1230
    %v1269 = vpack.c.bf16 %v1232, %v1232
    %v1270 = vpack.c.bf16 %v1234, %v1234
    %v1271 = vpack.c.bf16 %v1236, %v1236
    %v1272 = vpack.c.bf16 %v1238, %v1238
    %v1273 = vpack.c.bf16 %v1240, %v1240
    %v1274 = vpack.c.bf16 %v1242, %v1242
    %v1276 = vsel %vm1028, %v1267, 0
    %vm1278 = vcmask 1043456
    %v1280 = vsel %vm1278, %v1014, 0
    %1282 = vmatpush.bf16.msra.mxu0 0
    %1283 = vmatpush.bf16.msra.mxu0 0
    %1284 = vmatpush.bf16.msra.mxu0 0
    %1285 = vmatpush.bf16.msra.mxu0 0
    %1286 = vmatpush.bf16.msra.mxu0 0
    %1287 = vmatpush.bf16.msra.mxu0 0
    %1288 = vmatpush.bf16.msra.mxu0 0
    %1289 = vmatpush.bf16.msra.mxu0 %v1280
    %1290 = vmatmul.bf16.gmra.mxu0 %v1276
    %v1291 = vpop.f32.mrf.mxu0
    %v1292 = vadd.f32 0.0, %v1291
    %v1293 = vpop.f32.mrf.mxu0
    %1294 = vdwg.mxu0
    %v1296 = vsel %vm1028, %v1268, 0
    %v1299 = vsel %vm1278, %v1015, 0
    %1301 = vmatpush.bf16.msra.mxu0 0
    %1302 = vmatpush.bf16.msra.mxu0 0
    %1303 = vmatpush.bf16.msra.mxu0 0
    %1304 = vmatpush.bf16.msra.mxu0 0
    %1305 = vmatpush.bf16.msra.mxu0 0
    %1306 = vmatpush.bf16.msra.mxu0 0
    %1307 = vmatpush.bf16.msra.mxu0 0
    %1308 = vmatpush.bf16.msra.mxu0 %v1299
    %1309 = vmatmul.bf16.gmra.mxu0 %v1296
    %v1310 = vpop.f32.mrf.mxu0
    %v1311 = vadd.f32 0.0, %v1310
    %v1312 = vpop.f32.mrf.mxu0
    %1313 = vdwg.mxu0
    %v1315 = vsel %vm1028, %v1269, 0
    %v1318 = vsel %vm1278, %v1016, 0
    %1320 = vmatpush.bf16.msra.mxu0 0
    %1321 = vmatpush.bf16.msra.mxu0 0
    %1322 = vmatpush.bf16.msra.mxu0 0
    %1323 = vmatpush.bf16.msra.mxu0 0
    %1324 = vmatpush.bf16.msra.mxu0 0
    %1325 = vmatpush.bf16.msra.mxu0 0
    %1326 = vmatpush.bf16.msra.mxu0 0
    %1327 = vmatpush.bf16.msra.mxu0 %v1318
    %1328 = vmatmul.bf16.gmra.mxu0 %v1315
    %v1329 = vpop.f32.mrf.mxu0
    %v1330 = vadd.f32 0.0, %v1329
    %v1331 = vpop.f32.mrf.mxu0
    %1332 = vdwg.mxu0
    %v1334 = vsel %vm1028, %v1270, 0
    %v1337 = vsel %vm1278, %v1017, 0
    %1339 = vmatpush.bf16.msra.mxu0 0
    %1340 = vmatpush.bf16.msra.mxu0 0
    %1341 = vmatpush.bf16.msra.mxu0 0
    %1342 = vmatpush.bf16.msra.mxu0 0
    %1343 = vmatpush.bf16.msra.mxu0 0
    %1344 = vmatpush.bf16.msra.mxu0 0
    %1345 = vmatpush.bf16.msra.mxu0 0
    %1346 = vmatpush.bf16.msra.mxu0 %v1337
    %1347 = vmatmul.bf16.gmra.mxu0 %v1334
    %v1348 = vpop.f32.mrf.mxu0
    %v1349 = vadd.f32 0.0, %v1348
    %v1350 = vpop.f32.mrf.mxu0
    %1351 = vdwg.mxu0
    %v1353 = vsel %vm1028, %v1271, 0
    %v1356 = vsel %vm1278, %v1018, 0
    %1358 = vmatpush.bf16.msra.mxu0 0
    %1359 = vmatpush.bf16.msra.mxu0 0
    %1360 = vmatpush.bf16.msra.mxu0 0
    %1361 = vmatpush.bf16.msra.mxu0 0
    %1362 = vmatpush.bf16.msra.mxu0 0
    %1363 = vmatpush.bf16.msra.mxu0 0
    %1364 = vmatpush.bf16.msra.mxu0 0
    %1365 = vmatpush.bf16.msra.mxu0 %v1356
    %1366 = vmatmul.bf16.gmra.mxu0 %v1353
    %v1367 = vpop.f32.mrf.mxu0
    %v1368 = vadd.f32 0.0, %v1367
    %v1369 = vpop.f32.mrf.mxu0
    %1370 = vdwg.mxu0
    %v1372 = vsel %vm1028, %v1272, 0
    %v1375 = vsel %vm1278, %v1019, 0
    %1377 = vmatpush.bf16.msra.mxu0 0
    %1378 = vmatpush.bf16.msra.mxu0 0
    %1379 = vmatpush.bf16.msra.mxu0 0
    %1380 = vmatpush.bf16.msra.mxu0 0
    %1381 = vmatpush.bf16.msra.mxu0 0
    %1382 = vmatpush.bf16.msra.mxu0 0
    %1383 = vmatpush.bf16.msra.mxu0 0
    %1384 = vmatpush.bf16.msra.mxu0 %v1375
    %1385 = vmatmul.bf16.gmra.mxu0 %v1372
    %v1386 = vpop.f32.mrf.mxu0
    %v1387 = vadd.f32 0.0, %v1386
    %v1388 = vpop.f32.mrf.mxu0
    %1389 = vdwg.mxu0
    %v1391 = vsel %vm1028, %v1273, 0
    %v1394 = vsel %vm1278, %v1020, 0
    %1396 = vmatpush.bf16.msra.mxu0 0
    %1397 = vmatpush.bf16.msra.mxu0 0
    %1398 = vmatpush.bf16.msra.mxu0 0
    %1399 = vmatpush.bf16.msra.mxu0 0
    %1400 = vmatpush.bf16.msra.mxu0 0
    %1401 = vmatpush.bf16.msra.mxu0 0
    %1402 = vmatpush.bf16.msra.mxu0 0
    %1403 = vmatpush.bf16.msra.mxu0 %v1394
    %1404 = vmatmul.bf16.gmra.mxu0 %v1391
    %v1405 = vpop.f32.mrf.mxu0
    %v1406 = vadd.f32 0.0, %v1405
    %v1407 = vpop.f32.mrf.mxu0
    %1408 = vdwg.mxu0
    %v1410 = vsel %vm1028, %v1274, 0
    %v1413 = vsel %vm1278, %v1021, 0
    %1415 = vmatpush.bf16.msra.mxu0 0
    %1416 = vmatpush.bf16.msra.mxu0 0
    %1417 = vmatpush.bf16.msra.mxu0 0
    %1418 = vmatpush.bf16.msra.mxu0 0
    %1419 = vmatpush.bf16.msra.mxu0 0
    %1420 = vmatpush.bf16.msra.mxu0 0
    %1421 = vmatpush.bf16.msra.mxu0 0
    %1422 = vmatpush.bf16.msra.mxu0 %v1413
    %1423 = vmatmul.bf16.gmra.mxu0 %v1410
    %v1424 = vpop.f32.mrf.mxu0
    %v1425 = vadd.f32 0.0, %v1424
    %v1426 = vpop.f32.mrf.mxu0
    %1427 = vdwg.mxu0
    %v1428 = vrcp.pop %v1245
    %v1429 = vmul.f32 %v1245, %v1428
    %v1430 = vsub.f32 1.0, %v1429
    %v1431 = vmul.f32 %v1428, %v1430
    %v1432 = vadd.f32 %v1428, %v1431
    %vm1433 = vweird.f32 %v1245
    %vm1434 = vweird.f32 %v1428
    %vm1435 = vmor %vm1433, %vm1434
    %v1436 = vsel %vm1435, %v1428, %v1432
    %v1437 = vand.u32 2147483647, %v1245
    %vm1438 = vcmp.eq.f32.partialorder %v1437, 8.507059e+37
    %v1439 = vand.u32 %v1245, 2147483648
    %v1440 = vor.u32 1.1754944e-38, %v1439
    %v1441 = vsel %vm1438, %v1440, %v1436
    %v1442 = vrcp.pop %v1248
    %v1443 = vmul.f32 %v1248, %v1442
    %v1444 = vsub.f32 1.0, %v1443
    %v1445 = vmul.f32 %v1442, %v1444
    %v1446 = vadd.f32 %v1442, %v1445
    %vm1447 = vweird.f32 %v1248
    %vm1448 = vweird.f32 %v1442
    %vm1449 = vmor %vm1447, %vm1448
    %v1450 = vsel %vm1449, %v1442, %v1446
    %v1451 = vand.u32 2147483647, %v1248
    %vm1452 = vcmp.eq.f32.partialorder %v1451, 8.507059e+37
    %v1453 = vand.u32 %v1248, 2147483648
    %v1454 = vor.u32 1.1754944e-38, %v1453
    %v1455 = vsel %vm1452, %v1454, %v1450
    %v1456 = vrcp.pop %v1251
    %v1457 = vmul.f32 %v1251, %v1456
    %v1458 = vsub.f32 1.0, %v1457
    %v1459 = vmul.f32 %v1456, %v1458
    %v1460 = vadd.f32 %v1456, %v1459
    %vm1461 = vweird.f32 %v1251
    %vm1462 = vweird.f32 %v1456
    %vm1463 = vmor %vm1461, %vm1462
    %v1464 = vsel %vm1463, %v1456, %v1460
    %v1465 = vand.u32 2147483647, %v1251
    %vm1466 = vcmp.eq.f32.partialorder %v1465, 8.507059e+37
    %v1467 = vand.u32 %v1251, 2147483648
    %v1468 = vor.u32 1.1754944e-38, %v1467
    %v1469 = vsel %vm1466, %v1468, %v1464
    %v1470 = vrcp.pop %v1254
    %v1471 = vmul.f32 %v1254, %v1470
    %v1472 = vsub.f32 1.0, %v1471
    %v1473 = vmul.f32 %v1470, %v1472
    %v1474 = vadd.f32 %v1470, %v1473
    %vm1475 = vweird.f32 %v1254
    %vm1476 = vweird.f32 %v1470
    %vm1477 = vmor %vm1475, %vm1476
    %v1478 = vsel %vm1477, %v1470, %v1474
    %v1479 = vand.u32 2147483647, %v1254
    %vm1480 = vcmp.eq.f32.partialorder %v1479, 8.507059e+37
    %v1481 = vand.u32 %v1254, 2147483648
    %v1482 = vor.u32 1.1754944e-38, %v1481
    %v1483 = vsel %vm1480, %v1482, %v1478
    %v1484 = vrcp.pop %v1257
    %v1485 = vmul.f32 %v1257, %v1484
    %v1486 = vsub.f32 1.0, %v1485
    %v1487 = vmul.f32 %v1484, %v1486
    %v1488 = vadd.f32 %v1484, %v1487
    %vm1489 = vweird.f32 %v1257
    %vm1490 = vweird.f32 %v1484
    %vm1491 = vmor %vm1489, %vm1490
    %v1492 = vsel %vm1491, %v1484, %v1488
    %v1493 = vand.u32 2147483647, %v1257
    %vm1494 = vcmp.eq.f32.partialorder %v1493, 8.507059e+37
    %v1495 = vand.u32 %v1257, 2147483648
    %v1496 = vor.u32 1.1754944e-38, %v1495
    %v1497 = vsel %vm1494, %v1496, %v1492
    %v1498 = vrcp.pop %v1260
    %v1499 = vmul.f32 %v1260, %v1498
    %v1500 = vsub.f32 1.0, %v1499
    %v1501 = vmul.f32 %v1498, %v1500
    %v1502 = vadd.f32 %v1498, %v1501
    %vm1503 = vweird.f32 %v1260
    %vm1504 = vweird.f32 %v1498
    %vm1505 = vmor %vm1503, %vm1504
    %v1506 = vsel %vm1505, %v1498, %v1502
    %v1507 = vand.u32 2147483647, %v1260
    %vm1508 = vcmp.eq.f32.partialorder %v1507, 8.507059e+37
    %v1509 = vand.u32 %v1260, 2147483648
    %v1510 = vor.u32 1.1754944e-38, %v1509
    %v1511 = vsel %vm1508, %v1510, %v1506
    %v1512 = vrcp.pop %v1263
    %v1513 = vmul.f32 %v1263, %v1512
    %v1514 = vsub.f32 1.0, %v1513
    %v1515 = vmul.f32 %v1512, %v1514
    %v1516 = vadd.f32 %v1512, %v1515
    %vm1517 = vweird.f32 %v1263
    %vm1518 = vweird.f32 %v1512
    %vm1519 = vmor %vm1517, %vm1518
    %v1520 = vsel %vm1519, %v1512, %v1516
    %v1521 = vand.u32 2147483647, %v1263
    %vm1522 = vcmp.eq.f32.partialorder %v1521, 8.507059e+37
    %v1523 = vand.u32 %v1263, 2147483648
    %v1524 = vor.u32 1.1754944e-38, %v1523
    %v1525 = vsel %vm1522, %v1524, %v1520
    %v1526 = vrcp.pop %v1266
    %v1527 = vmul.f32 %v1266, %v1526
    %v1528 = vsub.f32 1.0, %v1527
    %v1529 = vmul.f32 %v1526, %v1528
    %v1530 = vadd.f32 %v1526, %v1529
    %vm1531 = vweird.f32 %v1266
    %vm1532 = vweird.f32 %v1526
    %vm1533 = vmor %vm1531, %vm1532
    %v1534 = vsel %vm1533, %v1526, %v1530
    %v1535 = vand.u32 2147483647, %v1266
    %vm1536 = vcmp.eq.f32.partialorder %v1535, 8.507059e+37
    %v1537 = vand.u32 %v1266, 2147483648
    %v1538 = vor.u32 1.1754944e-38, %v1537
    %v1539 = vsel %vm1536, %v1538, %v1534
    %v1540 = vmul.f32 %v1292, %v1441
    %v1541 = vmul.f32 %v1311, %v1455
    %v1542 = vmul.f32 %v1330, %v1469
    %v1543 = vmul.f32 %v1349, %v1483
    %v1544 = vmul.f32 %v1368, %v1497
    %v1545 = vmul.f32 %v1387, %v1511
    %v1546 = vmul.f32 %v1406, %v1525
    %v1547 = vmul.f32 %v1425, %v1539
    %v1548 = vrot.slane %v1542, 4
    %v1549 = vsel %vm298, %v1548, %v1540
    %v1550 = vrot.slane %v1540, 4
    %v1551 = vsel %vm298, %v1542, %v1550
    %v1553 = vunpack.c.l.s4 1983009808
    %v1554 = vunpack.c.0.s8 %v1553
    %v1555 = vperm.slane %v1549, %v1554
    %v1557 = vunpack.c.l.s4 1983009808
    %v1558 = vunpack.c.0.s8 %v1557
    %v1559 = vperm.slane %v1551, %v1558
    %v1560 = vrot.slane %v1543, 4
    %v1561 = vsel %vm298, %v1560, %v1541
    %v1562 = vrot.slane %v1541, 4
    %v1563 = vsel %vm298, %v1543, %v1562
    %v1565 = vunpack.c.l.s4 1983009808
    %v1566 = vunpack.c.0.s8 %v1565
    %v1567 = vperm.slane %v1561, %v1566
    %v1569 = vunpack.c.l.s4 1983009808
    %v1570 = vunpack.c.0.s8 %v1569
    %v1571 = vperm.slane %v1563, %v1570
    %v1572 = vrot.slane %v1567, 4
    %v1573 = vsel %vm298, %v1572, %v1555
    %v1574 = vrot.slane %v1555, 4
    %v1575 = vsel %vm298, %v1567, %v1574
    %v1577 = vunpack.c.l.s4 1934713408
    %v1578 = vunpack.c.0.s8 %v1577
    %v1579 = vperm.slane %v1573, %v1578
    %v1581 = vunpack.c.l.s4 1934713408
    %v1582 = vunpack.c.0.s8 %v1581
    %v1583 = vperm.slane %v1575, %v1582
    %v1584 = vrot.slane %v1571, 4
    %v1585 = vsel %vm298, %v1584, %v1559
    %v1586 = vrot.slane %v1559, 4
    %v1587 = vsel %vm298, %v1571, %v1586
    %v1589 = vunpack.c.l.s4 1934713408
    %v1590 = vunpack.c.0.s8 %v1589
    %v1591 = vperm.slane %v1585, %v1590
    %v1593 = vunpack.c.l.s4 1934713408
    %v1594 = vunpack.c.0.s8 %v1593
    %v1595 = vperm.slane %v1587, %v1594
    %v1596 = vrot.slane %v1579, 4
    %v1597 = vsel %vm298, 0.0, %v1596
    %v1598 = vrot.slane %v1583, 4
    %v1599 = vsel %vm298, 0.0, %v1598
    %v1600 = vrot.slane %v1591, 4
    %v1601 = vsel %vm298, 0.0, %v1600
    %v1602 = vrot.slane %v1595, 4
    %v1603 = vsel %vm298, 0.0, %v1602
    %v1604 = vrot.slane %v1546, 4
    %v1605 = vsel %vm298, %v1604, %v1544
    %v1606 = vrot.slane %v1544, 4
    %v1607 = vsel %vm298, %v1546, %v1606
    %v1609 = vunpack.c.l.s4 1983009808
    %v1610 = vunpack.c.0.s8 %v1609
    %v1611 = vperm.slane %v1605, %v1610
    %v1613 = vunpack.c.l.s4 1983009808
    %v1614 = vunpack.c.0.s8 %v1613
    %v1615 = vperm.slane %v1607, %v1614
    %v1616 = vrot.slane %v1547, 4
    %v1617 = vsel %vm298, %v1616, %v1545
    %v1618 = vrot.slane %v1545, 4
    %v1619 = vsel %vm298, %v1547, %v1618
    %v1621 = vunpack.c.l.s4 1983009808
    %v1622 = vunpack.c.0.s8 %v1621
    %v1623 = vperm.slane %v1617, %v1622
    %v1625 = vunpack.c.l.s4 1983009808
    %v1626 = vunpack.c.0.s8 %v1625
    %v1627 = vperm.slane %v1619, %v1626
    %v1628 = vrot.slane %v1623, 4
    %v1629 = vsel %vm298, %v1628, %v1611
    %v1630 = vrot.slane %v1611, 4
    %v1631 = vsel %vm298, %v1623, %v1630
    %v1633 = vunpack.c.l.s4 1934713408
    %v1634 = vunpack.c.0.s8 %v1633
    %v1635 = vperm.slane %v1629, %v1634
    %v1637 = vunpack.c.l.s4 1934713408
    %v1638 = vunpack.c.0.s8 %v1637
    %v1639 = vperm.slane %v1631, %v1638
    %v1640 = vrot.slane %v1627, 4
    %v1641 = vsel %vm298, %v1640, %v1615
    %v1642 = vrot.slane %v1615, 4
    %v1643 = vsel %vm298, %v1627, %v1642
    %v1645 = vunpack.c.l.s4 1934713408
    %v1646 = vunpack.c.0.s8 %v1645
    %v1647 = vperm.slane %v1641, %v1646
    %v1649 = vunpack.c.l.s4 1934713408
    %v1650 = vunpack.c.0.s8 %v1649
    %v1651 = vperm.slane %v1643, %v1650
    %v1652 = vrot.slane %v1635, 4
    %v1653 = vsel %vm298, 0.0, %v1652
    %v1654 = vrot.slane %v1639, 4
    %v1655 = vsel %vm298, 0.0, %v1654
    %v1656 = vrot.slane %v1647, 4
    %v1657 = vsel %vm298, 0.0, %v1656
    %v1658 = vrot.slane %v1651, 4
    %v1659 = vsel %vm298, 0.0, %v1658
    %v1660 = vsel %vm298, %v1598, %v1579
    %v1662 = vunpack.c.l.s4 1983009808
    %v1663 = vunpack.c.0.s8 %v1662
    %v1664 = vperm.slane %v1660, %v1663
    %v1665 = vrot.slane %v1599, 4
    %v1666 = vsel %vm298, %v1665, %v1597
    %v1668 = vunpack.c.l.s4 1983009808
    %v1669 = vunpack.c.0.s8 %v1668
    %v1670 = vperm.slane %v1666, %v1669
    %v1671 = vsel %vm298, %v1602, %v1591
    %v1673 = vunpack.c.l.s4 1983009808
    %v1674 = vunpack.c.0.s8 %v1673
    %v1675 = vperm.slane %v1671, %v1674
    %v1676 = vrot.slane %v1603, 4
    %v1677 = vsel %vm298, %v1676, %v1601
    %v1679 = vunpack.c.l.s4 1983009808
    %v1680 = vunpack.c.0.s8 %v1679
    %v1681 = vperm.slane %v1677, %v1680
    %v1682 = vrot.slane %v1670, 4
    %v1683 = vsel %vm298, %v1682, %v1664
    %v1684 = vrot.slane %v1664, 4
    %v1685 = vsel %vm298, %v1670, %v1684
    %v1687 = vunpack.c.l.s4 1934713408
    %v1688 = vunpack.c.0.s8 %v1687
    %v1689 = vperm.slane %v1683, %v1688
    %v1691 = vunpack.c.l.s4 1934713408
    %v1692 = vunpack.c.0.s8 %v1691
    %v1693 = vperm.slane %v1685, %v1692
    %v1694 = vrot.slane %v1681, 4
    %v1695 = vsel %vm298, %v1694, %v1675
    %v1696 = vrot.slane %v1675, 4
    %v1697 = vsel %vm298, %v1681, %v1696
    %v1699 = vunpack.c.l.s4 1934713408
    %v1700 = vunpack.c.0.s8 %v1699
    %v1701 = vperm.slane %v1695, %v1700
    %v1703 = vunpack.c.l.s4 1934713408
    %v1704 = vunpack.c.0.s8 %v1703
    %v1705 = vperm.slane %v1697, %v1704
    %v1706 = vrot.slane %v1701, 4
    %v1707 = vsel %vm298, %v1706, %v1689
    %v1708 = vrot.slane %v1689, 4
    %v1709 = vsel %vm298, %v1701, %v1708
    %v1710 = vrot.slane %v1705, 4
    %v1711 = vsel %vm298, %v1710, %v1693
    %v1712 = vrot.slane %v1693, 4
    %v1713 = vsel %vm298, %v1705, %v1712
    %v1714 = vsel %vm298, %v1654, %v1635
    %v1716 = vunpack.c.l.s4 1983009808
    %v1717 = vunpack.c.0.s8 %v1716
    %v1718 = vperm.slane %v1714, %v1717
    %v1719 = vrot.slane %v1655, 4
    %v1720 = vsel %vm298, %v1719, %v1653
    %v1722 = vunpack.c.l.s4 1983009808
    %v1723 = vunpack.c.0.s8 %v1722
    %v1724 = vperm.slane %v1720, %v1723
    %v1725 = vsel %vm298, %v1658, %v1647
    %v1727 = vunpack.c.l.s4 1983009808
    %v1728 = vunpack.c.0.s8 %v1727
    %v1729 = vperm.slane %v1725, %v1728
    %v1730 = vrot.slane %v1659, 4
    %v1731 = vsel %vm298, %v1730, %v1657
    %v1733 = vunpack.c.l.s4 1983009808
    %v1734 = vunpack.c.0.s8 %v1733
    %v1735 = vperm.slane %v1731, %v1734
    %v1736 = vrot.slane %v1724, 4
    %v1737 = vsel %vm298, %v1736, %v1718
    %v1738 = vrot.slane %v1718, 4
    %v1739 = vsel %vm298, %v1724, %v1738
    %v1741 = vunpack.c.l.s4 1934713408
    %v1742 = vunpack.c.0.s8 %v1741
    %v1743 = vperm.slane %v1737, %v1742
    %v1745 = vunpack.c.l.s4 1934713408
    %v1746 = vunpack.c.0.s8 %v1745
    %v1747 = vperm.slane %v1739, %v1746
    %v1748 = vrot.slane %v1735, 4
    %v1749 = vsel %vm298, %v1748, %v1729
    %v1750 = vrot.slane %v1729, 4
    %v1751 = vsel %vm298, %v1735, %v1750
    %v1753 = vunpack.c.l.s4 1934713408
    %v1754 = vunpack.c.0.s8 %v1753
    %v1755 = vperm.slane %v1749, %v1754
    %v1757 = vunpack.c.l.s4 1934713408
    %v1758 = vunpack.c.0.s8 %v1757
    %v1759 = vperm.slane %v1751, %v1758
    %v1760 = vrot.slane %v1755, 4
    %v1761 = vsel %vm298, %v1760, %v1743
    %v1762 = vrot.slane %v1743, 4
    %v1763 = vsel %vm298, %v1755, %v1762
    %v1764 = vrot.slane %v1759, 4
    %v1765 = vsel %vm298, %v1764, %v1747
    %v1766 = vrot.slane %v1747, 4
    %v1767 = vsel %vm298, %v1759, %v1766
    %1770 = vrot.lane.b32.xlu0 %v1709, 8
    %v1771 = vpop.permute.xlu0 %1770
    %1772 = vrot.lane.b32.xlu0 %v1763, 8
    %v1773 = vpop.permute.xlu0 %1772
    %1778 = vrot.lane.b32.xlu0 %v1711, 16
    %v1779 = vpop.permute.xlu0 %1778
    %1780 = vrot.lane.b32.xlu0 %v1765, 16
    %v1781 = vpop.permute.xlu0 %1780
    %1786 = vrot.lane.b32.xlu0 %v1713, 24
    %v1787 = vpop.permute.xlu0 %1786
    %1788 = vrot.lane.b32.xlu0 %v1767, 24
    %v1789 = vpop.permute.xlu0 %1788
    %v1792 = vsel %vm1028, %v1707, %v1771
    %v1793 = vsel %vm1028, %v1761, %v1773
    %vm1794 = vcmask 130048
    %v1795 = vsel %vm1794, %v1792, %v1779
    %v1796 = vsel %vm1794, %v1793, %v1781
    %vm1797 = vcmask 195584
    %v1798 = vsel %vm1797, %v1795, %v1787
    %v1799 = vsel %vm1797, %v1796, %v1789
    %v1800 = vpack.c.bf16 %v1799, %v1798
    %v1801 = vld [vmem:[#allocation7] sm:$0xf]
    %v1802 = vld [vmem:[#allocation7 + $0x4] sm:$0xf]
    %v1803 = vld [vmem:[#allocation7 + $0x8] sm:$0xf]
    %v1804 = vld [vmem:[#allocation7 + $0xc] sm:$0xf]
    %v1809 = vunpack.c.l.b16 %v1801
    %v1810 = vunpack.c.l.b16 %v1802
    %v1811 = vunpack.c.l.b16 %v1803
    %v1812 = vunpack.c.l.b16 %v1804
    %v1813 = vpack.c.b16 %v1810, %v1809
    %v1814 = vpack.c.b16 %v1812, %v1811
    %v1818 = vsel %vm119, %v1800, 0
    %1820 = vmatpush.bf16.msra.mxu0 0
    %1821 = vmatpush.bf16.msra.mxu0 0
    %1822 = vmatpush.bf16.msra.mxu0 0
    %1823 = vmatpush.bf16.msra.mxu0 0
    %1824 = vmatpush.bf16.msra.mxu0 0
    %1825 = vmatpush.bf16.msra.mxu0 0
    %1826 = vmatpush.bf16.msra.mxu0 %v1814
    %1827 = vmatpush.bf16.msra.mxu0 %v1813
    %1828 = vmatmul.bf16.gmra.mxu0 %v1818
    %v1829 = vpop.f32.mrf.mxu0
    %v1830 = vadd.f32 %v115, %v1829
    %v1831 = vpop.f32.mrf.mxu0
    %v1832 = vadd.f32 %v116, %v1831
    %1833 = vdwg.mxu0
    %v1834 = vld [vmem:[%s8] sm:$0x1]
    %v1835 = vld [vmem:[%s9] sm:$0x1]
    %v1836 = vsel %vm119, %v1830, 0.0
    %1837 = vadd.xlane.f32.xlu0 %v1836
    %v1838 = vpop.xlane.xlu0 %1837
    %v1839 = vsel %vm119, %v1832, 0.0
    %1840 = vadd.xlane.f32.xlu0 %v1839
    %v1841 = vpop.xlane.xlu0 %1840
    %v1842 = vmul.f32 %v1838, %v132
    %v1843 = vmul.f32 %v1841, %v132
    %v1844 = vsub.f32 %v1830, %v1842
    %v1845 = vsub.f32 %v1832, %v1843
    %v1846 = vmul.f32 %v1844, %v1844
    %v1847 = vmul.f32 %v1845, %v1845
    %v1848 = vsel %vm119, %v1846, 0.0
    %1849 = vadd.xlane.f32.xlu0 %v1848
    %v1850 = vpop.xlane.xlu0 %1849
    %v1851 = vsel %vm119, %v1847, 0.0
    %1852 = vadd.xlane.f32.xlu0 %v1851
    %v1853 = vpop.xlane.xlu0 %1852
    %v1854 = vmul.f32 %v1850, %v132
    %v1855 = vmul.f32 %v1853, %v132
    %v1856 = vadd.f32 %v1854, 1e-05
    %v1857 = vadd.f32 %v1855, 1e-05
    %v1858 = vrsqrt.pop %v1856
    %v1859 = vmul.f32 %v1858, %v1856
    %v1860 = vmul.f32 %v1859, %v1858
    %v1861 = vmul.f32 0.5, %v1860
    %v1862 = vsub.f32 1.5, %v1861
    %v1863 = vmul.f32 %v1858, %v1862
    %vm1864 = vweird.f32 %v1856
    %vm1865 = vweird.f32 %v1858
    %vm1866 = vmor %vm1864, %vm1865
    %v1867 = vsel %vm1866, %v1858, %v1863
    %v1868 = vrsqrt.pop %v1857
    %v1869 = vmul.f32 %v1868, %v1857
    %v1870 = vmul.f32 %v1869, %v1868
    %v1871 = vmul.f32 0.5, %v1870
    %v1872 = vsub.f32 1.5, %v1871
    %v1873 = vmul.f32 %v1868, %v1872
    %vm1874 = vweird.f32 %v1857
    %vm1875 = vweird.f32 %v1868
    %vm1876 = vmor %vm1874, %vm1875
    %v1877 = vsel %vm1876, %v1868, %v1873
    %v1878 = vmul.f32 %v1844, %v1867
    %v1879 = vmul.f32 %v1845, %v1877
    %v1881 = vperm.slane %v1834, 0
    %v1883 = vmul.f32 %v1878, %v1881
    %v1884 = vmul.f32 %v1879, %v1881
    %v1886 = vperm.slane %v1835, 0
    %v1888 = vadd.f32 %v1883, %v1886
    %v1889 = vadd.f32 %v1884, %v1886
    %v1890 = vpack.c.bf16 %v1889, %v1888
    %v1891 = vld [vmem:[#allocation8] sm:$0xf]
    %v1892 = vld [vmem:[#allocation8 + $0x4] sm:$0xf]
    %v1893 = vld [vmem:[#allocation8 + $0x8] sm:$0xf]
    %v1894 = vld [vmem:[#allocation8 + $0xc] sm:$0xf]
    %v1895 = vld [vmem:[%s11] sm:$0x1]
    %v1897 = vperm.slane %v1895, 0
    %v1903 = vunpack.c.l.b16 %v1891
    %v1904 = vunpack.c.l.b16 %v1892
    %v1905 = vunpack.c.l.b16 %v1893
    %v1906 = vunpack.c.l.b16 %v1894
    %v1907 = vpack.c.b16 %v1904, %v1903
    %v1908 = vpack.c.b16 %v1906, %v1905
    %v1912 = vsel %vm119, %v1890, 0
    %1914 = vmatpush.bf16.msra.mxu0 0
    %1915 = vmatpush.bf16.msra.mxu0 0
    %1916 = vmatpush.bf16.msra.mxu0 0
    %1917 = vmatpush.bf16.msra.mxu0 0
    %1918 = vmatpush.bf16.msra.mxu0 0
    %1919 = vmatpush.bf16.msra.mxu0 0
    %1920 = vmatpush.bf16.msra.mxu0 %v1908
    %1921 = vmatpush.bf16.msra.mxu0 %v1907
    %1922 = vmatmul.bf16.gmra.mxu0 %v1912
    %v1923 = vpop.f32.mrf.mxu0
    %v1924 = vadd.f32 %v1897, %v1923
    %v1925 = vpop.f32.mrf.mxu0
    %v1926 = vadd.f32 %v1897, %v1925
    %1927 = vdwg.mxu0
    %v1928 = vmax.f32 %v1924, 0.0
    %v1929 = vmax.f32 %v1926, 0.0
    %v1930 = vpack.c.bf16 %v1929, %v1928
    %v1931 = vld [vmem:[%s12] sm:$0xf]
    %v1932 = vld [vmem:[%s12 + $0x4] sm:$0xf]
    %v1933 = vld [vmem:[%s12 + $0x8] sm:$0xf]
    %v1934 = vld [vmem:[%s12 + $0xc] sm:$0xf]
    %v1935 = vld [vmem:[%s12 + $0x10] sm:$0xf]
    %v1936 = vld [vmem:[%s12 + $0x14] sm:$0xf]
    %v1937 = vld [vmem:[%s12 + $0x18] sm:$0xf]
    %v1938 = vld [vmem:[%s12 + $0x1c] sm:$0xf]
    %v1939 = vld [vmem:[%s13] sm:$0x1]
    %v1941 = vperm.slane %v1939, 0
    %v1951 = vunpack.c.l.b16 %v1931
    %v1952 = vunpack.c.l.b16 %v1932
    %v1953 = vunpack.c.l.b16 %v1933
    %v1954 = vunpack.c.l.b16 %v1934
    %v1955 = vunpack.c.l.b16 %v1935
    %v1956 = vunpack.c.l.b16 %v1936
    %v1957 = vunpack.c.l.b16 %v1937
    %v1958 = vunpack.c.l.b16 %v1938
    %v1959 = vpack.c.b16 %v1952, %v1951
    %v1960 = vpack.c.b16 %v1954, %v1953
    %v1961 = vpack.c.b16 %v1956, %v1955
    %v1962 = vpack.c.b16 %v1958, %v1957
    %vm1967 = vcmask 523264
    %v1969 = vsel %vm1967, %v1930, 0
    %1971 = vmatpush.bf16.msra.mxu0 0
    %1972 = vmatpush.bf16.msra.mxu0 0
    %1973 = vmatpush.bf16.msra.mxu0 0
    %1974 = vmatpush.bf16.msra.mxu0 0
    %1975 = vmatpush.bf16.msra.mxu0 %v1962
    %1976 = vmatpush.bf16.msra.mxu0 %v1961
    %1977 = vmatpush.bf16.msra.mxu0 %v1960
    %1978 = vmatpush.bf16.msra.mxu0 %v1959
    %1979 = vmatmul.bf16.gmra.mxu0 %v1969
    %v1980 = vpop.f32.mrf.mxu0
    %v1981 = vadd.f32 %v1941, %v1980
    %v1982 = vpop.f32.mrf.mxu0
    %v1983 = vadd.f32 %v1941, %v1982
    %1984 = vdwg.mxu0
    %v1985 = vadd.f32 %v1981, %v1830
    %v1986 = vadd.f32 %v1983, %v1832
    %1987 = vst.msk [vmem:[#allocation10] sm:$0xff] %vm119, %v1985
    %1988 = vst.msk [vmem:[#allocation10 + $0x8] sm:$0xff] %vm119, %v1986
    // Predicated region
    $region74: #{tpu_custom_call.1} parent=1 // pred_check
      _
    $region75: #{tpu_custom_call.1} parent=1 // pred_check_branch
      %1990 = sbr.rel (0) target = $region77
    $region76: #{tpu_custom_call.1} parent=1 // pred_region
      %1992 = vsyncadd [#allocation4], 0
      %s1993 = sshll.u32 [#allocation10], 4
      %s1994 = int_to_ptr.vmem [resolvable:$true] %s1993
      %s1995 = sshll.u32 %s14, 4
      %s1996 = int_to_ptr.hbm [resolvable:$true] %s1995
      %2001 = dma.vmem_to_hbm [thread:$0]  %s1994, 256, %s1996, [#allocation4], 128, 128, 8
    $region77: #{tpu_custom_call.1} parent=1 // pred_fallthru
      _
    // Predicated region
    $region78: #{tpu_custom_call.1} parent=1 // pred_check
      _
    $region79: #{tpu_custom_call.1} parent=1 // pred_check_branch
      %2003 = sbr.rel (0) target = $region81
    $region80: #{tpu_custom_call.1} parent=1 // pred_region
      %2005 = vsyncadd [#allocation12], 0
      %s2006 = sshll.u32 [#allocation11], 4
      %s2007 = int_to_ptr.vmem [resolvable:$true] %s2006
      %s2008 = sshll.u32 %s15, 4
      %s2009 = int_to_ptr.hbm [resolvable:$true] %s2008
      %2014 = dma.vmem_to_hbm [thread:$0]  %s2007, 256, %s2009, [#allocation12], 128, 128, 8
    $region81: #{tpu_custom_call.1} parent=1 // pred_fallthru
      _
    // Predicated region
    $region82: #{tpu_custom_call.1} parent=1 // pred_check
      _
    $region83: #{tpu_custom_call.1} parent=1 // pred_check_branch
      %2016 = sbr.rel (0) target = $region85
    $region84: #{tpu_custom_call.1} parent=1 // pred_region
      %2018 = dma.done [#allocation4], 256
    $region85: #{tpu_custom_call.1} parent=1 // pred_fallthru
      _
    // Predicated region
    $region86: #{tpu_custom_call.1} parent=1 // pred_check
      _
    $region87: #{tpu_custom_call.1} parent=1 // pred_check_branch
      %2020 = sbr.rel (0) target = $region89
    $region88: #{tpu_custom_call.1} parent=1 // pred_region
      %2022 = dma.done [#allocation12], 256
    $region89: #{tpu_custom_call.1} parent=1 // pred_fallthru
      _
    %2023 = vsyncpa [#allocation3], 1
    %2024 = vsyncpa [#allocation6], 1
    %2025 = vsyncpa [#allocation9], 1
    %2026 = vsyncpa [#allocation4], 1
    %2027 = vsyncpa [#allocation12], 1

</llo_original>
